<compile_context>
chip_gen: v6e
topology: v6e:2x2x1
jax: 0.10.0
libtpu: 0.0.40
codegen_flags: <defaults>
</compile_context>

<pallas_src>
import functools

import jax
import jax.numpy as jnp
from jax.experimental import pallas as pl
from jax.experimental.pallas import tpu as pltpu

BN_EPS = 1e-5
LRELU_SLOPE = 0.2
N_LIN = 19  # Linear layers: encoder + fc_mu/logvar + hv decoder + recon decoder


# ----------------------------- parameter setup -----------------------------

def layer_defs(input_dim=4, latent_dim=2, hidden_dim=32):
    """(fan_in, fan_out, followed_by_batchnorm) for every Linear, forward order."""
    spd = input_dim - 3
    hd = hidden_dim
    L = []
    # encoder: Linear(spd,hd)+BN+LReLU
    L += [(spd, hd, True)]
    # ResidualBlock(hd, 2hd, 2hd): shortcut, fc1, fc2
    L += [(hd, 2 * hd, True), (hd, 2 * hd, True), (2 * hd, 2 * hd, True)]
    # ResidualBlock(2hd, hd, hd): shortcut, fc1, fc2
    L += [(2 * hd, hd, True), (2 * hd, hd, True), (hd, hd, True)]
    # fc_mu, fc_logvar
    L += [(hd, latent_dim, False), (hd, latent_dim, False)]
    # decoder_hv_sdf (input = z ++ 3-D query points)
    L += [(latent_dim + 3, hd, True), (hd, 2 * hd, True), (2 * hd, 4 * hd, True),
          (4 * hd, 2 * hd, True), (2 * hd, hd, True), (hd, 1, False)]
    # decoder_input (reconstruction head)
    L += [(latent_dim, hd, True), (hd, 2 * hd, True), (2 * hd, hd, True), (hd, spd, False)]
    assert len(L) == N_LIN
    return L


def xavier_uniform(key, fan_out, fan_in):
    bound = (6.0 / (fan_in + fan_out)) ** 0.5
    return jax.random.uniform(key, (fan_out, fan_in), jnp.float32, -bound, bound)


def init_params(key, defs):
    """PyTorch-style params: weight (out, in) xavier_uniform, bias zeros."""
    params = []
    for i, (fin, fout, bn) in enumerate(defs):
        k = jax.random.fold_in(key, i)
        w = xavier_uniform(k, fout, fin)
        b = jnp.zeros((fout,), jnp.float32)
        params.append((w, b, bn))
    return params


# ------------------------ slab packing (BN fold + fuse) ----------------------

def _roundup(v, m):
    return ((v + m - 1) // m) * m


def build_slabs(params):
    """Fold eval-mode BN into each Linear, fuse shared-input and independent
    (block-diagonal) layer pairs, and pack everything into one weight slab
    (rows, LANES) + one bias slab.

    Returns (wslab, bslab, layout, xp, mlvp, ld, spd, hd) where layout is a
    static tuple of (row_offset, K, Nout) per effective (possibly fused) layer,
    in the exact order the kernel consumes them."""
    hd = params[0][0].shape[0]          # hidden_dim
    ld = params[7][0].shape[0]          # latent_dim
    spd = params[0][0].shape[1]         # shape_param_dim = input_dim - 3
    assert hd % 8 == 0
    xp = max(8, _roundup(3 + spd, 8))   # padded width of the x input block
    mlvp = max(8, _roundup(2 * ld, 8))  # padded width of the (mu|logvar) block
    s = (1.0 + BN_EPS) ** -0.5          # eval-mode BN scale (gamma=1, var=1)

    def wt(i):
        w, b, bn = params[i]
        sc = s if bn else 1.0
        return jnp.asarray(w, jnp.float32).T * sc, jnp.asarray(b, jnp.float32) * sc

    Ws, Bs = zip(*(wt(i) for i in range(N_LIN)))

    blocks = []  # (K, Nout, W (K,Nout), b (Nout,))

    def blk(W, b):
        blocks.append((W.shape[0], W.shape[1], W, b))

    z1 = jnp.zeros((hd,), jnp.float32)

    # 0: [encoder L1 | hv-L1 query-point part]  — shared input = padded x row
    #    (lanes: 0:3 = query points, 3:3+spd = shape params, rest zero)
    A = jnp.zeros((xp, 2 * hd), jnp.float32)
    A = A.at[3:3 + spd, 0:hd].set(Ws[0]).at[0:3, hd:2 * hd].set(Ws[9][ld:ld + 3])
    blk(A, jnp.concatenate([Bs[0], z1]))             # hv-L1 bias carried by block 6
    # 1: RB1 fused shortcut|fc1   (hd -> 2hd | 2hd)
    blk(jnp.concatenate([Ws[1], Ws[2]], axis=1), jnp.concatenate([Bs[1], Bs[2]]))
    # 2: RB1 fc2 (2hd -> 2hd)
    blk(Ws[3], Bs[3])
    # 3: RB2 fused shortcut|fc1   (2hd -> hd | hd)
    blk(jnp.concatenate([Ws[4], Ws[5]], axis=1), jnp.concatenate([Bs[4], Bs[5]]))
    # 4: RB2 fc2 (hd -> hd)
    blk(Ws[6], Bs[6])
    # 5: fused fc_mu | fc_logvar, lane-padded to mlvp (padded lanes provably 0)
    Wm = jnp.zeros((hd, mlvp), jnp.float32).at[:, 0:ld].set(Ws[7]).at[:, ld:2 * ld].set(Ws[8])
    bm = jnp.zeros((mlvp,), jnp.float32).at[0:ld].set(Bs[7]).at[ld:2 * ld].set(Bs[8])
    blk(Wm, bm)
    # 6: [hv-L1 z-part | recon-L1]  — shared input = mlv (z = mu in eval mode)
    G = jnp.zeros((mlvp, 2 * hd), jnp.float32)
    G = G.at[0:ld, 0:hd].set(Ws[9][0:ld]).at[0:ld, hd:2 * hd].set(Ws[15])
    blk(G, jnp.concatenate([Bs[9], Bs[15]]))
    # 7: block-diagonal [hv-L2 | rec-L2]   (K=2hd, N=4hd)
    H = jnp.zeros((2 * hd, 4 * hd), jnp.float32)
    H = H.at[0:hd, 0:2 * hd].set(Ws[10]).at[hd:2 * hd, 2 * hd:4 * hd].set(Ws[16])
    blk(H, jnp.concatenate([Bs[10], Bs[16]]))
    # 8: hv-L3 (2hd -> 4hd), 9: rec-L3 (2hd -> hd), 10: hv-L4 (4hd -> 2hd), 11: hv-L5 (2hd -> hd)
    blk(Ws[11], Bs[11])
    blk(Ws[17], Bs[17])
    blk(Ws[12], Bs[12])
    blk(Ws[13], Bs[13])
    # 12: block-diagonal [hv-L6 | rec-L4]  -> (1 + spd) lanes, no activation
    M = jnp.zeros((2 * hd, 1 + spd), jnp.float32)
    M = M.at[0:hd, 0:1].set(Ws[14]).at[hd:2 * hd, 1:1 + spd].set(Ws[18])
    blk(M, jnp.concatenate([Bs[14], Bs[18]]))

    lanes = max(128, _roundup(max(n for _, n, _, _ in blocks), 128))
    layout = []
    rows = 0
    for k, n, _, _ in blocks:
        assert k % 8 == 0 and n <= lanes
        layout.append((rows, k, n))
        rows += k

    wslab = jnp.zeros((rows, lanes), jnp.float32)
    bslab = jnp.zeros((_roundup(len(blocks), 8), lanes), jnp.float32)
    for i, ((off, k, n), (_, _, W, b)) in enumerate(zip(layout, blocks)):
        wslab = wslab.at[off:off + k, 0:n].set(W)
        bslab = bslab.at[i, 0:n].set(b)

    return wslab, bslab, tuple(layout), xp, mlvp, ld, spd, hd


# -------------------------------- the kernel --------------------------------

def vae_kernel(layout, ld, spd, hd, mm_dtype, x_ref, w_ref, b_ref, out_ref):
    def lrelu(h):
        return jnp.where(h > 0, h, LRELU_SLOPE * h)

    def lin(i, h):
        off, k, n = layout[i]                      # static Python ints
        w = w_ref[off:off + k, 0:n]                # slice the single weight slab
        b = b_ref[i:i + 1, 0:n]                    # (1, n) f32 bias row
        y = jnp.dot(h.astype(mm_dtype), w.astype(mm_dtype),
                    preferred_element_type=jnp.float32)
        return y + b

    x = x_ref[...]                                 # (TB, xp): qp | xs | zero pad

    # ---- fused x-input dot: encoder L1 | hv-decoder query-point part ----
    a = lin(0, x)                                  # (TB, 2hd)
    h = lrelu(a[:, :hd])                           # encoder first layer
    hv_qp = a[:, hd:2 * hd]                        # linear qp contribution to hv L1

    # ---- encoder residual blocks ----
    y = lin(1, h)
    half = y.shape[1] // 2
    h = lrelu(lin(2, lrelu(y[:, half:])) + y[:, :half])       # (TB, 2hd)
    y = lin(3, h)
    half = y.shape[1] // 2
    h = lrelu(lin(4, lrelu(y[:, half:])) + y[:, :half])       # (TB, hd)

    mlv = lin(5, h)                                # (TB, mlvp): mu | logvar | 0
    # z = mu (eval-mode reparameterize); mlv doubles as the zero-padded z.

    # ---- fused mlv-input dot: hv-decoder z-part | recon-decoder L1 ----
    g = lin(6, mlv)                                # (TB, 2hd)
    hv = lrelu(g[:, :hd] + hv_qp)                  # hv decoder layer 1
    r = lrelu(g[:, hd:2 * hd])                     # recon decoder layer 1

    # ---- block-diagonal fused dot: hv L2 | rec L2 ----
    y = lin(7, jnp.concatenate([hv, r], axis=1))   # (TB, 4hd)
    hv = lrelu(y[:, :2 * hd])
    r = lrelu(y[:, 2 * hd:4 * hd])

    hv = lrelu(lin(8, hv))                         # hv L3 (2hd -> 4hd)
    r = lrelu(lin(9, r))                           # rec L3 (2hd -> hd)
    hv = lrelu(lin(10, hv))                        # hv L4 (4hd -> 2hd)
    hv = lrelu(lin(11, hv))                        # hv L5 (2hd -> hd)

    # ---- block-diagonal fused final dot: hv L6 | rec L4 -> (TB, 1+spd) ----
    hvrec = lin(12, jnp.concatenate([hv, r], axis=1))

    # ---- single lane-packed store: mu | logvar | hv | rec | zero pad ----
    pad = out_ref.shape[1] - (2 * ld + 1 + spd)
    pieces = [mlv[:, :2 * ld], hvrec]
    if pad:
        pieces.append(jnp.zeros((hvrec.shape[0], pad), jnp.float32))
    out_ref[...] = jnp.concatenate(pieces, axis=1)


# -------------------------------- wrapper -----------------------------------

def vae_forward(params, x, tile_b=2048, mm_dtype=jnp.bfloat16, vmem_limit_bytes=None):
    """Eval-mode VAE forward.

    tile_b: batch rows per grid step.  Sweep 512-8192 for large N on v5e/v6e
    (raise vmem_limit_bytes toward ~100 MiB); keep 2048-4096 on v7x (64 MiB
    physical VMEM).  The tile is automatically capped so the grid has >= 2
    steps whenever the batch allows it, so "parallel" sharding across v7x's two
    TensorCores is effective.
    mm_dtype: MXU operand dtype (bf16 default, ~2-3x MXU throughput; pass
    jnp.float32 for bit-accurate verification)."""
    N, D = x.shape
    wslab, bslab, layout, xp, mlvp, ld, spd, hd = build_slabs(params)
    assert D == 3 + spd
    wslab = wslab.astype(mm_dtype)                # cast the slab once, host-side
    outw = 2 * ld + 1 + spd                       # mu | logvar | hv | rec
    outp = _roundup(outw, 8)                      # padded output lane width

    # Batch tiling with padding (ragged batches supported).
    n8 = _roundup(N, 8)
    tile_b = _roundup(max(8, min(int(tile_b), n8)), 8)
    if n8 >= 16:                                  # prefer >= 2 grid steps (v7x megacore)
        tile_b = min(tile_b, _roundup((n8 + 1) // 2, 8))
    npad = _roundup(N, tile_b)

    # Pad x to (npad, xp): lanes 0:3 = query points, lanes 3:3+spd = shape params.
    xpad = jnp.zeros((npad, xp), jnp.float32).at[:N, :D].set(x.astype(jnp.float32))

    packed = pl.pallas_call(
        functools.partial(vae_kernel, layout, ld, spd, hd, mm_dtype),
        grid=(npad // tile_b,),
        in_specs=[
            pl.BlockSpec((tile_b, xp), lambda i: (i, 0)),
            pl.BlockSpec(wslab.shape, lambda i: (0, 0)),   # resident weight slab
            pl.BlockSpec(bslab.shape, lambda i: (0, 0)),   # resident bias slab
        ],
        out_specs=pl.BlockSpec((tile_b, outp), lambda i: (i, 0)),
        out_shape=jax.ShapeDtypeStruct((npad, outp), jnp.float32),
        compiler_params=pltpu.CompilerParams(
            dimension_semantics=("parallel",),             # shards across TCs on v7x
            vmem_limit_bytes=vmem_limit_bytes),
    )(xpad, wslab, bslab)

    packed = packed[:N]
    mu = packed[:, 0:ld]
    logvar = packed[:, ld:2 * ld]
    hv = packed[:, 2 * ld:2 * ld + 1]
    rec = packed[:, 2 * ld + 1:2 * ld + 1 + spd]
    return {"mu": mu, "log_var": logvar, "z": mu,          # z == mu in eval mode
            "hv_sdf_pred": hv, "x_reconstructed": rec}


# ------------------------- pure-JAX reference (check) ------------------------

def vae_reference(params, x):
    def lrelu(h):
        return jnp.where(h > 0, h, LRELU_SLOPE * h)

    def lin(i, h):
        w, b, bn = params[i]
        y = h @ w.T + b
        if bn:
            y = y / jnp.sqrt(1.0 + BN_EPS)   # eval-mode BN, fresh running stats
        return y

    qp, xs = x[:, :3], x[:, 3:]
    h = lrelu(lin(0, xs))
    res = lin(1, h); o = lrelu(lin(2, h)); o = lin(3, o); h = lrelu(o + res)
    res = lin(4, h); o = lrelu(lin(5, h)); o = lin(6, o); h = lrelu(o + res)
    mu, logvar = lin(7, h), lin(8, h)
    z = mu
    hv = jnp.concatenate([z, qp], axis=1)
    for i in range(9, 14):
        hv = lrelu(lin(i, hv))
    hv = lin(14, hv)
    r = z
    for i in range(15, 18):
        r = lrelu(lin(i, r))
    r = lin(18, r)
    return {"mu": mu, "log_var": logvar, "z": z,
            "hv_sdf_pred": hv, "x_reconstructed": r}


# ----------------------------------- main ------------------------------------

if __name__ == "__main__":
    key = jax.random.PRNGKey(0)
    pkey, xkey = jax.random.split(key)

    input_dim, latent_dim, hidden_dim = 4, 2, 32
    defs = layer_defs(input_dim, latent_dim, hidden_dim)
    params = init_params(pkey, defs)

    N = 256
    x = jax.random.normal(xkey, (N, input_dim), jnp.float32)

    ref = vae_reference(params, x)

    # Strict f32 verification path (bit-level semantics check).
    out32 = vae_forward(params, x, tile_b=128, mm_dtype=jnp.float32)
    out32 = jax.tree_util.tree_map(jax.block_until_ready, out32)
    for k in ref:
        assert out32[k].shape == ref[k].shape, (k, out32[k].shape, ref[k].shape)
        assert jnp.allclose(out32[k], ref[k], rtol=1e-4, atol=1e-5), k

    # Default fast path: bf16 MXU operands, f32 accumulate (looser tolerance).
    out16 = vae_forward(params, x, tile_b=128)
    out16 = jax.tree_util.tree_map(jax.block_until_ready, out16)
    for k in ref:
        assert out16[k].shape == ref[k].shape, (k, out16[k].shape, ref[k].shape)
        assert jnp.allclose(out16[k], ref[k], rtol=5e-2, atol=5e-2), k

    print("KERNEL_OK")
</pallas_src>

<mosaic_0001>
module attributes {stable_mosaic.version = 11 : i64} {
  func.func @vae_kernel(%arg0: i32, %arg1: memref<128x8xf32, #tpu.memory_space<vmem>>, %arg2: memref<688x128xf32, #tpu.memory_space<vmem>>, %arg3: memref<16x128xf32, #tpu.memory_space<vmem>>, %arg4: memref<128x8xf32, #tpu.memory_space<vmem>>) attributes {dimension_semantics = [#tpu.dimension_semantics<parallel>], iteration_bounds = array<i64: 2>, scalar_prefetch = 0 : i64, scratch_operands = 0 : i64, tpu.core_type = #tpu.core_type<tc>, window_params = [{transform_indices = @transform_0, window_bounds = array<i64: 128, 8>}, {pipeline_mode = #tpu.pipeline_mode<synchronous>, transform_indices = @transform_1, window_bounds = array<i64: 688, 128>}, {pipeline_mode = #tpu.pipeline_mode<synchronous>, transform_indices = @transform_2, window_bounds = array<i64: 16, 128>}, {transform_indices = @transform_3, window_bounds = array<i64: 128, 8>}]} {
    %c0 = arith.constant 0 : index
    %c0_0 = arith.constant 0 : index
    %0 = vector.load %arg1[%c0, %c0_0] : memref<128x8xf32, #tpu.memory_space<vmem>>, vector<128x8xf32>
    %c0_1 = arith.constant 0 : index
    %c0_2 = arith.constant 0 : index
    %1 = vector.load %arg2[%c0_1, %c0_2] : memref<688x128xf32, #tpu.memory_space<vmem>>, vector<8x64xf32>
    %c0_3 = arith.constant 0 : index
    %c0_4 = arith.constant 0 : index
    %2 = vector.load %arg3[%c0_3, %c0_4] : memref<16x128xf32, #tpu.memory_space<vmem>>, vector<1x64xf32>
    %cst = arith.constant dense<0.000000e+00> : vector<128x64xf32>
    %3 = tpu.matmul %0, %1, %cst {dimension_numbers = #tpu.dot_dimension_numbers<[1], [0], [0], [1], [0, 0, 1, 1], [], []>} : vector<128x8xf32>, vector<8x64xf32>, vector<128x64xf32> -> vector<128x64xf32>
    %4 = vector.broadcast %2 : vector<1x64xf32> to vector<128x64xf32>
    %5 = arith.addf %3, %4 : vector<128x64xf32>
    %6 = vector.extract_strided_slice %5 {offsets = [0, 0], sizes = [128, 32], strides = [1, 1]} : vector<128x64xf32> to vector<128x32xf32>
    %cst_5 = arith.constant 0.000000e+00 : f32
    %7 = vector.broadcast %cst_5 : f32 to vector<128x32xf32>
    %8 = arith.cmpf ogt, %6, %7 : vector<128x32xf32>
    %cst_6 = arith.constant 2.000000e-01 : f32
    %9 = vector.broadcast %cst_6 : f32 to vector<128x32xf32>
    %10 = arith.mulf %9, %6 : vector<128x32xf32>
    %11 = arith.select %8, %6, %10 : vector<128x32xi1>, vector<128x32xf32>
    %12 = vector.extract_strided_slice %5 {offsets = [0, 32], sizes = [128, 32], strides = [1, 1]} : vector<128x64xf32> to vector<128x32xf32>
    %c8 = arith.constant 8 : index
    %c0_7 = arith.constant 0 : index
    %13 = vector.load %arg2[%c8, %c0_7] : memref<688x128xf32, #tpu.memory_space<vmem>>, vector<32x128xf32>
    %c1 = arith.constant 1 : index
    %c0_8 = arith.constant 0 : index
    %14 = vector.load %arg3[%c1, %c0_8] : memref<16x128xf32, #tpu.memory_space<vmem>>, vector<1x128xf32>
    %cst_9 = arith.constant dense<0.000000e+00> : vector<128x128xf32>
    %15 = tpu.matmul %11, %13, %cst_9 {dimension_numbers = #tpu.dot_dimension_numbers<[1], [0], [0], [1], [0, 0, 1, 1], [], []>} : vector<128x32xf32>, vector<32x128xf32>, vector<128x128xf32> -> vector<128x128xf32>
    %16 = vector.broadcast %14 : vector<1x128xf32> to vector<128x128xf32>
    %17 = arith.addf %15, %16 : vector<128x128xf32>
    %18 = vector.extract_strided_slice %17 {offsets = [0, 64], sizes = [128, 64], strides = [1, 1]} : vector<128x128xf32> to vector<128x64xf32>
    %cst_10 = arith.constant 0.000000e+00 : f32
    %19 = vector.broadcast %cst_10 : f32 to vector<128x64xf32>
    %20 = arith.cmpf ogt, %18, %19 : vector<128x64xf32>
    %cst_11 = arith.constant 2.000000e-01 : f32
    %21 = vector.broadcast %cst_11 : f32 to vector<128x64xf32>
    %22 = arith.mulf %21, %18 : vector<128x64xf32>
    %23 = arith.select %20, %18, %22 : vector<128x64xi1>, vector<128x64xf32>
    %c40 = arith.constant 40 : index
    %c0_12 = arith.constant 0 : index
    %24 = vector.load %arg2[%c40, %c0_12] : memref<688x128xf32, #tpu.memory_space<vmem>>, vector<64x64xf32>
    %c2 = arith.constant 2 : index
    %c0_13 = arith.constant 0 : index
    %25 = vector.load %arg3[%c2, %c0_13] : memref<16x128xf32, #tpu.memory_space<vmem>>, vector<1x64xf32>
    %cst_14 = arith.constant dense<0.000000e+00> : vector<128x64xf32>
    %26 = tpu.matmul %23, %24, %cst_14 {dimension_numbers = #tpu.dot_dimension_numbers<[1], [0], [0], [1], [0, 0, 1, 1], [], []>} : vector<128x64xf32>, vector<64x64xf32>, vector<128x64xf32> -> vector<128x64xf32>
    %27 = vector.broadcast %25 : vector<1x64xf32> to vector<128x64xf32>
    %28 = arith.addf %26, %27 : vector<128x64xf32>
    %29 = vector.extract_strided_slice %17 {offsets = [0, 0], sizes = [128, 64], strides = [1, 1]} : vector<128x128xf32> to vector<128x64xf32>
    %30 = arith.addf %28, %29 : vector<128x64xf32>
    %cst_15 = arith.constant 0.000000e+00 : f32
    %31 = vector.broadcast %cst_15 : f32 to vector<128x64xf32>
    %32 = arith.cmpf ogt, %30, %31 : vector<128x64xf32>
    %cst_16 = arith.constant 2.000000e-01 : f32
    %33 = vector.broadcast %cst_16 : f32 to vector<128x64xf32>
    %34 = arith.mulf %33, %30 : vector<128x64xf32>
    %35 = arith.select %32, %30, %34 : vector<128x64xi1>, vector<128x64xf32>
    %c104 = arith.constant 104 : index
    %c0_17 = arith.constant 0 : index
    %36 = vector.load %arg2[%c104, %c0_17] : memref<688x128xf32, #tpu.memory_space<vmem>>, vector<64x64xf32>
    %c3 = arith.constant 3 : index
    %c0_18 = arith.constant 0 : index
    %37 = vector.load %arg3[%c3, %c0_18] : memref<16x128xf32, #tpu.memory_space<vmem>>, vector<1x64xf32>
    %cst_19 = arith.constant dense<0.000000e+00> : vector<128x64xf32>
    %38 = tpu.matmul %35, %36, %cst_19 {dimension_numbers = #tpu.dot_dimension_numbers<[1], [0], [0], [1], [0, 0, 1, 1], [], []>} : vector<128x64xf32>, vector<64x64xf32>, vector<128x64xf32> -> vector<128x64xf32>
    %39 = vector.broadcast %37 : vector<1x64xf32> to vector<128x64xf32>
    %40 = arith.addf %38, %39 : vector<128x64xf32>
    %41 = vector.extract_strided_slice %40 {offsets = [0, 32], sizes = [128, 32], strides = [1, 1]} : vector<128x64xf32> to vector<128x32xf32>
    %cst_20 = arith.constant 0.000000e+00 : f32
    %42 = vector.broadcast %cst_20 : f32 to vector<128x32xf32>
    %43 = arith.cmpf ogt, %41, %42 : vector<128x32xf32>
    %cst_21 = arith.constant 2.000000e-01 : f32
    %44 = vector.broadcast %cst_21 : f32 to vector<128x32xf32>
    %45 = arith.mulf %44, %41 : vector<128x32xf32>
    %46 = arith.select %43, %41, %45 : vector<128x32xi1>, vector<128x32xf32>
    %c168 = arith.constant 168 : index
    %c0_22 = arith.constant 0 : index
    %47 = vector.load %arg2[%c168, %c0_22] : memref<688x128xf32, #tpu.memory_space<vmem>>, vector<32x32xf32>
    %c4 = arith.constant 4 : index
    %c0_23 = arith.constant 0 : index
    %48 = vector.load %arg3[%c4, %c0_23] : memref<16x128xf32, #tpu.memory_space<vmem>>, vector<1x32xf32>
    %cst_24 = arith.constant dense<0.000000e+00> : vector<128x32xf32>
    %49 = tpu.matmul %46, %47, %cst_24 {dimension_numbers = #tpu.dot_dimension_numbers<[1], [0], [0], [1], [0, 0, 1, 1], [], []>} : vector<128x32xf32>, vector<32x32xf32>, vector<128x32xf32> -> vector<128x32xf32>
    %50 = vector.broadcast %48 : vector<1x32xf32> to vector<128x32xf32>
    %51 = arith.addf %49, %50 : vector<128x32xf32>
    %52 = vector.extract_strided_slice %40 {offsets = [0, 0], sizes = [128, 32], strides = [1, 1]} : vector<128x64xf32> to vector<128x32xf32>
    %53 = arith.addf %51, %52 : vector<128x32xf32>
    %cst_25 = arith.constant 0.000000e+00 : f32
    %54 = vector.broadcast %cst_25 : f32 to vector<128x32xf32>
    %55 = arith.cmpf ogt, %53, %54 : vector<128x32xf32>
    %cst_26 = arith.constant 2.000000e-01 : f32
    %56 = vector.broadcast %cst_26 : f32 to vector<128x32xf32>
    %57 = arith.mulf %56, %53 : vector<128x32xf32>
    %58 = arith.select %55, %53, %57 : vector<128x32xi1>, vector<128x32xf32>
    %c200 = arith.constant 200 : index
    %c0_27 = arith.constant 0 : index
    %59 = vector.load %arg2[%c200, %c0_27] : memref<688x128xf32, #tpu.memory_space<vmem>>, vector<32x8xf32>
    %c5 = arith.constant 5 : index
    %c0_28 = arith.constant 0 : index
    %60 = vector.load %arg3[%c5, %c0_28] : memref<16x128xf32, #tpu.memory_space<vmem>>, vector<1x8xf32>
    %cst_29 = arith.constant dense<0.000000e+00> : vector<128x8xf32>
    %61 = tpu.matmul %58, %59, %cst_29 {dimension_numbers = #tpu.dot_dimension_numbers<[1], [0], [0], [1], [0, 0, 1, 1], [], []>} : vector<128x32xf32>, vector<32x8xf32>, vector<128x8xf32> -> vector<128x8xf32>
    %62 = vector.broadcast %60 : vector<1x8xf32> to vector<128x8xf32>
    %63 = arith.addf %61, %62 : vector<128x8xf32>
    %c232 = arith.constant 232 : index
    %c0_30 = arith.constant 0 : index
    %64 = vector.load %arg2[%c232, %c0_30] : memref<688x128xf32, #tpu.memory_space<vmem>>, vector<8x64xf32>
    %c6 = arith.constant 6 : index
    %c0_31 = arith.constant 0 : index
    %65 = vector.load %arg3[%c6, %c0_31] : memref<16x128xf32, #tpu.memory_space<vmem>>, vector<1x64xf32>
    %cst_32 = arith.constant dense<0.000000e+00> : vector<128x64xf32>
    %66 = tpu.matmul %63, %64, %cst_32 {dimension_numbers = #tpu.dot_dimension_numbers<[1], [0], [0], [1], [0, 0, 1, 1], [], []>} : vector<128x8xf32>, vector<8x64xf32>, vector<128x64xf32> -> vector<128x64xf32>
    %67 = vector.broadcast %65 : vector<1x64xf32> to vector<128x64xf32>
    %68 = arith.addf %66, %67 : vector<128x64xf32>
    %69 = vector.extract_strided_slice %68 {offsets = [0, 0], sizes = [128, 32], strides = [1, 1]} : vector<128x64xf32> to vector<128x32xf32>
    %70 = arith.addf %69, %12 : vector<128x32xf32>
    %cst_33 = arith.constant 0.000000e+00 : f32
    %71 = vector.broadcast %cst_33 : f32 to vector<128x32xf32>
    %72 = arith.cmpf ogt, %70, %71 : vector<128x32xf32>
    %cst_34 = arith.constant 2.000000e-01 : f32
    %73 = vector.broadcast %cst_34 : f32 to vector<128x32xf32>
    %74 = arith.mulf %73, %70 : vector<128x32xf32>
    %75 = arith.select %72, %70, %74 : vector<128x32xi1>, vector<128x32xf32>
    %76 = vector.extract_strided_slice %68 {offsets = [0, 32], sizes = [128, 32], strides = [1, 1]} : vector<128x64xf32> to vector<128x32xf32>
    %cst_35 = arith.constant 0.000000e+00 : f32
    %77 = vector.broadcast %cst_35 : f32 to vector<128x32xf32>
    %78 = arith.cmpf ogt, %76, %77 : vector<128x32xf32>
    %cst_36 = arith.constant 2.000000e-01 : f32
    %79 = vector.broadcast %cst_36 : f32 to vector<128x32xf32>
    %80 = arith.mulf %79, %76 : vector<128x32xf32>
    %81 = arith.select %78, %76, %80 : vector<128x32xi1>, vector<128x32xf32>
    %82 = tpu.concatenate %75, %81 in 1 : vector<128x32xf32>, vector<128x32xf32> -> vector<128x64xf32>
    %c240 = arith.constant 240 : index
    %c0_37 = arith.constant 0 : index
    %83 = vector.load %arg2[%c240, %c0_37] : memref<688x128xf32, #tpu.memory_space<vmem>>, vector<64x128xf32>
    %c7 = arith.constant 7 : index
    %c0_38 = arith.constant 0 : index
    %84 = vector.load %arg3[%c7, %c0_38] : memref<16x128xf32, #tpu.memory_space<vmem>>, vector<1x128xf32>
    %cst_39 = arith.constant dense<0.000000e+00> : vector<128x128xf32>
    %85 = tpu.matmul %82, %83, %cst_39 {dimension_numbers = #tpu.dot_dimension_numbers<[1], [0], [0], [1], [0, 0, 1, 1], [], []>} : vector<128x64xf32>, vector<64x128xf32>, vector<128x128xf32> -> vector<128x128xf32>
    %86 = vector.broadcast %84 : vector<1x128xf32> to vector<128x128xf32>
    %87 = arith.addf %85, %86 : vector<128x128xf32>
    %88 = vector.extract_strided_slice %87 {offsets = [0, 0], sizes = [128, 64], strides = [1, 1]} : vector<128x128xf32> to vector<128x64xf32>
    %cst_40 = arith.constant 0.000000e+00 : f32
    %89 = vector.broadcast %cst_40 : f32 to vector<128x64xf32>
    %90 = arith.cmpf ogt, %88, %89 : vector<128x64xf32>
    %cst_41 = arith.constant 2.000000e-01 : f32
    %91 = vector.broadcast %cst_41 : f32 to vector<128x64xf32>
    %92 = arith.mulf %91, %88 : vector<128x64xf32>
    %93 = arith.select %90, %88, %92 : vector<128x64xi1>, vector<128x64xf32>
    %94 = vector.extract_strided_slice %87 {offsets = [0, 64], sizes = [128, 64], strides = [1, 1]} : vector<128x128xf32> to vector<128x64xf32>
    %cst_42 = arith.constant 0.000000e+00 : f32
    %95 = vector.broadcast %cst_42 : f32 to vector<128x64xf32>
    %96 = arith.cmpf ogt, %94, %95 : vector<128x64xf32>
    %cst_43 = arith.constant 2.000000e-01 : f32
    %97 = vector.broadcast %cst_43 : f32 to vector<128x64xf32>
    %98 = arith.mulf %97, %94 : vector<128x64xf32>
    %99 = arith.select %96, %94, %98 : vector<128x64xi1>, vector<128x64xf32>
    %c304 = arith.constant 304 : index
    %c0_44 = arith.constant 0 : index
    %100 = vector.load %arg2[%c304, %c0_44] : memref<688x128xf32, #tpu.memory_space<vmem>>, vector<64x128xf32>
    %c8_45 = arith.constant 8 : index
    %c0_46 = arith.constant 0 : index
    %101 = vector.load %arg3[%c8_45, %c0_46] : memref<16x128xf32, #tpu.memory_space<vmem>>, vector<1x128xf32>
    %cst_47 = arith.constant dense<0.000000e+00> : vector<128x128xf32>
    %102 = tpu.matmul %93, %100, %cst_47 {dimension_numbers = #tpu.dot_dimension_numbers<[1], [0], [0], [1], [0, 0, 1, 1], [], []>} : vector<128x64xf32>, vector<64x128xf32>, vector<128x128xf32> -> vector<128x128xf32>
    %103 = vector.broadcast %101 : vector<1x128xf32> to vector<128x128xf32>
    %104 = arith.addf %102, %103 : vector<128x128xf32>
    %cst_48 = arith.constant 0.000000e+00 : f32
    %105 = vector.broadcast %cst_48 : f32 to vector<128x128xf32>
    %106 = arith.cmpf ogt, %104, %105 : vector<128x128xf32>
    %cst_49 = arith.constant 2.000000e-01 : f32
    %107 = vector.broadcast %cst_49 : f32 to vector<128x128xf32>
    %108 = arith.mulf %107, %104 : vector<128x128xf32>
    %109 = arith.select %106, %104, %108 : vector<128x128xi1>, vector<128x128xf32>
    %c368 = arith.constant 368 : index
    %c0_50 = arith.constant 0 : index
    %110 = vector.load %arg2[%c368, %c0_50] : memref<688x128xf32, #tpu.memory_space<vmem>>, vector<64x32xf32>
    %c9 = arith.constant 9 : index
    %c0_51 = arith.constant 0 : index
    %111 = vector.load %arg3[%c9, %c0_51] : memref<16x128xf32, #tpu.memory_space<vmem>>, vector<1x32xf32>
    %cst_52 = arith.constant dense<0.000000e+00> : vector<128x32xf32>
    %112 = tpu.matmul %99, %110, %cst_52 {dimension_numbers = #tpu.dot_dimension_numbers<[1], [0], [0], [1], [0, 0, 1, 1], [], []>} : vector<128x64xf32>, vector<64x32xf32>, vector<128x32xf32> -> vector<128x32xf32>
    %113 = vector.broadcast %111 : vector<1x32xf32> to vector<128x32xf32>
    %114 = arith.addf %112, %113 : vector<128x32xf32>
    %cst_53 = arith.constant 0.000000e+00 : f32
    %115 = vector.broadcast %cst_53 : f32 to vector<128x32xf32>
    %116 = arith.cmpf ogt, %114, %115 : vector<128x32xf32>
    %cst_54 = arith.constant 2.000000e-01 : f32
    %117 = vector.broadcast %cst_54 : f32 to vector<128x32xf32>
    %118 = arith.mulf %117, %114 : vector<128x32xf32>
    %119 = arith.select %116, %114, %118 : vector<128x32xi1>, vector<128x32xf32>
    %c432 = arith.constant 432 : index
    %c0_55 = arith.constant 0 : index
    %120 = vector.load %arg2[%c432, %c0_55] : memref<688x128xf32, #tpu.memory_space<vmem>>, vector<128x64xf32>
    %c10 = arith.constant 10 : index
    %c0_56 = arith.constant 0 : index
    %121 = vector.load %arg3[%c10, %c0_56] : memref<16x128xf32, #tpu.memory_space<vmem>>, vector<1x64xf32>
    %cst_57 = arith.constant dense<0.000000e+00> : vector<128x64xf32>
    %122 = tpu.matmul %109, %120, %cst_57 {dimension_numbers = #tpu.dot_dimension_numbers<[1], [0], [0], [1], [0, 0, 1, 1], [], []>} : vector<128x128xf32>, vector<128x64xf32>, vector<128x64xf32> -> vector<128x64xf32>
    %123 = vector.broadcast %121 : vector<1x64xf32> to vector<128x64xf32>
    %124 = arith.addf %122, %123 : vector<128x64xf32>
    %cst_58 = arith.constant 0.000000e+00 : f32
    %125 = vector.broadcast %cst_58 : f32 to vector<128x64xf32>
    %126 = arith.cmpf ogt, %124, %125 : vector<128x64xf32>
    %cst_59 = arith.constant 2.000000e-01 : f32
    %127 = vector.broadcast %cst_59 : f32 to vector<128x64xf32>
    %128 = arith.mulf %127, %124 : vector<128x64xf32>
    %129 = arith.select %126, %124, %128 : vector<128x64xi1>, vector<128x64xf32>
    %c560 = arith.constant 560 : index
    %c0_60 = arith.constant 0 : index
    %130 = vector.load %arg2[%c560, %c0_60] : memref<688x128xf32, #tpu.memory_space<vmem>>, vector<64x32xf32>
    %c11 = arith.constant 11 : index
    %c0_61 = arith.constant 0 : index
    %131 = vector.load %arg3[%c11, %c0_61] : memref<16x128xf32, #tpu.memory_space<vmem>>, vector<1x32xf32>
    %cst_62 = arith.constant dense<0.000000e+00> : vector<128x32xf32>
    %132 = tpu.matmul %129, %130, %cst_62 {dimension_numbers = #tpu.dot_dimension_numbers<[1], [0], [0], [1], [0, 0, 1, 1], [], []>} : vector<128x64xf32>, vector<64x32xf32>, vector<128x32xf32> -> vector<128x32xf32>
    %133 = vector.broadcast %131 : vector<1x32xf32> to vector<128x32xf32>
    %134 = arith.addf %132, %133 : vector<128x32xf32>
    %cst_63 = arith.constant 0.000000e+00 : f32
    %135 = vector.broadcast %cst_63 : f32 to vector<128x32xf32>
    %136 = arith.cmpf ogt, %134, %135 : vector<128x32xf32>
    %cst_64 = arith.constant 2.000000e-01 : f32
    %137 = vector.broadcast %cst_64 : f32 to vector<128x32xf32>
    %138 = arith.mulf %137, %134 : vector<128x32xf32>
    %139 = arith.select %136, %134, %138 : vector<128x32xi1>, vector<128x32xf32>
    %140 = tpu.concatenate %139, %119 in 1 : vector<128x32xf32>, vector<128x32xf32> -> vector<128x64xf32>
    %c624 = arith.constant 624 : index
    %c0_65 = arith.constant 0 : index
    %141 = vector.load %arg2[%c624, %c0_65] : memref<688x128xf32, #tpu.memory_space<vmem>>, vector<64x2xf32>
    %c12 = arith.constant 12 : index
    %c0_66 = arith.constant 0 : index
    %142 = vector.load %arg3[%c12, %c0_66] : memref<16x128xf32, #tpu.memory_space<vmem>>, vector<1x2xf32>
    %cst_67 = arith.constant dense<0.000000e+00> : vector<128x2xf32>
    %143 = tpu.matmul %140, %141, %cst_67 {dimension_numbers = #tpu.dot_dimension_numbers<[1], [0], [0], [1], [0, 0, 1, 1], [], []>} : vector<128x64xf32>, vector<64x2xf32>, vector<128x2xf32> -> vector<128x2xf32>
    %144 = vector.broadcast %142 : vector<1x2xf32> to vector<128x2xf32>
    %145 = arith.addf %143, %144 : vector<128x2xf32>
    %146 = vector.extract_strided_slice %63 {offsets = [0, 0], sizes = [128, 4], strides = [1, 1]} : vector<128x8xf32> to vector<128x4xf32>
    %cst_68 = arith.constant 0.000000e+00 : f32
    %147 = vector.broadcast %cst_68 : f32 to vector<128x2xf32>
    %148 = tpu.concatenate %146, %145, %147 in 1 : vector<128x4xf32>, vector<128x2xf32>, vector<128x2xf32> -> vector<128x8xf32>
    %c0_69 = arith.constant 0 : index
    %c0_70 = arith.constant 0 : index
    %149 = vector.load %arg4[%c0_69, %c0_70] : memref<128x8xf32, #tpu.memory_space<vmem>>, vector<128x8xf32>
    tpu.vector_store %arg4[%c0_69, %c0_70], %148 {strides = array<i32>} : memref<128x8xf32, #tpu.memory_space<vmem>>, vector<128x8xf32>,
    return
  }
  func.func @transform_0(%arg0: i32) -> (i32, i32) {
    %c0_i32 = arith.constant 0 : i32
    %c0_i32_0 = arith.constant 0 : i32
    return %arg0, %c0_i32 : i32, i32
  }
  func.func @transform_1(%arg0: i32) -> (i32, i32) {
    %c0_i32 = arith.constant 0 : i32
    %c0_i32_0 = arith.constant 0 : i32
    %c0_i32_1 = arith.constant 0 : i32
    return %c0_i32, %c0_i32_0 : i32, i32
  }
  func.func @transform_2(%arg0: i32) -> (i32, i32) {
    %c0_i32 = arith.constant 0 : i32
    %c0_i32_0 = arith.constant 0 : i32
    %c0_i32_1 = arith.constant 0 : i32
    return %c0_i32, %c0_i32_0 : i32, i32
  }
  func.func @transform_3(%arg0: i32) -> (i32, i32) {
    %c0_i32 = arith.constant 0 : i32
    %c0_i32_0 = arith.constant 0 : i32
    return %arg0, %c0_i32 : i32, i32
  }
}

</mosaic_0001>

<llo_original>
// kernel: tpu_custom_call.1
$region0: #{tpu_custom_call.1}
  #allocation0 [shape = 'u32[]', space=smem, size = 0x4, offset = 0x4, fixed_abs, tag = 'smem constant byte address 0x4 - core index']
  #allocation1 [shape = 'u32[144,128]{1,0:T(1,128)}', space=vmem, size = 0x12000, scoped, tag = 'internal scratch']
  %s0 = inlined_call_operand.vmem [shape: f32[256,8], index: 0, kind: input, shape index: {}]
  %s1 = inlined_call_operand.hbm [shape: f32[688,128], index: 1, kind: input, shape index: {}]
  %s2 = inlined_call_operand.vmem [shape: f32[16,128], index: 2, kind: input, shape index: {}]
  %s3 = inlined_call_operand.vmem [shape: f32[256,8], index: 3, kind: output, shape index: {}]
  %s4 = sld [smem:[#allocation0]]
  $region49: #{tpu_custom_call.1} parent=0
    _
  %s6 = ssub.s32 1, %s4
  %s7 = scalar_select 0, %s6, %s4
  $region1: #{tpu_custom_call.1} parent=0
    #allocation2 [shape = 'u8[352256]{0}', space=vmem, size = 0x56000, scoped, tag = 'input window, operand 1, single buffered']
    #allocation3 [shape = 's32[2]{0}', space=sflag, size = 0x8, scoped, tag = 'scoped memory for tpu_custom_call.1']
    %8 = vsyncpa [#allocation3], 0
    loop: start=0, step=1, limit=4
    $region2: #{tpu_custom_call.1} parent=1 // loop_pre_header
      _
    $region3: #{tpu_custom_call.1} parent=1 // loop_header
      %s10 = sphi 0, %s14
      %p11 = scmp.ge.s32.totalorder %s10, 4
      %s20 = sphi 0, %s22
      %s23 = sphi 0, %s20
      %s24 = sphi 0, %s23
      %s40 = sphi 0, %s24
      %s44 = sphi 0, %s44
      %s46 = sphi 0, %s44
      %s47 = sphi 0, %s46
      %s61 = sphi 0, %s47
      %s65 = sphi 0, %s65
      %s67 = sphi 0, %s65
      %s68 = sphi 0, %s67
      %s82 = sphi 0, %s68
      %s88 = sphi 0, %s90
      %s91 = sphi 0, %s88
      %s92 = sphi 0, %s91
      %s108 = sphi 0, %s92
    $region4: #{tpu_custom_call.1} parent=1 // loop_header_branch
      %13 = sbr.rel (%p11) target = $region8
    $region5: #{tpu_custom_call.1} parent=1 // loop_body
      %s15 = ssub.s32 %s10, 1
      %s16 = ssub.s32 %s10, 2
      %s17 = sadd.s32 %s10, 1
      %s18 = ssub.s32 %s10, %s17
      %p19 = scmp.eq.s32.totalorder %s18, 0
      %s21 = sadd.s32 %s20, 1
      %s22 = scalar_select %p19, %s20, %s21
      %p25 = pneg %p19
      %p26 = scmp.eq.s32.totalorder %s10, 1
      %p27 = por %p25, %p26
      %p28 = scmp.ne.s32.totalorder %s20, %s23
      %p29 = scmp.eq.s32.totalorder %s10, 0
      %p30 = por %p28, %p29
      %p31 = scmp.ne.s32.totalorder %s20, %s23
      %p32 = scmp.eq.s32.totalorder %s15, 1
      %p33 = por %p31, %p32
      %p34 = scmp.ne.s32.totalorder %s23, %s24
      %p35 = scmp.eq.s32.totalorder %s15, 0
      %p36 = por %p34, %p35
      %p37 = scmp.ne.s32.totalorder %s23, %s24
      %p38 = scmp.eq.s32.totalorder %s16, 1
      %p39 = por %p37, %p38
      %p41 = scmp.ne.s32.totalorder %s24, %s40
      %p42 = scmp.eq.s32.totalorder %s16, 0
      %p43 = por %p41, %p42
      %s45 = sadd.s32 %s44, 1
      %p48 = scmp.eq.s32.totalorder %s10, 1
      %p49 = scmp.ne.s32.totalorder %s44, %s46
      %p50 = scmp.eq.s32.totalorder %s10, 0
      %p51 = por %p49, %p50
      %p52 = scmp.ne.s32.totalorder %s44, %s46
      %p53 = scmp.eq.s32.totalorder %s15, 1
      %p54 = por %p52, %p53
      %p55 = scmp.ne.s32.totalorder %s46, %s47
      %p56 = scmp.eq.s32.totalorder %s15, 0
      %p57 = por %p55, %p56
      %p58 = scmp.ne.s32.totalorder %s46, %s47
      %p59 = scmp.eq.s32.totalorder %s16, 1
      %p60 = por %p58, %p59
      %p62 = scmp.ne.s32.totalorder %s47, %s61
      %p63 = scmp.eq.s32.totalorder %s16, 0
      %p64 = por %p62, %p63
      %s66 = sadd.s32 %s65, 1
      %p69 = scmp.eq.s32.totalorder %s10, 1
      %p70 = scmp.ne.s32.totalorder %s65, %s67
      %p71 = scmp.eq.s32.totalorder %s10, 0
      %p72 = por %p70, %p71
      %p73 = scmp.ne.s32.totalorder %s65, %s67
      %p74 = scmp.eq.s32.totalorder %s15, 1
      %p75 = por %p73, %p74
      %p76 = scmp.ne.s32.totalorder %s67, %s68
      %p77 = scmp.eq.s32.totalorder %s15, 0
      %p78 = por %p76, %p77
      %p79 = scmp.ne.s32.totalorder %s67, %s68
      %p80 = scmp.eq.s32.totalorder %s16, 1
      %p81 = por %p79, %p80
      %p83 = scmp.ne.s32.totalorder %s68, %s82
      %p84 = scmp.eq.s32.totalorder %s16, 0
      %p85 = por %p83, %p84
      %s86 = ssub.s32 %s10, %s17
      %p87 = scmp.eq.s32.totalorder %s86, 0
      %s89 = sadd.s32 %s88, 1
      %s90 = scalar_select %p87, %s88, %s89
      %p93 = pneg %p87
      %p94 = scmp.eq.s32.totalorder %s10, 1
      %p95 = por %p93, %p94
      %p96 = scmp.ne.s32.totalorder %s88, %s91
      %p97 = scmp.eq.s32.totalorder %s10, 0
      %p98 = por %p96, %p97
      %p99 = scmp.ne.s32.totalorder %s88, %s91
      %p100 = scmp.eq.s32.totalorder %s15, 1
      %p101 = por %p99, %p100
      %p102 = scmp.ne.s32.totalorder %s91, %s92
      %p103 = scmp.eq.s32.totalorder %s15, 0
      %p104 = por %p102, %p103
      %p105 = scmp.ne.s32.totalorder %s91, %s92
      %p106 = scmp.eq.s32.totalorder %s16, 1
      %p107 = por %p105, %p106
      %p109 = scmp.ne.s32.totalorder %s92, %s108
      %p110 = scmp.eq.s32.totalorder %s16, 0
      %p111 = por %p109, %p110
      %p112 = scmp.le.s32.totalorder 1, %s10
      %p113 = scmp.lt.s32.totalorder %s10, 3
      %p114 = pnand %p112, %p113
      %p115 = pneg %p114
      // Predicated region
      $region9: #{tpu_custom_call.1} parent=5 // pred_check
        _
      $region10: #{tpu_custom_call.1} parent=5 // pred_check_branch
        %117 = sbr.rel (%p114) target = $region12
      $region11: #{tpu_custom_call.1} parent=5 // pred_region
        %s118 = ssub.s32 %s10, 1
        // Predicated region
        $region13: #{tpu_custom_call.1} parent=11 // pred_check
          %p119 = pneg %p57
        $region14: #{tpu_custom_call.1} parent=11 // pred_check_branch
          %121 = sbr.rel (%p119) target = $region16
        $region15: #{tpu_custom_call.1} parent=11 // pred_region
          %s123 = ssub.s32 11008, 11008
          %124 = vsyncadd [#allocation3], %s123
          %s125 = sshll.u32 [#allocation2], 4
          %s126 = int_to_ptr.vmem [resolvable:$true] %s125
          %131 = dma.hbm_to_vmem [thread:$0]  %s1, 11008, %s126, [#allocation3], 128, 128, 8
        $region16: #{tpu_custom_call.1} parent=11 // pred_fallthru
          _
        // Predicated region
        $region17: #{tpu_custom_call.1} parent=11 // pred_check
          %p132 = pneg %p78
        $region18: #{tpu_custom_call.1} parent=11 // pred_check_branch
          %134 = sbr.rel (%p132) target = $region20
        $region19: #{tpu_custom_call.1} parent=11 // pred_region
          _
        $region20: #{tpu_custom_call.1} parent=11 // pred_fallthru
          _
      $region12: #{tpu_custom_call.1} parent=5 // pred_fallthru
        _
      %p135 = scmp.lt.s32.totalorder %s10, 2
      // Predicated region
      $region21: #{tpu_custom_call.1} parent=5 // pred_check
        %p136 = pneg %p135
      $region22: #{tpu_custom_call.1} parent=5 // pred_check_branch
        %138 = sbr.rel (%p136) target = $region24
      $region23: #{tpu_custom_call.1} parent=5 // pred_region
        // Predicated region
        $region25: #{tpu_custom_call.1} parent=23 // pred_check
          %p139 = pneg %p30
        $region26: #{tpu_custom_call.1} parent=23 // pred_check_branch
          %141 = sbr.rel (%p139) target = $region28
        $region27: #{tpu_custom_call.1} parent=23 // pred_region
          %s142 = smul.u32 16, %s10
          %p143 = scmp.lt.s32.totalorder %s142, 31
          %s144 = scalar_select %p143, %s142, 31
          %s145 = smul.addr %s144, 8
          %s146 = scalar_lea.vmem %s0, %s145
          %s147 = smul.u32 16, %s10
        $region28: #{tpu_custom_call.1} parent=23 // pred_fallthru
          _
      $region24: #{tpu_custom_call.1} parent=5 // pred_fallthru
        _
      %p148 = scmp.le.s32.totalorder 1, %s10
      %p149 = scmp.lt.s32.totalorder %s10, 3
      %p150 = pnand %p148, %p149
      %p151 = pneg %p150
      // Predicated region
      $region29: #{tpu_custom_call.1} parent=5 // pred_check
        _
      $region30: #{tpu_custom_call.1} parent=5 // pred_check_branch
        %153 = sbr.rel (%p150) target = $region32
      $region31: #{tpu_custom_call.1} parent=5 // pred_region
        %s154 = ssub.s32 %s10, 1
        // Predicated region
        $region33: #{tpu_custom_call.1} parent=31 // pred_check
          %p155 = pneg %p57
        $region34: #{tpu_custom_call.1} parent=31 // pred_check_branch
          %157 = sbr.rel (%p155) target = $region36
        $region35: #{tpu_custom_call.1} parent=31 // pred_region
          %158 = dma.done [#allocation3], 11008
        $region36: #{tpu_custom_call.1} parent=31 // pred_fallthru
          _
        %s159 = smul.u32 16, %s15
        %p160 = scmp.lt.s32.totalorder %s159, 31
        %s161 = scalar_select %p160, %s159, 31
        %s162 = smul.addr %s161, 8
        %s163 = scalar_lea.vmem %s0, %s162
        %p164 = pneg %p36
        %p165 = pneg %p33
        %p166 = pneg %p57
        %p167 = pneg %p54
        %p168 = pneg %p78
        %p169 = pneg %p75
        %p170 = pneg %p104
        %p171 = pneg %p101
        %s172 = smul.u32 16, %s15
        %p173 = scmp.lt.s32.totalorder %s172, 31
        %s174 = scalar_select %p173, %s172, 31
        %s175 = smul.addr %s174, 8
        %s176 = scalar_lea.vmem %s3, %s175
        %s177 = smul.u32 16, %s15
        %p178 = scmp.lt.s32.totalorder %s177, 31
        %s179 = scalar_select %p178, %s177, 31
        %s180 = smul.addr %s179, 8
        %s181 = scalar_lea.vmem %s0, %s180
        %s182 = smul.u32 16, %s15
        %s183 = smul.u32 16, %s15
        %p184 = scmp.lt.s32.totalorder %s183, 31
        %s185 = scalar_select %p184, %s183, 31
        %s186 = smul.addr %s185, 8
        %s187 = scalar_lea.vmem %s3, %s186
        %s188 = smul.u32 16, %s15
        %v189 = vld [vmem:[%s181] sm:$0xff]
        %v190 = vld [vmem:[%s181 + $0x8] sm:$0xff]
        %v191 = vld [vmem:[%s181 + $0x10] sm:$0xff]
        %v192 = vld [vmem:[%s181 + $0x18] sm:$0xff]
        %v193 = vld [vmem:[%s181 + $0x20] sm:$0xff]
        %v194 = vld [vmem:[%s181 + $0x28] sm:$0xff]
        %v195 = vld [vmem:[%s181 + $0x30] sm:$0xff]
        %v196 = vld [vmem:[%s181 + $0x38] sm:$0xff]
        %v197 = vld [vmem:[%s181 + $0x40] sm:$0xff]
        %v198 = vld [vmem:[%s181 + $0x48] sm:$0xff]
        %v199 = vld [vmem:[%s181 + $0x50] sm:$0xff]
        %v200 = vld [vmem:[%s181 + $0x58] sm:$0xff]
        %v201 = vld [vmem:[%s181 + $0x60] sm:$0xff]
        %v202 = vld [vmem:[%s181 + $0x68] sm:$0xff]
        %v203 = vld [vmem:[%s181 + $0x70] sm:$0xff]
        %v204 = vld [vmem:[%s181 + $0x78] sm:$0xff]
        %v205 = vld [vmem:[#allocation2] sm:$0xff]
        %v206 = vld [vmem:[%s2] sm:$0x1]
        %v207 = vlaneseq
        %v208 = vshrl.u32 %v207, 7
        %v209 = vsub.s32 0, %v208
        %v210 = vrot.slane %v206, %v209
        %vm211 = vcmask 64512
        %v213 = vsel %vm211, %v189, 0
        %v216 = vsel %vm211, %v190, 0
        %v219 = vsel %vm211, %v191, 0
        %v222 = vsel %vm211, %v192, 0
        %v225 = vsel %vm211, %v193, 0
        %v228 = vsel %vm211, %v194, 0
        %v231 = vsel %vm211, %v195, 0
        %v234 = vsel %vm211, %v196, 0
        %v237 = vsel %vm211, %v197, 0
        %v240 = vsel %vm211, %v198, 0
        %v243 = vsel %vm211, %v199, 0
        %v246 = vsel %vm211, %v200, 0
        %v249 = vsel %vm211, %v201, 0
        %v252 = vsel %vm211, %v202, 0
        %v255 = vsel %vm211, %v203, 0
        %v258 = vsel %vm211, %v204, 0
        %260 = vmatprep.subr.mxu0 0.0
        %261 = vmatpush1.msra.mxu0 0.0
        %262 = vmatprep.subr.mxu0 0.0
        %263 = vmatpush1.msra.mxu0 0.0
        %264 = vmatprep.subr.mxu0 0.0
        %265 = vmatpush1.msra.mxu0 0.0
        %266 = vmatprep.subr.mxu0 0.0
        %267 = vmatpush1.msra.mxu0 0.0
        %268 = vmatprep.subr.mxu0 0.0
        %269 = vmatpush1.msra.mxu0 0.0
        %270 = vmatprep.subr.mxu0 0.0
        %271 = vmatpush1.msra.mxu0 0.0
        %272 = vmatprep.subr.mxu0 0.0
        %273 = vmatpush1.msra.mxu0 0.0
        %274 = vmatprep.subr.mxu0 0.0
        %275 = vmatpush1.msra.mxu0 0.0
        %276 = vmatprep.subr.mxu0 0.0
        %277 = vmatpush1.msra.mxu0 0.0
        %278 = vmatprep.subr.mxu0 0.0
        %279 = vmatpush1.msra.mxu0 0.0
        %280 = vmatprep.subr.mxu0 0.0
        %281 = vmatpush1.msra.mxu0 0.0
        %282 = vmatprep.subr.mxu0 0.0
        %283 = vmatpush1.msra.mxu0 0.0
        %284 = vmatprep.subr.mxu0 0.0
        %285 = vmatpush1.msra.mxu0 0.0
        %286 = vmatprep.subr.mxu0 0.0
        %287 = vmatpush1.msra.mxu0 0.0
        %288 = vmatprep.subr.mxu0 0.0
        %289 = vmatpush1.msra.mxu0 0.0
        %290 = vmatprep.subr.mxu0 0.0
        %291 = vmatpush1.msra.mxu0 %v205
        %292 = vmatprep.subr.mxu0 0.0
        %293 = vmatpush2.msra.mxu0 0.0
        %294 = vmatprep.subr.mxu0 0.0
        %295 = vmatpush2.msra.mxu0 0.0
        %296 = vmatprep.subr.mxu0 0.0
        %297 = vmatpush2.msra.mxu0 0.0
        %298 = vmatprep.subr.mxu0 0.0
        %299 = vmatpush2.msra.mxu0 0.0
        %300 = vmatprep.subr.mxu0 0.0
        %301 = vmatpush2.msra.mxu0 0.0
        %302 = vmatprep.subr.mxu0 0.0
        %303 = vmatpush2.msra.mxu0 0.0
        %304 = vmatprep.subr.mxu0 0.0
        %305 = vmatpush2.msra.mxu0 0.0
        %306 = vmatprep.subr.mxu0 0.0
        %307 = vmatpush2.msra.mxu0 0.0
        %308 = vmatprep.subr.mxu0 0.0
        %309 = vmatpush2.msra.mxu0 0.0
        %310 = vmatprep.subr.mxu0 0.0
        %311 = vmatpush2.msra.mxu0 0.0
        %312 = vmatprep.subr.mxu0 0.0
        %313 = vmatpush2.msra.mxu0 0.0
        %314 = vmatprep.subr.mxu0 0.0
        %315 = vmatpush2.msra.mxu0 0.0
        %316 = vmatprep.subr.mxu0 0.0
        %317 = vmatpush2.msra.mxu0 0.0
        %318 = vmatprep.subr.mxu0 0.0
        %319 = vmatpush2.msra.mxu0 0.0
        %320 = vmatprep.subr.mxu0 0.0
        %321 = vmatpush2.msra.mxu0 0.0
        %322 = vmatprep.subr.mxu0 0.0
        %323 = vmatpush2.msra.mxu0 0.0
        %324 = vmatprep.mubr.f32.mxu0 0.0
        %325 = vmatmul.mubr.f32.gmra.mxu0 %v213
        %v326 = vpop.f32.mrf.mxu0
        %v327 = vadd.f32 %v210, %v326
        %v328 = vpop.f32.mrf.mxu0
        %329 = vmatprep.mubr.f32.mxu0 0.0
        %330 = vmatmul.mubr.f32.gmra.mxu0 %v216
        %v331 = vpop.f32.mrf.mxu0
        %v332 = vadd.f32 %v210, %v331
        %v333 = vpop.f32.mrf.mxu0
        %334 = vmatprep.mubr.f32.mxu0 0.0
        %335 = vmatmul.mubr.f32.gmra.mxu0 %v219
        %v336 = vpop.f32.mrf.mxu0
        %v337 = vadd.f32 %v210, %v336
        %v338 = vpop.f32.mrf.mxu0
        %339 = vmatprep.mubr.f32.mxu0 0.0
        %340 = vmatmul.mubr.f32.gmra.mxu0 %v222
        %v341 = vpop.f32.mrf.mxu0
        %v342 = vadd.f32 %v210, %v341
        %v343 = vpop.f32.mrf.mxu0
        %344 = vmatprep.mubr.f32.mxu0 0.0
        %345 = vmatmul.mubr.f32.gmra.mxu0 %v225
        %v346 = vpop.f32.mrf.mxu0
        %v347 = vadd.f32 %v210, %v346
        %v348 = vpop.f32.mrf.mxu0
        %349 = vmatprep.mubr.f32.mxu0 0.0
        %350 = vmatmul.mubr.f32.gmra.mxu0 %v228
        %v351 = vpop.f32.mrf.mxu0
        %v352 = vadd.f32 %v210, %v351
        %v353 = vpop.f32.mrf.mxu0
        %354 = vmatprep.mubr.f32.mxu0 0.0
        %355 = vmatmul.mubr.f32.gmra.mxu0 %v231
        %v356 = vpop.f32.mrf.mxu0
        %v357 = vadd.f32 %v210, %v356
        %v358 = vpop.f32.mrf.mxu0
        %359 = vmatprep.mubr.f32.mxu0 0.0
        %360 = vmatmul.mubr.f32.gmra.mxu0 %v234
        %v361 = vpop.f32.mrf.mxu0
        %v362 = vadd.f32 %v210, %v361
        %v363 = vpop.f32.mrf.mxu0
        %364 = vmatprep.mubr.f32.mxu0 0.0
        %365 = vmatmul.mubr.f32.gmra.mxu0 %v237
        %v366 = vpop.f32.mrf.mxu0
        %v367 = vadd.f32 %v210, %v366
        %v368 = vpop.f32.mrf.mxu0
        %369 = vmatprep.mubr.f32.mxu0 0.0
        %370 = vmatmul.mubr.f32.gmra.mxu0 %v240
        %v371 = vpop.f32.mrf.mxu0
        %v372 = vadd.f32 %v210, %v371
        %v373 = vpop.f32.mrf.mxu0
        %374 = vmatprep.mubr.f32.mxu0 0.0
        %375 = vmatmul.mubr.f32.gmra.mxu0 %v243
        %v376 = vpop.f32.mrf.mxu0
        %v377 = vadd.f32 %v210, %v376
        %v378 = vpop.f32.mrf.mxu0
        %379 = vmatprep.mubr.f32.mxu0 0.0
        %380 = vmatmul.mubr.f32.gmra.mxu0 %v246
        %v381 = vpop.f32.mrf.mxu0
        %v382 = vadd.f32 %v210, %v381
        %v383 = vpop.f32.mrf.mxu0
        %384 = vmatprep.mubr.f32.mxu0 0.0
        %385 = vmatmul.mubr.f32.gmra.mxu0 %v249
        %v386 = vpop.f32.mrf.mxu0
        %v387 = vadd.f32 %v210, %v386
        %v388 = vpop.f32.mrf.mxu0
        %389 = vmatprep.mubr.f32.mxu0 0.0
        %390 = vmatmul.mubr.f32.gmra.mxu0 %v252
        %v391 = vpop.f32.mrf.mxu0
        %v392 = vadd.f32 %v210, %v391
        %v393 = vpop.f32.mrf.mxu0
        %394 = vmatprep.mubr.f32.mxu0 0.0
        %395 = vmatmul.mubr.f32.gmra.mxu0 %v255
        %v396 = vpop.f32.mrf.mxu0
        %v397 = vadd.f32 %v210, %v396
        %v398 = vpop.f32.mrf.mxu0
        %399 = vmatprep.mubr.f32.mxu0 0.0
        %400 = vmatmul.mubr.f32.gmra.mxu0 %v258
        %v401 = vpop.f32.mrf.mxu0
        %v402 = vadd.f32 %v210, %v401
        %v403 = vpop.f32.mrf.mxu0
        %404 = vdwg.mxu0
        %vm405 = vcmp.gt.f32.partialorder %v327, 0.0
        %vm406 = vcmp.gt.f32.partialorder %v332, 0.0
        %vm407 = vcmp.gt.f32.partialorder %v337, 0.0
        %vm408 = vcmp.gt.f32.partialorder %v342, 0.0
        %vm409 = vcmp.gt.f32.partialorder %v347, 0.0
        %vm410 = vcmp.gt.f32.partialorder %v352, 0.0
        %vm411 = vcmp.gt.f32.partialorder %v357, 0.0
        %vm412 = vcmp.gt.f32.partialorder %v362, 0.0
        %vm413 = vcmp.gt.f32.partialorder %v367, 0.0
        %vm414 = vcmp.gt.f32.partialorder %v372, 0.0
        %vm415 = vcmp.gt.f32.partialorder %v377, 0.0
        %vm416 = vcmp.gt.f32.partialorder %v382, 0.0
        %vm417 = vcmp.gt.f32.partialorder %v387, 0.0
        %vm418 = vcmp.gt.f32.partialorder %v392, 0.0
        %vm419 = vcmp.gt.f32.partialorder %v397, 0.0
        %vm420 = vcmp.gt.f32.partialorder %v402, 0.0
        %v421 = vmul.f32 %v327, 0.2
        %v422 = vmul.f32 %v332, 0.2
        %v423 = vmul.f32 %v337, 0.2
        %v424 = vmul.f32 %v342, 0.2
        %v425 = vmul.f32 %v347, 0.2
        %v426 = vmul.f32 %v352, 0.2
        %v427 = vmul.f32 %v357, 0.2
        %v428 = vmul.f32 %v362, 0.2
        %v429 = vmul.f32 %v367, 0.2
        %v430 = vmul.f32 %v372, 0.2
        %v431 = vmul.f32 %v377, 0.2
        %v432 = vmul.f32 %v382, 0.2
        %v433 = vmul.f32 %v387, 0.2
        %v434 = vmul.f32 %v392, 0.2
        %v435 = vmul.f32 %v397, 0.2
        %v436 = vmul.f32 %v402, 0.2
        %v437 = vsel %vm405, %v327, %v421
        %v438 = vsel %vm406, %v332, %v422
        %v439 = vsel %vm407, %v337, %v423
        %v440 = vsel %vm408, %v342, %v424
        %v441 = vsel %vm409, %v347, %v425
        %v442 = vsel %vm410, %v352, %v426
        %v443 = vsel %vm411, %v357, %v427
        %v444 = vsel %vm412, %v362, %v428
        %v445 = vsel %vm413, %v367, %v429
        %v446 = vsel %vm414, %v372, %v430
        %v447 = vsel %vm415, %v377, %v431
        %v448 = vsel %vm416, %v382, %v432
        %v449 = vsel %vm417, %v387, %v433
        %v450 = vsel %vm418, %v392, %v434
        %v451 = vsel %vm419, %v397, %v435
        %v452 = vsel %vm420, %v402, %v436
        %v453 = vld [vmem:[#allocation2 + $0x8] sm:$0xff]
        %v454 = vld [vmem:[#allocation2 + $0x10] sm:$0xff]
        %v455 = vld [vmem:[#allocation2 + $0x18] sm:$0xff]
        %v456 = vld [vmem:[#allocation2 + $0x20] sm:$0xff]
        %v457 = vld [vmem:[%s2 + $0x1] sm:$0x1]
        %v458 = vlaneseq
        %v459 = vshrl.u32 %v458, 7
        %v460 = vsub.s32 0, %v459
        %v461 = vrot.slane %v457, %v460
        %vm462 = vcmask 261120
        %v464 = vsel %vm462, %v437, 0
        %v467 = vsel %vm462, %v438, 0
        %v470 = vsel %vm462, %v439, 0
        %v473 = vsel %vm462, %v440, 0
        %v476 = vsel %vm462, %v441, 0
        %v479 = vsel %vm462, %v442, 0
        %v482 = vsel %vm462, %v443, 0
        %v485 = vsel %vm462, %v444, 0
        %v488 = vsel %vm462, %v445, 0
        %v491 = vsel %vm462, %v446, 0
        %v494 = vsel %vm462, %v447, 0
        %v497 = vsel %vm462, %v448, 0
        %v500 = vsel %vm462, %v449, 0
        %v503 = vsel %vm462, %v450, 0
        %v506 = vsel %vm462, %v451, 0
        %v509 = vsel %vm462, %v452, 0
        %511 = vmatprep.subr.mxu0 0.0
        %512 = vmatpush1.msra.mxu0 0.0
        %513 = vmatprep.subr.mxu0 0.0
        %514 = vmatpush1.msra.mxu0 0.0
        %515 = vmatprep.subr.mxu0 0.0
        %516 = vmatpush1.msra.mxu0 0.0
        %517 = vmatprep.subr.mxu0 0.0
        %518 = vmatpush1.msra.mxu0 0.0
        %519 = vmatprep.subr.mxu0 0.0
        %520 = vmatpush1.msra.mxu0 0.0
        %521 = vmatprep.subr.mxu0 0.0
        %522 = vmatpush1.msra.mxu0 0.0
        %523 = vmatprep.subr.mxu0 0.0
        %524 = vmatpush1.msra.mxu0 0.0
        %525 = vmatprep.subr.mxu0 0.0
        %526 = vmatpush1.msra.mxu0 0.0
        %527 = vmatprep.subr.mxu0 0.0
        %528 = vmatpush1.msra.mxu0 0.0
        %529 = vmatprep.subr.mxu0 0.0
        %530 = vmatpush1.msra.mxu0 0.0
        %531 = vmatprep.subr.mxu0 0.0
        %532 = vmatpush1.msra.mxu0 0.0
        %533 = vmatprep.subr.mxu0 0.0
        %534 = vmatpush1.msra.mxu0 0.0
        %535 = vmatprep.subr.mxu0 0.0
        %536 = vmatpush1.msra.mxu0 %v456
        %537 = vmatprep.subr.mxu0 0.0
        %538 = vmatpush1.msra.mxu0 %v455
        %539 = vmatprep.subr.mxu0 0.0
        %540 = vmatpush1.msra.mxu0 %v454
        %541 = vmatprep.subr.mxu0 0.0
        %542 = vmatpush1.msra.mxu0 %v453
        %543 = vmatprep.subr.mxu0 0.0
        %544 = vmatpush2.msra.mxu0 0.0
        %545 = vmatprep.subr.mxu0 0.0
        %546 = vmatpush2.msra.mxu0 0.0
        %547 = vmatprep.subr.mxu0 0.0
        %548 = vmatpush2.msra.mxu0 0.0
        %549 = vmatprep.subr.mxu0 0.0
        %550 = vmatpush2.msra.mxu0 0.0
        %551 = vmatprep.subr.mxu0 0.0
        %552 = vmatpush2.msra.mxu0 0.0
        %553 = vmatprep.subr.mxu0 0.0
        %554 = vmatpush2.msra.mxu0 0.0
        %555 = vmatprep.subr.mxu0 0.0
        %556 = vmatpush2.msra.mxu0 0.0
        %557 = vmatprep.subr.mxu0 0.0
        %558 = vmatpush2.msra.mxu0 0.0
        %559 = vmatprep.subr.mxu0 0.0
        %560 = vmatpush2.msra.mxu0 0.0
        %561 = vmatprep.subr.mxu0 0.0
        %562 = vmatpush2.msra.mxu0 0.0
        %563 = vmatprep.subr.mxu0 0.0
        %564 = vmatpush2.msra.mxu0 0.0
        %565 = vmatprep.subr.mxu0 0.0
        %566 = vmatpush2.msra.mxu0 0.0
        %567 = vmatprep.subr.mxu0 0.0
        %568 = vmatpush2.msra.mxu0 0.0
        %569 = vmatprep.subr.mxu0 0.0
        %570 = vmatpush2.msra.mxu0 0.0
        %571 = vmatprep.subr.mxu0 0.0
        %572 = vmatpush2.msra.mxu0 0.0
        %573 = vmatprep.subr.mxu0 0.0
        %574 = vmatpush2.msra.mxu0 0.0
        %575 = vmatprep.mubr.f32.mxu0 0.0
        %576 = vmatmul.mubr.f32.gmra.mxu0 %v464
        %v577 = vpop.f32.mrf.mxu0
        %v578 = vadd.f32 %v461, %v577
        %v579 = vpop.f32.mrf.mxu0
        %580 = vmatprep.mubr.f32.mxu0 0.0
        %581 = vmatmul.mubr.f32.gmra.mxu0 %v467
        %v582 = vpop.f32.mrf.mxu0
        %v583 = vadd.f32 %v461, %v582
        %v584 = vpop.f32.mrf.mxu0
        %585 = vmatprep.mubr.f32.mxu0 0.0
        %586 = vmatmul.mubr.f32.gmra.mxu0 %v470
        %v587 = vpop.f32.mrf.mxu0
        %v588 = vadd.f32 %v461, %v587
        %v589 = vpop.f32.mrf.mxu0
        %590 = vmatprep.mubr.f32.mxu0 0.0
        %591 = vmatmul.mubr.f32.gmra.mxu0 %v473
        %v592 = vpop.f32.mrf.mxu0
        %v593 = vadd.f32 %v461, %v592
        %v594 = vpop.f32.mrf.mxu0
        %595 = vmatprep.mubr.f32.mxu0 0.0
        %596 = vmatmul.mubr.f32.gmra.mxu0 %v476
        %v597 = vpop.f32.mrf.mxu0
        %v598 = vadd.f32 %v461, %v597
        %v599 = vpop.f32.mrf.mxu0
        %600 = vmatprep.mubr.f32.mxu0 0.0
        %601 = vmatmul.mubr.f32.gmra.mxu0 %v479
        %v602 = vpop.f32.mrf.mxu0
        %v603 = vadd.f32 %v461, %v602
        %v604 = vpop.f32.mrf.mxu0
        %605 = vmatprep.mubr.f32.mxu0 0.0
        %606 = vmatmul.mubr.f32.gmra.mxu0 %v482
        %v607 = vpop.f32.mrf.mxu0
        %v608 = vadd.f32 %v461, %v607
        %v609 = vpop.f32.mrf.mxu0
        %610 = vmatprep.mubr.f32.mxu0 0.0
        %611 = vmatmul.mubr.f32.gmra.mxu0 %v485
        %v612 = vpop.f32.mrf.mxu0
        %v613 = vadd.f32 %v461, %v612
        %v614 = vpop.f32.mrf.mxu0
        %615 = vmatprep.mubr.f32.mxu0 0.0
        %616 = vmatmul.mubr.f32.gmra.mxu0 %v488
        %v617 = vpop.f32.mrf.mxu0
        %v618 = vadd.f32 %v461, %v617
        %v619 = vpop.f32.mrf.mxu0
        %620 = vmatprep.mubr.f32.mxu0 0.0
        %621 = vmatmul.mubr.f32.gmra.mxu0 %v491
        %v622 = vpop.f32.mrf.mxu0
        %v623 = vadd.f32 %v461, %v622
        %v624 = vpop.f32.mrf.mxu0
        %625 = vmatprep.mubr.f32.mxu0 0.0
        %626 = vmatmul.mubr.f32.gmra.mxu0 %v494
        %v627 = vpop.f32.mrf.mxu0
        %v628 = vadd.f32 %v461, %v627
        %v629 = vpop.f32.mrf.mxu0
        %630 = vmatprep.mubr.f32.mxu0 0.0
        %631 = vmatmul.mubr.f32.gmra.mxu0 %v497
        %v632 = vpop.f32.mrf.mxu0
        %v633 = vadd.f32 %v461, %v632
        %v634 = vpop.f32.mrf.mxu0
        %635 = vmatprep.mubr.f32.mxu0 0.0
        %636 = vmatmul.mubr.f32.gmra.mxu0 %v500
        %v637 = vpop.f32.mrf.mxu0
        %v638 = vadd.f32 %v461, %v637
        %v639 = vpop.f32.mrf.mxu0
        %640 = vmatprep.mubr.f32.mxu0 0.0
        %641 = vmatmul.mubr.f32.gmra.mxu0 %v503
        %v642 = vpop.f32.mrf.mxu0
        %v643 = vadd.f32 %v461, %v642
        %v644 = vpop.f32.mrf.mxu0
        %645 = vmatprep.mubr.f32.mxu0 0.0
        %646 = vmatmul.mubr.f32.gmra.mxu0 %v506
        %v647 = vpop.f32.mrf.mxu0
        %v648 = vadd.f32 %v461, %v647
        %v649 = vpop.f32.mrf.mxu0
        %650 = vmatprep.mubr.f32.mxu0 0.0
        %651 = vmatmul.mubr.f32.gmra.mxu0 %v509
        %v652 = vpop.f32.mrf.mxu0
        %v653 = vadd.f32 %v461, %v652
        %v654 = vpop.f32.mrf.mxu0
        %655 = vdwg.mxu0
        %vm656 = vcmp.gt.f32.partialorder %v578, 0.0
        %vm657 = vcmp.gt.f32.partialorder %v583, 0.0
        %vm658 = vcmp.gt.f32.partialorder %v588, 0.0
        %vm659 = vcmp.gt.f32.partialorder %v593, 0.0
        %vm660 = vcmp.gt.f32.partialorder %v598, 0.0
        %vm661 = vcmp.gt.f32.partialorder %v603, 0.0
        %vm662 = vcmp.gt.f32.partialorder %v608, 0.0
        %vm663 = vcmp.gt.f32.partialorder %v613, 0.0
        %vm664 = vcmp.gt.f32.partialorder %v618, 0.0
        %vm665 = vcmp.gt.f32.partialorder %v623, 0.0
        %vm666 = vcmp.gt.f32.partialorder %v628, 0.0
        %vm667 = vcmp.gt.f32.partialorder %v633, 0.0
        %vm668 = vcmp.gt.f32.partialorder %v638, 0.0
        %vm669 = vcmp.gt.f32.partialorder %v643, 0.0
        %vm670 = vcmp.gt.f32.partialorder %v648, 0.0
        %vm671 = vcmp.gt.f32.partialorder %v653, 0.0
        %v672 = vmul.f32 %v578, 0.2
        %v673 = vmul.f32 %v583, 0.2
        %v674 = vmul.f32 %v588, 0.2
        %v675 = vmul.f32 %v593, 0.2
        %v676 = vmul.f32 %v598, 0.2
        %v677 = vmul.f32 %v603, 0.2
        %v678 = vmul.f32 %v608, 0.2
        %v679 = vmul.f32 %v613, 0.2
        %v680 = vmul.f32 %v618, 0.2
        %v681 = vmul.f32 %v623, 0.2
        %v682 = vmul.f32 %v628, 0.2
        %v683 = vmul.f32 %v633, 0.2
        %v684 = vmul.f32 %v638, 0.2
        %v685 = vmul.f32 %v643, 0.2
        %v686 = vmul.f32 %v648, 0.2
        %v687 = vmul.f32 %v653, 0.2
        %v688 = vsel %vm656, %v578, %v672
        %v689 = vsel %vm657, %v583, %v673
        %v690 = vsel %vm658, %v588, %v674
        %v691 = vsel %vm659, %v593, %v675
        %v692 = vsel %vm660, %v598, %v676
        %v693 = vsel %vm661, %v603, %v677
        %v694 = vsel %vm662, %v608, %v678
        %v695 = vsel %vm663, %v613, %v679
        %v696 = vsel %vm664, %v618, %v680
        %v697 = vsel %vm665, %v623, %v681
        %v698 = vsel %vm666, %v628, %v682
        %v699 = vsel %vm667, %v633, %v683
        %v700 = vsel %vm668, %v638, %v684
        %v701 = vsel %vm669, %v643, %v685
        %v702 = vsel %vm670, %v648, %v686
        %v703 = vsel %vm671, %v653, %v687
        %v704 = vld [vmem:[#allocation2 + $0x28] sm:$0xff]
        %v705 = vld [vmem:[#allocation2 + $0x30] sm:$0xff]
        %v706 = vld [vmem:[#allocation2 + $0x38] sm:$0xff]
        %v707 = vld [vmem:[#allocation2 + $0x40] sm:$0xff]
        %v708 = vld [vmem:[#allocation2 + $0x48] sm:$0xff]
        %v709 = vld [vmem:[#allocation2 + $0x50] sm:$0xff]
        %v710 = vld [vmem:[#allocation2 + $0x58] sm:$0xff]
        %v711 = vld [vmem:[#allocation2 + $0x60] sm:$0xff]
        %v712 = vld [vmem:[%s2 + $0x2] sm:$0x1]
        %v713 = vlaneseq
        %v714 = vshrl.u32 %v713, 7
        %v715 = vsub.s32 0, %v714
        %v716 = vrot.slane %v712, %v715
        %733 = vrot.lane.b32.xlu0 %v688, 64
        %v734 = vpop.permute.xlu0 %733
        %735 = vrot.lane.b32.xlu0 %v689, 64
        %v736 = vpop.permute.xlu0 %735
        %737 = vrot.lane.b32.xlu0 %v690, 64
        %v738 = vpop.permute.xlu0 %737
        %739 = vrot.lane.b32.xlu0 %v691, 64
        %v740 = vpop.permute.xlu0 %739
        %741 = vrot.lane.b32.xlu0 %v692, 64
        %v742 = vpop.permute.xlu0 %741
        %743 = vrot.lane.b32.xlu0 %v693, 64
        %v744 = vpop.permute.xlu0 %743
        %745 = vrot.lane.b32.xlu0 %v694, 64
        %v746 = vpop.permute.xlu0 %745
        %747 = vrot.lane.b32.xlu0 %v695, 64
        %v748 = vpop.permute.xlu0 %747
        %749 = vrot.lane.b32.xlu0 %v696, 64
        %v750 = vpop.permute.xlu0 %749
        %751 = vrot.lane.b32.xlu0 %v697, 64
        %v752 = vpop.permute.xlu0 %751
        %753 = vrot.lane.b32.xlu0 %v698, 64
        %v754 = vpop.permute.xlu0 %753
        %755 = vrot.lane.b32.xlu0 %v699, 64
        %v756 = vpop.permute.xlu0 %755
        %757 = vrot.lane.b32.xlu0 %v700, 64
        %v758 = vpop.permute.xlu0 %757
        %759 = vrot.lane.b32.xlu0 %v701, 64
        %v760 = vpop.permute.xlu0 %759
        %761 = vrot.lane.b32.xlu0 %v702, 64
        %v762 = vpop.permute.xlu0 %761
        %763 = vrot.lane.b32.xlu0 %v703, 64
        %v764 = vpop.permute.xlu0 %763
        %vm765 = vcmask 523264
        %v766 = vsel %vm765, %v734, 0
        %v768 = vsel %vm765, %v736, 0
        %v770 = vsel %vm765, %v738, 0
        %v772 = vsel %vm765, %v740, 0
        %v774 = vsel %vm765, %v742, 0
        %v776 = vsel %vm765, %v744, 0
        %v778 = vsel %vm765, %v746, 0
        %v780 = vsel %vm765, %v748, 0
        %v782 = vsel %vm765, %v750, 0
        %v784 = vsel %vm765, %v752, 0
        %v786 = vsel %vm765, %v754, 0
        %v788 = vsel %vm765, %v756, 0
        %v790 = vsel %vm765, %v758, 0
        %v792 = vsel %vm765, %v760, 0
        %v794 = vsel %vm765, %v762, 0
        %v796 = vsel %vm765, %v764, 0
        %798 = vmatprep.subr.mxu0 0.0
        %799 = vmatpush1.msra.mxu0 0.0
        %800 = vmatprep.subr.mxu0 0.0
        %801 = vmatpush1.msra.mxu0 0.0
        %802 = vmatprep.subr.mxu0 0.0
        %803 = vmatpush1.msra.mxu0 0.0
        %804 = vmatprep.subr.mxu0 0.0
        %805 = vmatpush1.msra.mxu0 0.0
        %806 = vmatprep.subr.mxu0 0.0
        %807 = vmatpush1.msra.mxu0 0.0
        %808 = vmatprep.subr.mxu0 0.0
        %809 = vmatpush1.msra.mxu0 0.0
        %810 = vmatprep.subr.mxu0 0.0
        %811 = vmatpush1.msra.mxu0 0.0
        %812 = vmatprep.subr.mxu0 0.0
        %813 = vmatpush1.msra.mxu0 0.0
        %814 = vmatprep.subr.mxu0 0.0
        %815 = vmatpush1.msra.mxu0 %v711
        %816 = vmatprep.subr.mxu0 0.0
        %817 = vmatpush1.msra.mxu0 %v710
        %818 = vmatprep.subr.mxu0 0.0
        %819 = vmatpush1.msra.mxu0 %v709
        %820 = vmatprep.subr.mxu0 0.0
        %821 = vmatpush1.msra.mxu0 %v708
        %822 = vmatprep.subr.mxu0 0.0
        %823 = vmatpush1.msra.mxu0 %v707
        %824 = vmatprep.subr.mxu0 0.0
        %825 = vmatpush1.msra.mxu0 %v706
        %826 = vmatprep.subr.mxu0 0.0
        %827 = vmatpush1.msra.mxu0 %v705
        %828 = vmatprep.subr.mxu0 0.0
        %829 = vmatpush1.msra.mxu0 %v704
        %830 = vmatprep.subr.mxu0 0.0
        %831 = vmatpush2.msra.mxu0 0.0
        %832 = vmatprep.subr.mxu0 0.0
        %833 = vmatpush2.msra.mxu0 0.0
        %834 = vmatprep.subr.mxu0 0.0
        %835 = vmatpush2.msra.mxu0 0.0
        %836 = vmatprep.subr.mxu0 0.0
        %837 = vmatpush2.msra.mxu0 0.0
        %838 = vmatprep.subr.mxu0 0.0
        %839 = vmatpush2.msra.mxu0 0.0
        %840 = vmatprep.subr.mxu0 0.0
        %841 = vmatpush2.msra.mxu0 0.0
        %842 = vmatprep.subr.mxu0 0.0
        %843 = vmatpush2.msra.mxu0 0.0
        %844 = vmatprep.subr.mxu0 0.0
        %845 = vmatpush2.msra.mxu0 0.0
        %846 = vmatprep.subr.mxu0 0.0
        %847 = vmatpush2.msra.mxu0 0.0
        %848 = vmatprep.subr.mxu0 0.0
        %849 = vmatpush2.msra.mxu0 0.0
        %850 = vmatprep.subr.mxu0 0.0
        %851 = vmatpush2.msra.mxu0 0.0
        %852 = vmatprep.subr.mxu0 0.0
        %853 = vmatpush2.msra.mxu0 0.0
        %854 = vmatprep.subr.mxu0 0.0
        %855 = vmatpush2.msra.mxu0 0.0
        %856 = vmatprep.subr.mxu0 0.0
        %857 = vmatpush2.msra.mxu0 0.0
        %858 = vmatprep.subr.mxu0 0.0
        %859 = vmatpush2.msra.mxu0 0.0
        %860 = vmatprep.subr.mxu0 0.0
        %861 = vmatpush2.msra.mxu0 0.0
        %862 = vmatprep.mubr.f32.mxu0 0.0
        %863 = vmatmul.mubr.f32.gmra.mxu0 %v766
        %v864 = vpop.f32.mrf.mxu0
        %v865 = vadd.f32 %v716, %v864
        %v866 = vpop.f32.mrf.mxu0
        %867 = vmatprep.mubr.f32.mxu0 0.0
        %868 = vmatmul.mubr.f32.gmra.mxu0 %v768
        %v869 = vpop.f32.mrf.mxu0
        %v870 = vadd.f32 %v716, %v869
        %v871 = vpop.f32.mrf.mxu0
        %872 = vmatprep.mubr.f32.mxu0 0.0
        %873 = vmatmul.mubr.f32.gmra.mxu0 %v770
        %v874 = vpop.f32.mrf.mxu0
        %v875 = vadd.f32 %v716, %v874
        %v876 = vpop.f32.mrf.mxu0
        %877 = vmatprep.mubr.f32.mxu0 0.0
        %878 = vmatmul.mubr.f32.gmra.mxu0 %v772
        %v879 = vpop.f32.mrf.mxu0
        %v880 = vadd.f32 %v716, %v879
        %v881 = vpop.f32.mrf.mxu0
        %882 = vmatprep.mubr.f32.mxu0 0.0
        %883 = vmatmul.mubr.f32.gmra.mxu0 %v774
        %v884 = vpop.f32.mrf.mxu0
        %v885 = vadd.f32 %v716, %v884
        %v886 = vpop.f32.mrf.mxu0
        %887 = vmatprep.mubr.f32.mxu0 0.0
        %888 = vmatmul.mubr.f32.gmra.mxu0 %v776
        %v889 = vpop.f32.mrf.mxu0
        %v890 = vadd.f32 %v716, %v889
        %v891 = vpop.f32.mrf.mxu0
        %892 = vmatprep.mubr.f32.mxu0 0.0
        %893 = vmatmul.mubr.f32.gmra.mxu0 %v778
        %v894 = vpop.f32.mrf.mxu0
        %v895 = vadd.f32 %v716, %v894
        %v896 = vpop.f32.mrf.mxu0
        %897 = vmatprep.mubr.f32.mxu0 0.0
        %898 = vmatmul.mubr.f32.gmra.mxu0 %v780
        %v899 = vpop.f32.mrf.mxu0
        %v900 = vadd.f32 %v716, %v899
        %v901 = vpop.f32.mrf.mxu0
        %902 = vmatprep.mubr.f32.mxu0 0.0
        %903 = vmatmul.mubr.f32.gmra.mxu0 %v782
        %v904 = vpop.f32.mrf.mxu0
        %v905 = vadd.f32 %v716, %v904
        %v906 = vpop.f32.mrf.mxu0
        %907 = vmatprep.mubr.f32.mxu0 0.0
        %908 = vmatmul.mubr.f32.gmra.mxu0 %v784
        %v909 = vpop.f32.mrf.mxu0
        %v910 = vadd.f32 %v716, %v909
        %v911 = vpop.f32.mrf.mxu0
        %912 = vmatprep.mubr.f32.mxu0 0.0
        %913 = vmatmul.mubr.f32.gmra.mxu0 %v786
        %v914 = vpop.f32.mrf.mxu0
        %v915 = vadd.f32 %v716, %v914
        %v916 = vpop.f32.mrf.mxu0
        %917 = vmatprep.mubr.f32.mxu0 0.0
        %918 = vmatmul.mubr.f32.gmra.mxu0 %v788
        %v919 = vpop.f32.mrf.mxu0
        %v920 = vadd.f32 %v716, %v919
        %v921 = vpop.f32.mrf.mxu0
        %922 = vmatprep.mubr.f32.mxu0 0.0
        %923 = vmatmul.mubr.f32.gmra.mxu0 %v790
        %v924 = vpop.f32.mrf.mxu0
        %v925 = vadd.f32 %v716, %v924
        %v926 = vpop.f32.mrf.mxu0
        %927 = vmatprep.mubr.f32.mxu0 0.0
        %928 = vmatmul.mubr.f32.gmra.mxu0 %v792
        %v929 = vpop.f32.mrf.mxu0
        %v930 = vadd.f32 %v716, %v929
        %v931 = vpop.f32.mrf.mxu0
        %932 = vmatprep.mubr.f32.mxu0 0.0
        %933 = vmatmul.mubr.f32.gmra.mxu0 %v794
        %v934 = vpop.f32.mrf.mxu0
        %v935 = vadd.f32 %v716, %v934
        %v936 = vpop.f32.mrf.mxu0
        %937 = vmatprep.mubr.f32.mxu0 0.0
        %938 = vmatmul.mubr.f32.gmra.mxu0 %v796
        %v939 = vpop.f32.mrf.mxu0
        %v940 = vadd.f32 %v716, %v939
        %v941 = vpop.f32.mrf.mxu0
        %942 = vdwg.mxu0
        %v943 = vadd.f32 %v865, %v578
        %v944 = vadd.f32 %v870, %v583
        %v945 = vadd.f32 %v875, %v588
        %v946 = vadd.f32 %v880, %v593
        %v947 = vadd.f32 %v885, %v598
        %v948 = vadd.f32 %v890, %v603
        %v949 = vadd.f32 %v895, %v608
        %v950 = vadd.f32 %v900, %v613
        %v951 = vadd.f32 %v905, %v618
        %v952 = vadd.f32 %v910, %v623
        %v953 = vadd.f32 %v915, %v628
        %v954 = vadd.f32 %v920, %v633
        %v955 = vadd.f32 %v925, %v638
        %v956 = vadd.f32 %v930, %v643
        %v957 = vadd.f32 %v935, %v648
        %v958 = vadd.f32 %v940, %v653
        %vm959 = vcmp.gt.f32.partialorder %v943, 0.0
        %vm960 = vcmp.gt.f32.partialorder %v944, 0.0
        %vm961 = vcmp.gt.f32.partialorder %v945, 0.0
        %vm962 = vcmp.gt.f32.partialorder %v946, 0.0
        %vm963 = vcmp.gt.f32.partialorder %v947, 0.0
        %vm964 = vcmp.gt.f32.partialorder %v948, 0.0
        %vm965 = vcmp.gt.f32.partialorder %v949, 0.0
        %vm966 = vcmp.gt.f32.partialorder %v950, 0.0
        %vm967 = vcmp.gt.f32.partialorder %v951, 0.0
        %vm968 = vcmp.gt.f32.partialorder %v952, 0.0
        %vm969 = vcmp.gt.f32.partialorder %v953, 0.0
        %vm970 = vcmp.gt.f32.partialorder %v954, 0.0
        %vm971 = vcmp.gt.f32.partialorder %v955, 0.0
        %vm972 = vcmp.gt.f32.partialorder %v956, 0.0
        %vm973 = vcmp.gt.f32.partialorder %v957, 0.0
        %vm974 = vcmp.gt.f32.partialorder %v958, 0.0
        %v975 = vmul.f32 %v943, 0.2
        %v976 = vmul.f32 %v944, 0.2
        %v977 = vmul.f32 %v945, 0.2
        %v978 = vmul.f32 %v946, 0.2
        %v979 = vmul.f32 %v947, 0.2
        %v980 = vmul.f32 %v948, 0.2
        %v981 = vmul.f32 %v949, 0.2
        %v982 = vmul.f32 %v950, 0.2
        %v983 = vmul.f32 %v951, 0.2
        %v984 = vmul.f32 %v952, 0.2
        %v985 = vmul.f32 %v953, 0.2
        %v986 = vmul.f32 %v954, 0.2
        %v987 = vmul.f32 %v955, 0.2
        %v988 = vmul.f32 %v956, 0.2
        %v989 = vmul.f32 %v957, 0.2
        %v990 = vmul.f32 %v958, 0.2
        %v991 = vsel %vm959, %v943, %v975
        %v992 = vsel %vm960, %v944, %v976
        %v993 = vsel %vm961, %v945, %v977
        %v994 = vsel %vm962, %v946, %v978
        %v995 = vsel %vm963, %v947, %v979
        %v996 = vsel %vm964, %v948, %v980
        %v997 = vsel %vm965, %v949, %v981
        %v998 = vsel %vm966, %v950, %v982
        %v999 = vsel %vm967, %v951, %v983
        %v1000 = vsel %vm968, %v952, %v984
        %v1001 = vsel %vm969, %v953, %v985
        %v1002 = vsel %vm970, %v954, %v986
        %v1003 = vsel %vm971, %v955, %v987
        %v1004 = vsel %vm972, %v956, %v988
        %v1005 = vsel %vm973, %v957, %v989
        %v1006 = vsel %vm974, %v958, %v990
        %v1007 = vld [vmem:[#allocation2 + $0x68] sm:$0xff]
        %v1008 = vld [vmem:[#allocation2 + $0x70] sm:$0xff]
        %v1009 = vld [vmem:[#allocation2 + $0x78] sm:$0xff]
        %v1010 = vld [vmem:[#allocation2 + $0x80] sm:$0xff]
        %v1011 = vld [vmem:[#allocation2 + $0x88] sm:$0xff]
        %v1012 = vld [vmem:[#allocation2 + $0x90] sm:$0xff]
        %v1013 = vld [vmem:[#allocation2 + $0x98] sm:$0xff]
        %v1014 = vld [vmem:[#allocation2 + $0xa0] sm:$0xff]
        %v1015 = vld [vmem:[%s2 + $0x3] sm:$0x1]
        %v1016 = vlaneseq
        %v1017 = vshrl.u32 %v1016, 7
        %v1018 = vsub.s32 0, %v1017
        %v1019 = vrot.slane %v1015, %v1018
        %v1021 = vsel %vm765, %v991, 0
        %v1024 = vsel %vm765, %v992, 0
        %v1027 = vsel %vm765, %v993, 0
        %v1030 = vsel %vm765, %v994, 0
        %v1033 = vsel %vm765, %v995, 0
        %v1036 = vsel %vm765, %v996, 0
        %v1039 = vsel %vm765, %v997, 0
        %v1042 = vsel %vm765, %v998, 0
        %v1045 = vsel %vm765, %v999, 0
        %v1048 = vsel %vm765, %v1000, 0
        %v1051 = vsel %vm765, %v1001, 0
        %v1054 = vsel %vm765, %v1002, 0
        %v1057 = vsel %vm765, %v1003, 0
        %v1060 = vsel %vm765, %v1004, 0
        %v1063 = vsel %vm765, %v1005, 0
        %v1066 = vsel %vm765, %v1006, 0
        %1068 = vmatprep.subr.mxu0 0.0
        %1069 = vmatpush1.msra.mxu0 0.0
        %1070 = vmatprep.subr.mxu0 0.0
        %1071 = vmatpush1.msra.mxu0 0.0
        %1072 = vmatprep.subr.mxu0 0.0
        %1073 = vmatpush1.msra.mxu0 0.0
        %1074 = vmatprep.subr.mxu0 0.0
        %1075 = vmatpush1.msra.mxu0 0.0
        %1076 = vmatprep.subr.mxu0 0.0
        %1077 = vmatpush1.msra.mxu0 0.0
        %1078 = vmatprep.subr.mxu0 0.0
        %1079 = vmatpush1.msra.mxu0 0.0
        %1080 = vmatprep.subr.mxu0 0.0
        %1081 = vmatpush1.msra.mxu0 0.0
        %1082 = vmatprep.subr.mxu0 0.0
        %1083 = vmatpush1.msra.mxu0 0.0
        %1084 = vmatprep.subr.mxu0 0.0
        %1085 = vmatpush1.msra.mxu0 %v1014
        %1086 = vmatprep.subr.mxu0 0.0
        %1087 = vmatpush1.msra.mxu0 %v1013
        %1088 = vmatprep.subr.mxu0 0.0
        %1089 = vmatpush1.msra.mxu0 %v1012
        %1090 = vmatprep.subr.mxu0 0.0
        %1091 = vmatpush1.msra.mxu0 %v1011
        %1092 = vmatprep.subr.mxu0 0.0
        %1093 = vmatpush1.msra.mxu0 %v1010
        %1094 = vmatprep.subr.mxu0 0.0
        %1095 = vmatpush1.msra.mxu0 %v1009
        %1096 = vmatprep.subr.mxu0 0.0
        %1097 = vmatpush1.msra.mxu0 %v1008
        %1098 = vmatprep.subr.mxu0 0.0
        %1099 = vmatpush1.msra.mxu0 %v1007
        %1100 = vmatprep.subr.mxu0 0.0
        %1101 = vmatpush2.msra.mxu0 0.0
        %1102 = vmatprep.subr.mxu0 0.0
        %1103 = vmatpush2.msra.mxu0 0.0
        %1104 = vmatprep.subr.mxu0 0.0
        %1105 = vmatpush2.msra.mxu0 0.0
        %1106 = vmatprep.subr.mxu0 0.0
        %1107 = vmatpush2.msra.mxu0 0.0
        %1108 = vmatprep.subr.mxu0 0.0
        %1109 = vmatpush2.msra.mxu0 0.0
        %1110 = vmatprep.subr.mxu0 0.0
        %1111 = vmatpush2.msra.mxu0 0.0
        %1112 = vmatprep.subr.mxu0 0.0
        %1113 = vmatpush2.msra.mxu0 0.0
        %1114 = vmatprep.subr.mxu0 0.0
        %1115 = vmatpush2.msra.mxu0 0.0
        %1116 = vmatprep.subr.mxu0 0.0
        %1117 = vmatpush2.msra.mxu0 0.0
        %1118 = vmatprep.subr.mxu0 0.0
        %1119 = vmatpush2.msra.mxu0 0.0
        %1120 = vmatprep.subr.mxu0 0.0
        %1121 = vmatpush2.msra.mxu0 0.0
        %1122 = vmatprep.subr.mxu0 0.0
        %1123 = vmatpush2.msra.mxu0 0.0
        %1124 = vmatprep.subr.mxu0 0.0
        %1125 = vmatpush2.msra.mxu0 0.0
        %1126 = vmatprep.subr.mxu0 0.0
        %1127 = vmatpush2.msra.mxu0 0.0
        %1128 = vmatprep.subr.mxu0 0.0
        %1129 = vmatpush2.msra.mxu0 0.0
        %1130 = vmatprep.subr.mxu0 0.0
        %1131 = vmatpush2.msra.mxu0 0.0
        %1132 = vmatprep.mubr.f32.mxu0 0.0
        %1133 = vmatmul.mubr.f32.gmra.mxu0 %v1021
        %v1134 = vpop.f32.mrf.mxu0
        %v1135 = vadd.f32 %v1019, %v1134
        %v1136 = vpop.f32.mrf.mxu0
        %1137 = vmatprep.mubr.f32.mxu0 0.0
        %1138 = vmatmul.mubr.f32.gmra.mxu0 %v1024
        %v1139 = vpop.f32.mrf.mxu0
        %v1140 = vadd.f32 %v1019, %v1139
        %v1141 = vpop.f32.mrf.mxu0
        %1142 = vmatprep.mubr.f32.mxu0 0.0
        %1143 = vmatmul.mubr.f32.gmra.mxu0 %v1027
        %v1144 = vpop.f32.mrf.mxu0
        %v1145 = vadd.f32 %v1019, %v1144
        %v1146 = vpop.f32.mrf.mxu0
        %1147 = vmatprep.mubr.f32.mxu0 0.0
        %1148 = vmatmul.mubr.f32.gmra.mxu0 %v1030
        %v1149 = vpop.f32.mrf.mxu0
        %v1150 = vadd.f32 %v1019, %v1149
        %v1151 = vpop.f32.mrf.mxu0
        %1152 = vmatprep.mubr.f32.mxu0 0.0
        %1153 = vmatmul.mubr.f32.gmra.mxu0 %v1033
        %v1154 = vpop.f32.mrf.mxu0
        %v1155 = vadd.f32 %v1019, %v1154
        %v1156 = vpop.f32.mrf.mxu0
        %1157 = vmatprep.mubr.f32.mxu0 0.0
        %1158 = vmatmul.mubr.f32.gmra.mxu0 %v1036
        %v1159 = vpop.f32.mrf.mxu0
        %v1160 = vadd.f32 %v1019, %v1159
        %v1161 = vpop.f32.mrf.mxu0
        %1162 = vmatprep.mubr.f32.mxu0 0.0
        %1163 = vmatmul.mubr.f32.gmra.mxu0 %v1039
        %v1164 = vpop.f32.mrf.mxu0
        %v1165 = vadd.f32 %v1019, %v1164
        %v1166 = vpop.f32.mrf.mxu0
        %1167 = vmatprep.mubr.f32.mxu0 0.0
        %1168 = vmatmul.mubr.f32.gmra.mxu0 %v1042
        %v1169 = vpop.f32.mrf.mxu0
        %v1170 = vadd.f32 %v1019, %v1169
        %v1171 = vpop.f32.mrf.mxu0
        %1172 = vmatprep.mubr.f32.mxu0 0.0
        %1173 = vmatmul.mubr.f32.gmra.mxu0 %v1045
        %v1174 = vpop.f32.mrf.mxu0
        %v1175 = vadd.f32 %v1019, %v1174
        %v1176 = vpop.f32.mrf.mxu0
        %1177 = vmatprep.mubr.f32.mxu0 0.0
        %1178 = vmatmul.mubr.f32.gmra.mxu0 %v1048
        %v1179 = vpop.f32.mrf.mxu0
        %v1180 = vadd.f32 %v1019, %v1179
        %v1181 = vpop.f32.mrf.mxu0
        %1182 = vmatprep.mubr.f32.mxu0 0.0
        %1183 = vmatmul.mubr.f32.gmra.mxu0 %v1051
        %v1184 = vpop.f32.mrf.mxu0
        %v1185 = vadd.f32 %v1019, %v1184
        %v1186 = vpop.f32.mrf.mxu0
        %1187 = vmatprep.mubr.f32.mxu0 0.0
        %1188 = vmatmul.mubr.f32.gmra.mxu0 %v1054
        %v1189 = vpop.f32.mrf.mxu0
        %v1190 = vadd.f32 %v1019, %v1189
        %v1191 = vpop.f32.mrf.mxu0
        %1192 = vmatprep.mubr.f32.mxu0 0.0
        %1193 = vmatmul.mubr.f32.gmra.mxu0 %v1057
        %v1194 = vpop.f32.mrf.mxu0
        %v1195 = vadd.f32 %v1019, %v1194
        %v1196 = vpop.f32.mrf.mxu0
        %1197 = vmatprep.mubr.f32.mxu0 0.0
        %1198 = vmatmul.mubr.f32.gmra.mxu0 %v1060
        %v1199 = vpop.f32.mrf.mxu0
        %v1200 = vadd.f32 %v1019, %v1199
        %v1201 = vpop.f32.mrf.mxu0
        %1202 = vmatprep.mubr.f32.mxu0 0.0
        %1203 = vmatmul.mubr.f32.gmra.mxu0 %v1063
        %v1204 = vpop.f32.mrf.mxu0
        %v1205 = vadd.f32 %v1019, %v1204
        %v1206 = vpop.f32.mrf.mxu0
        %1207 = vmatprep.mubr.f32.mxu0 0.0
        %1208 = vmatmul.mubr.f32.gmra.mxu0 %v1066
        %v1209 = vpop.f32.mrf.mxu0
        %v1210 = vadd.f32 %v1019, %v1209
        %v1211 = vpop.f32.mrf.mxu0
        %1212 = vdwg.mxu0
        %vm1213 = vcmp.gt.f32.partialorder %v1135, 0.0
        %vm1214 = vcmp.gt.f32.partialorder %v1140, 0.0
        %vm1215 = vcmp.gt.f32.partialorder %v1145, 0.0
        %vm1216 = vcmp.gt.f32.partialorder %v1150, 0.0
        %vm1217 = vcmp.gt.f32.partialorder %v1155, 0.0
        %vm1218 = vcmp.gt.f32.partialorder %v1160, 0.0
        %vm1219 = vcmp.gt.f32.partialorder %v1165, 0.0
        %vm1220 = vcmp.gt.f32.partialorder %v1170, 0.0
        %vm1221 = vcmp.gt.f32.partialorder %v1175, 0.0
        %vm1222 = vcmp.gt.f32.partialorder %v1180, 0.0
        %vm1223 = vcmp.gt.f32.partialorder %v1185, 0.0
        %vm1224 = vcmp.gt.f32.partialorder %v1190, 0.0
        %vm1225 = vcmp.gt.f32.partialorder %v1195, 0.0
        %vm1226 = vcmp.gt.f32.partialorder %v1200, 0.0
        %vm1227 = vcmp.gt.f32.partialorder %v1205, 0.0
        %vm1228 = vcmp.gt.f32.partialorder %v1210, 0.0
        %v1229 = vmul.f32 %v1135, 0.2
        %v1230 = vmul.f32 %v1140, 0.2
        %v1231 = vmul.f32 %v1145, 0.2
        %v1232 = vmul.f32 %v1150, 0.2
        %v1233 = vmul.f32 %v1155, 0.2
        %v1234 = vmul.f32 %v1160, 0.2
        %v1235 = vmul.f32 %v1165, 0.2
        %v1236 = vmul.f32 %v1170, 0.2
        %v1237 = vmul.f32 %v1175, 0.2
        %v1238 = vmul.f32 %v1180, 0.2
        %v1239 = vmul.f32 %v1185, 0.2
        %v1240 = vmul.f32 %v1190, 0.2
        %v1241 = vmul.f32 %v1195, 0.2
        %v1242 = vmul.f32 %v1200, 0.2
        %v1243 = vmul.f32 %v1205, 0.2
        %v1244 = vmul.f32 %v1210, 0.2
        %v1245 = vsel %vm1213, %v1135, %v1229
        %v1246 = vsel %vm1214, %v1140, %v1230
        %v1247 = vsel %vm1215, %v1145, %v1231
        %v1248 = vsel %vm1216, %v1150, %v1232
        %v1249 = vsel %vm1217, %v1155, %v1233
        %v1250 = vsel %vm1218, %v1160, %v1234
        %v1251 = vsel %vm1219, %v1165, %v1235
        %v1252 = vsel %vm1220, %v1170, %v1236
        %v1253 = vsel %vm1221, %v1175, %v1237
        %v1254 = vsel %vm1222, %v1180, %v1238
        %v1255 = vsel %vm1223, %v1185, %v1239
        %v1256 = vsel %vm1224, %v1190, %v1240
        %v1257 = vsel %vm1225, %v1195, %v1241
        %v1258 = vsel %vm1226, %v1200, %v1242
        %v1259 = vsel %vm1227, %v1205, %v1243
        %v1260 = vsel %vm1228, %v1210, %v1244
        %v1261 = vld [vmem:[#allocation2 + $0xa8] sm:$0xff]
        %v1262 = vld [vmem:[#allocation2 + $0xb0] sm:$0xff]
        %v1263 = vld [vmem:[#allocation2 + $0xb8] sm:$0xff]
        %v1264 = vld [vmem:[#allocation2 + $0xc0] sm:$0xff]
        %v1265 = vld [vmem:[%s2 + $0x4] sm:$0x1]
        %v1266 = vlaneseq
        %v1267 = vshrl.u32 %v1266, 7
        %v1268 = vsub.s32 0, %v1267
        %v1269 = vrot.slane %v1265, %v1268
        %1286 = vrot.lane.b32.xlu0 %v1245, 96
        %v1287 = vpop.permute.xlu0 %1286
        %1288 = vrot.lane.b32.xlu0 %v1246, 96
        %v1289 = vpop.permute.xlu0 %1288
        %1290 = vrot.lane.b32.xlu0 %v1247, 96
        %v1291 = vpop.permute.xlu0 %1290
        %1292 = vrot.lane.b32.xlu0 %v1248, 96
        %v1293 = vpop.permute.xlu0 %1292
        %1294 = vrot.lane.b32.xlu0 %v1249, 96
        %v1295 = vpop.permute.xlu0 %1294
        %1296 = vrot.lane.b32.xlu0 %v1250, 96
        %v1297 = vpop.permute.xlu0 %1296
        %1298 = vrot.lane.b32.xlu0 %v1251, 96
        %v1299 = vpop.permute.xlu0 %1298
        %1300 = vrot.lane.b32.xlu0 %v1252, 96
        %v1301 = vpop.permute.xlu0 %1300
        %1302 = vrot.lane.b32.xlu0 %v1253, 96
        %v1303 = vpop.permute.xlu0 %1302
        %1304 = vrot.lane.b32.xlu0 %v1254, 96
        %v1305 = vpop.permute.xlu0 %1304
        %1306 = vrot.lane.b32.xlu0 %v1255, 96
        %v1307 = vpop.permute.xlu0 %1306
        %1308 = vrot.lane.b32.xlu0 %v1256, 96
        %v1309 = vpop.permute.xlu0 %1308
        %1310 = vrot.lane.b32.xlu0 %v1257, 96
        %v1311 = vpop.permute.xlu0 %1310
        %1312 = vrot.lane.b32.xlu0 %v1258, 96
        %v1313 = vpop.permute.xlu0 %1312
        %1314 = vrot.lane.b32.xlu0 %v1259, 96
        %v1315 = vpop.permute.xlu0 %1314
        %1316 = vrot.lane.b32.xlu0 %v1260, 96
        %v1317 = vpop.permute.xlu0 %1316
        %v1318 = vsel %vm462, %v1287, 0
        %v1320 = vsel %vm462, %v1289, 0
        %v1322 = vsel %vm462, %v1291, 0
        %v1324 = vsel %vm462, %v1293, 0
        %v1326 = vsel %vm462, %v1295, 0
        %v1328 = vsel %vm462, %v1297, 0
        %v1330 = vsel %vm462, %v1299, 0
        %v1332 = vsel %vm462, %v1301, 0
        %v1334 = vsel %vm462, %v1303, 0
        %v1336 = vsel %vm462, %v1305, 0
        %v1338 = vsel %vm462, %v1307, 0
        %v1340 = vsel %vm462, %v1309, 0
        %v1342 = vsel %vm462, %v1311, 0
        %v1344 = vsel %vm462, %v1313, 0
        %v1346 = vsel %vm462, %v1315, 0
        %v1348 = vsel %vm462, %v1317, 0
        %1350 = vmatprep.subr.mxu0 0.0
        %1351 = vmatpush1.msra.mxu0 0.0
        %1352 = vmatprep.subr.mxu0 0.0
        %1353 = vmatpush1.msra.mxu0 0.0
        %1354 = vmatprep.subr.mxu0 0.0
        %1355 = vmatpush1.msra.mxu0 0.0
        %1356 = vmatprep.subr.mxu0 0.0
        %1357 = vmatpush1.msra.mxu0 0.0
        %1358 = vmatprep.subr.mxu0 0.0
        %1359 = vmatpush1.msra.mxu0 0.0
        %1360 = vmatprep.subr.mxu0 0.0
        %1361 = vmatpush1.msra.mxu0 0.0
        %1362 = vmatprep.subr.mxu0 0.0
        %1363 = vmatpush1.msra.mxu0 0.0
        %1364 = vmatprep.subr.mxu0 0.0
        %1365 = vmatpush1.msra.mxu0 0.0
        %1366 = vmatprep.subr.mxu0 0.0
        %1367 = vmatpush1.msra.mxu0 0.0
        %1368 = vmatprep.subr.mxu0 0.0
        %1369 = vmatpush1.msra.mxu0 0.0
        %1370 = vmatprep.subr.mxu0 0.0
        %1371 = vmatpush1.msra.mxu0 0.0
        %1372 = vmatprep.subr.mxu0 0.0
        %1373 = vmatpush1.msra.mxu0 0.0
        %1374 = vmatprep.subr.mxu0 0.0
        %1375 = vmatpush1.msra.mxu0 %v1264
        %1376 = vmatprep.subr.mxu0 0.0
        %1377 = vmatpush1.msra.mxu0 %v1263
        %1378 = vmatprep.subr.mxu0 0.0
        %1379 = vmatpush1.msra.mxu0 %v1262
        %1380 = vmatprep.subr.mxu0 0.0
        %1381 = vmatpush1.msra.mxu0 %v1261
        %1382 = vmatprep.subr.mxu0 0.0
        %1383 = vmatpush2.msra.mxu0 0.0
        %1384 = vmatprep.subr.mxu0 0.0
        %1385 = vmatpush2.msra.mxu0 0.0
        %1386 = vmatprep.subr.mxu0 0.0
        %1387 = vmatpush2.msra.mxu0 0.0
        %1388 = vmatprep.subr.mxu0 0.0
        %1389 = vmatpush2.msra.mxu0 0.0
        %1390 = vmatprep.subr.mxu0 0.0
        %1391 = vmatpush2.msra.mxu0 0.0
        %1392 = vmatprep.subr.mxu0 0.0
        %1393 = vmatpush2.msra.mxu0 0.0
        %1394 = vmatprep.subr.mxu0 0.0
        %1395 = vmatpush2.msra.mxu0 0.0
        %1396 = vmatprep.subr.mxu0 0.0
        %1397 = vmatpush2.msra.mxu0 0.0
        %1398 = vmatprep.subr.mxu0 0.0
        %1399 = vmatpush2.msra.mxu0 0.0
        %1400 = vmatprep.subr.mxu0 0.0
        %1401 = vmatpush2.msra.mxu0 0.0
        %1402 = vmatprep.subr.mxu0 0.0
        %1403 = vmatpush2.msra.mxu0 0.0
        %1404 = vmatprep.subr.mxu0 0.0
        %1405 = vmatpush2.msra.mxu0 0.0
        %1406 = vmatprep.subr.mxu0 0.0
        %1407 = vmatpush2.msra.mxu0 0.0
        %1408 = vmatprep.subr.mxu0 0.0
        %1409 = vmatpush2.msra.mxu0 0.0
        %1410 = vmatprep.subr.mxu0 0.0
        %1411 = vmatpush2.msra.mxu0 0.0
        %1412 = vmatprep.subr.mxu0 0.0
        %1413 = vmatpush2.msra.mxu0 0.0
        %1414 = vmatprep.mubr.f32.mxu0 0.0
        %1415 = vmatmul.mubr.f32.gmra.mxu0 %v1318
        %v1416 = vpop.f32.mrf.mxu0
        %v1417 = vadd.f32 %v1269, %v1416
        %v1418 = vpop.f32.mrf.mxu0
        %1419 = vmatprep.mubr.f32.mxu0 0.0
        %1420 = vmatmul.mubr.f32.gmra.mxu0 %v1320
        %v1421 = vpop.f32.mrf.mxu0
        %v1422 = vadd.f32 %v1269, %v1421
        %v1423 = vpop.f32.mrf.mxu0
        %1424 = vmatprep.mubr.f32.mxu0 0.0
        %1425 = vmatmul.mubr.f32.gmra.mxu0 %v1322
        %v1426 = vpop.f32.mrf.mxu0
        %v1427 = vadd.f32 %v1269, %v1426
        %v1428 = vpop.f32.mrf.mxu0
        %1429 = vmatprep.mubr.f32.mxu0 0.0
        %1430 = vmatmul.mubr.f32.gmra.mxu0 %v1324
        %v1431 = vpop.f32.mrf.mxu0
        %v1432 = vadd.f32 %v1269, %v1431
        %v1433 = vpop.f32.mrf.mxu0
        %1434 = vmatprep.mubr.f32.mxu0 0.0
        %1435 = vmatmul.mubr.f32.gmra.mxu0 %v1326
        %v1436 = vpop.f32.mrf.mxu0
        %v1437 = vadd.f32 %v1269, %v1436
        %v1438 = vpop.f32.mrf.mxu0
        %1439 = vmatprep.mubr.f32.mxu0 0.0
        %1440 = vmatmul.mubr.f32.gmra.mxu0 %v1328
        %v1441 = vpop.f32.mrf.mxu0
        %v1442 = vadd.f32 %v1269, %v1441
        %v1443 = vpop.f32.mrf.mxu0
        %1444 = vmatprep.mubr.f32.mxu0 0.0
        %1445 = vmatmul.mubr.f32.gmra.mxu0 %v1330
        %v1446 = vpop.f32.mrf.mxu0
        %v1447 = vadd.f32 %v1269, %v1446
        %v1448 = vpop.f32.mrf.mxu0
        %1449 = vmatprep.mubr.f32.mxu0 0.0
        %1450 = vmatmul.mubr.f32.gmra.mxu0 %v1332
        %v1451 = vpop.f32.mrf.mxu0
        %v1452 = vadd.f32 %v1269, %v1451
        %v1453 = vpop.f32.mrf.mxu0
        %1454 = vmatprep.mubr.f32.mxu0 0.0
        %1455 = vmatmul.mubr.f32.gmra.mxu0 %v1334
        %v1456 = vpop.f32.mrf.mxu0
        %v1457 = vadd.f32 %v1269, %v1456
        %v1458 = vpop.f32.mrf.mxu0
        %1459 = vmatprep.mubr.f32.mxu0 0.0
        %1460 = vmatmul.mubr.f32.gmra.mxu0 %v1336
        %v1461 = vpop.f32.mrf.mxu0
        %v1462 = vadd.f32 %v1269, %v1461
        %v1463 = vpop.f32.mrf.mxu0
        %1464 = vmatprep.mubr.f32.mxu0 0.0
        %1465 = vmatmul.mubr.f32.gmra.mxu0 %v1338
        %v1466 = vpop.f32.mrf.mxu0
        %v1467 = vadd.f32 %v1269, %v1466
        %v1468 = vpop.f32.mrf.mxu0
        %1469 = vmatprep.mubr.f32.mxu0 0.0
        %1470 = vmatmul.mubr.f32.gmra.mxu0 %v1340
        %v1471 = vpop.f32.mrf.mxu0
        %v1472 = vadd.f32 %v1269, %v1471
        %v1473 = vpop.f32.mrf.mxu0
        %1474 = vmatprep.mubr.f32.mxu0 0.0
        %1475 = vmatmul.mubr.f32.gmra.mxu0 %v1342
        %v1476 = vpop.f32.mrf.mxu0
        %v1477 = vadd.f32 %v1269, %v1476
        %v1478 = vpop.f32.mrf.mxu0
        %1479 = vmatprep.mubr.f32.mxu0 0.0
        %1480 = vmatmul.mubr.f32.gmra.mxu0 %v1344
        %v1481 = vpop.f32.mrf.mxu0
        %v1482 = vadd.f32 %v1269, %v1481
        %v1483 = vpop.f32.mrf.mxu0
        %1484 = vmatprep.mubr.f32.mxu0 0.0
        %1485 = vmatmul.mubr.f32.gmra.mxu0 %v1346
        %v1486 = vpop.f32.mrf.mxu0
        %v1487 = vadd.f32 %v1269, %v1486
        %v1488 = vpop.f32.mrf.mxu0
        %1489 = vmatprep.mubr.f32.mxu0 0.0
        %1490 = vmatmul.mubr.f32.gmra.mxu0 %v1348
        %v1491 = vpop.f32.mrf.mxu0
        %v1492 = vadd.f32 %v1269, %v1491
        %v1493 = vpop.f32.mrf.mxu0
        %1494 = vdwg.mxu0
        %v1495 = vadd.f32 %v1417, %v1135
        %v1496 = vadd.f32 %v1422, %v1140
        %v1497 = vadd.f32 %v1427, %v1145
        %v1498 = vadd.f32 %v1432, %v1150
        %v1499 = vadd.f32 %v1437, %v1155
        %v1500 = vadd.f32 %v1442, %v1160
        %v1501 = vadd.f32 %v1447, %v1165
        %v1502 = vadd.f32 %v1452, %v1170
        %v1503 = vadd.f32 %v1457, %v1175
        %v1504 = vadd.f32 %v1462, %v1180
        %v1505 = vadd.f32 %v1467, %v1185
        %v1506 = vadd.f32 %v1472, %v1190
        %v1507 = vadd.f32 %v1477, %v1195
        %v1508 = vadd.f32 %v1482, %v1200
        %v1509 = vadd.f32 %v1487, %v1205
        %v1510 = vadd.f32 %v1492, %v1210
        %vm1511 = vcmp.gt.f32.partialorder %v1495, 0.0
        %vm1512 = vcmp.gt.f32.partialorder %v1496, 0.0
        %vm1513 = vcmp.gt.f32.partialorder %v1497, 0.0
        %vm1514 = vcmp.gt.f32.partialorder %v1498, 0.0
        %vm1515 = vcmp.gt.f32.partialorder %v1499, 0.0
        %vm1516 = vcmp.gt.f32.partialorder %v1500, 0.0
        %vm1517 = vcmp.gt.f32.partialorder %v1501, 0.0
        %vm1518 = vcmp.gt.f32.partialorder %v1502, 0.0
        %vm1519 = vcmp.gt.f32.partialorder %v1503, 0.0
        %vm1520 = vcmp.gt.f32.partialorder %v1504, 0.0
        %vm1521 = vcmp.gt.f32.partialorder %v1505, 0.0
        %vm1522 = vcmp.gt.f32.partialorder %v1506, 0.0
        %vm1523 = vcmp.gt.f32.partialorder %v1507, 0.0
        %vm1524 = vcmp.gt.f32.partialorder %v1508, 0.0
        %vm1525 = vcmp.gt.f32.partialorder %v1509, 0.0
        %vm1526 = vcmp.gt.f32.partialorder %v1510, 0.0
        %v1527 = vmul.f32 %v1495, 0.2
        %v1528 = vmul.f32 %v1496, 0.2
        %v1529 = vmul.f32 %v1497, 0.2
        %v1530 = vmul.f32 %v1498, 0.2
        %v1531 = vmul.f32 %v1499, 0.2
        %v1532 = vmul.f32 %v1500, 0.2
        %v1533 = vmul.f32 %v1501, 0.2
        %v1534 = vmul.f32 %v1502, 0.2
        %v1535 = vmul.f32 %v1503, 0.2
        %v1536 = vmul.f32 %v1504, 0.2
        %v1537 = vmul.f32 %v1505, 0.2
        %v1538 = vmul.f32 %v1506, 0.2
        %v1539 = vmul.f32 %v1507, 0.2
        %v1540 = vmul.f32 %v1508, 0.2
        %v1541 = vmul.f32 %v1509, 0.2
        %v1542 = vmul.f32 %v1510, 0.2
        %v1543 = vsel %vm1511, %v1495, %v1527
        %v1544 = vsel %vm1512, %v1496, %v1528
        %v1545 = vsel %vm1513, %v1497, %v1529
        %v1546 = vsel %vm1514, %v1498, %v1530
        %v1547 = vsel %vm1515, %v1499, %v1531
        %v1548 = vsel %vm1516, %v1500, %v1532
        %v1549 = vsel %vm1517, %v1501, %v1533
        %v1550 = vsel %vm1518, %v1502, %v1534
        %v1551 = vsel %vm1519, %v1503, %v1535
        %v1552 = vsel %vm1520, %v1504, %v1536
        %v1553 = vsel %vm1521, %v1505, %v1537
        %v1554 = vsel %vm1522, %v1506, %v1538
        %v1555 = vsel %vm1523, %v1507, %v1539
        %v1556 = vsel %vm1524, %v1508, %v1540
        %v1557 = vsel %vm1525, %v1509, %v1541
        %v1558 = vsel %vm1526, %v1510, %v1542
        %v1559 = vld [vmem:[#allocation2 + $0xc8] sm:$0xff]
        %v1560 = vld [vmem:[#allocation2 + $0xd0] sm:$0xff]
        %v1561 = vld [vmem:[#allocation2 + $0xd8] sm:$0xff]
        %v1562 = vld [vmem:[#allocation2 + $0xe0] sm:$0xff]
        %v1563 = vld [vmem:[%s2 + $0x5] sm:$0x1]
        %v1564 = vlaneseq
        %v1565 = vshrl.u32 %v1564, 7
        %v1566 = vsub.s32 0, %v1565
        %v1567 = vrot.slane %v1563, %v1566
        %v1569 = vsel %vm462, %v1543, 0
        %v1572 = vsel %vm462, %v1544, 0
        %v1575 = vsel %vm462, %v1545, 0
        %v1578 = vsel %vm462, %v1546, 0
        %v1581 = vsel %vm462, %v1547, 0
        %v1584 = vsel %vm462, %v1548, 0
        %v1587 = vsel %vm462, %v1549, 0
        %v1590 = vsel %vm462, %v1550, 0
        %v1593 = vsel %vm462, %v1551, 0
        %v1596 = vsel %vm462, %v1552, 0
        %v1599 = vsel %vm462, %v1553, 0
        %v1602 = vsel %vm462, %v1554, 0
        %v1605 = vsel %vm462, %v1555, 0
        %v1608 = vsel %vm462, %v1556, 0
        %v1611 = vsel %vm462, %v1557, 0
        %v1614 = vsel %vm462, %v1558, 0
        %1616 = vmatprep.subr.mxu0 0.0
        %1617 = vmatpush1.msra.mxu0 0.0
        %1618 = vmatprep.subr.mxu0 0.0
        %1619 = vmatpush1.msra.mxu0 0.0
        %1620 = vmatprep.subr.mxu0 0.0
        %1621 = vmatpush1.msra.mxu0 0.0
        %1622 = vmatprep.subr.mxu0 0.0
        %1623 = vmatpush1.msra.mxu0 0.0
        %1624 = vmatprep.subr.mxu0 0.0
        %1625 = vmatpush1.msra.mxu0 0.0
        %1626 = vmatprep.subr.mxu0 0.0
        %1627 = vmatpush1.msra.mxu0 0.0
        %1628 = vmatprep.subr.mxu0 0.0
        %1629 = vmatpush1.msra.mxu0 0.0
        %1630 = vmatprep.subr.mxu0 0.0
        %1631 = vmatpush1.msra.mxu0 0.0
        %1632 = vmatprep.subr.mxu0 0.0
        %1633 = vmatpush1.msra.mxu0 0.0
        %1634 = vmatprep.subr.mxu0 0.0
        %1635 = vmatpush1.msra.mxu0 0.0
        %1636 = vmatprep.subr.mxu0 0.0
        %1637 = vmatpush1.msra.mxu0 0.0
        %1638 = vmatprep.subr.mxu0 0.0
        %1639 = vmatpush1.msra.mxu0 0.0
        %1640 = vmatprep.subr.mxu0 0.0
        %1641 = vmatpush1.msra.mxu0 %v1562
        %1642 = vmatprep.subr.mxu0 0.0
        %1643 = vmatpush1.msra.mxu0 %v1561
        %1644 = vmatprep.subr.mxu0 0.0
        %1645 = vmatpush1.msra.mxu0 %v1560
        %1646 = vmatprep.subr.mxu0 0.0
        %1647 = vmatpush1.msra.mxu0 %v1559
        %1648 = vmatprep.subr.mxu0 0.0
        %1649 = vmatpush2.msra.mxu0 0.0
        %1650 = vmatprep.subr.mxu0 0.0
        %1651 = vmatpush2.msra.mxu0 0.0
        %1652 = vmatprep.subr.mxu0 0.0
        %1653 = vmatpush2.msra.mxu0 0.0
        %1654 = vmatprep.subr.mxu0 0.0
        %1655 = vmatpush2.msra.mxu0 0.0
        %1656 = vmatprep.subr.mxu0 0.0
        %1657 = vmatpush2.msra.mxu0 0.0
        %1658 = vmatprep.subr.mxu0 0.0
        %1659 = vmatpush2.msra.mxu0 0.0
        %1660 = vmatprep.subr.mxu0 0.0
        %1661 = vmatpush2.msra.mxu0 0.0
        %1662 = vmatprep.subr.mxu0 0.0
        %1663 = vmatpush2.msra.mxu0 0.0
        %1664 = vmatprep.subr.mxu0 0.0
        %1665 = vmatpush2.msra.mxu0 0.0
        %1666 = vmatprep.subr.mxu0 0.0
        %1667 = vmatpush2.msra.mxu0 0.0
        %1668 = vmatprep.subr.mxu0 0.0
        %1669 = vmatpush2.msra.mxu0 0.0
        %1670 = vmatprep.subr.mxu0 0.0
        %1671 = vmatpush2.msra.mxu0 0.0
        %1672 = vmatprep.subr.mxu0 0.0
        %1673 = vmatpush2.msra.mxu0 0.0
        %1674 = vmatprep.subr.mxu0 0.0
        %1675 = vmatpush2.msra.mxu0 0.0
        %1676 = vmatprep.subr.mxu0 0.0
        %1677 = vmatpush2.msra.mxu0 0.0
        %1678 = vmatprep.subr.mxu0 0.0
        %1679 = vmatpush2.msra.mxu0 0.0
        %1680 = vmatprep.mubr.f32.mxu0 0.0
        %1681 = vmatmul.mubr.f32.gmra.mxu0 %v1569
        %v1682 = vpop.f32.mrf.mxu0
        %v1683 = vadd.f32 %v1567, %v1682
        %v1684 = vpop.f32.mrf.mxu0
        %1685 = vmatprep.mubr.f32.mxu0 0.0
        %1686 = vmatmul.mubr.f32.gmra.mxu0 %v1572
        %v1687 = vpop.f32.mrf.mxu0
        %v1688 = vadd.f32 %v1567, %v1687
        %v1689 = vpop.f32.mrf.mxu0
        %1690 = vmatprep.mubr.f32.mxu0 0.0
        %1691 = vmatmul.mubr.f32.gmra.mxu0 %v1575
        %v1692 = vpop.f32.mrf.mxu0
        %v1693 = vadd.f32 %v1567, %v1692
        %v1694 = vpop.f32.mrf.mxu0
        %1695 = vmatprep.mubr.f32.mxu0 0.0
        %1696 = vmatmul.mubr.f32.gmra.mxu0 %v1578
        %v1697 = vpop.f32.mrf.mxu0
        %v1698 = vadd.f32 %v1567, %v1697
        %v1699 = vpop.f32.mrf.mxu0
        %1700 = vmatprep.mubr.f32.mxu0 0.0
        %1701 = vmatmul.mubr.f32.gmra.mxu0 %v1581
        %v1702 = vpop.f32.mrf.mxu0
        %v1703 = vadd.f32 %v1567, %v1702
        %v1704 = vpop.f32.mrf.mxu0
        %1705 = vmatprep.mubr.f32.mxu0 0.0
        %1706 = vmatmul.mubr.f32.gmra.mxu0 %v1584
        %v1707 = vpop.f32.mrf.mxu0
        %v1708 = vadd.f32 %v1567, %v1707
        %v1709 = vpop.f32.mrf.mxu0
        %1710 = vmatprep.mubr.f32.mxu0 0.0
        %1711 = vmatmul.mubr.f32.gmra.mxu0 %v1587
        %v1712 = vpop.f32.mrf.mxu0
        %v1713 = vadd.f32 %v1567, %v1712
        %v1714 = vpop.f32.mrf.mxu0
        %1715 = vmatprep.mubr.f32.mxu0 0.0
        %1716 = vmatmul.mubr.f32.gmra.mxu0 %v1590
        %v1717 = vpop.f32.mrf.mxu0
        %v1718 = vadd.f32 %v1567, %v1717
        %v1719 = vpop.f32.mrf.mxu0
        %1720 = vmatprep.mubr.f32.mxu0 0.0
        %1721 = vmatmul.mubr.f32.gmra.mxu0 %v1593
        %v1722 = vpop.f32.mrf.mxu0
        %v1723 = vadd.f32 %v1567, %v1722
        %v1724 = vpop.f32.mrf.mxu0
        %1725 = vmatprep.mubr.f32.mxu0 0.0
        %1726 = vmatmul.mubr.f32.gmra.mxu0 %v1596
        %v1727 = vpop.f32.mrf.mxu0
        %v1728 = vadd.f32 %v1567, %v1727
        %v1729 = vpop.f32.mrf.mxu0
        %1730 = vmatprep.mubr.f32.mxu0 0.0
        %1731 = vmatmul.mubr.f32.gmra.mxu0 %v1599
        %v1732 = vpop.f32.mrf.mxu0
        %v1733 = vadd.f32 %v1567, %v1732
        %v1734 = vpop.f32.mrf.mxu0
        %1735 = vmatprep.mubr.f32.mxu0 0.0
        %1736 = vmatmul.mubr.f32.gmra.mxu0 %v1602
        %v1737 = vpop.f32.mrf.mxu0
        %v1738 = vadd.f32 %v1567, %v1737
        %v1739 = vpop.f32.mrf.mxu0
        %1740 = vmatprep.mubr.f32.mxu0 0.0
        %1741 = vmatmul.mubr.f32.gmra.mxu0 %v1605
        %v1742 = vpop.f32.mrf.mxu0
        %v1743 = vadd.f32 %v1567, %v1742
        %v1744 = vpop.f32.mrf.mxu0
        %1745 = vmatprep.mubr.f32.mxu0 0.0
        %1746 = vmatmul.mubr.f32.gmra.mxu0 %v1608
        %v1747 = vpop.f32.mrf.mxu0
        %v1748 = vadd.f32 %v1567, %v1747
        %v1749 = vpop.f32.mrf.mxu0
        %1750 = vmatprep.mubr.f32.mxu0 0.0
        %1751 = vmatmul.mubr.f32.gmra.mxu0 %v1611
        %v1752 = vpop.f32.mrf.mxu0
        %v1753 = vadd.f32 %v1567, %v1752
        %v1754 = vpop.f32.mrf.mxu0
        %1755 = vmatprep.mubr.f32.mxu0 0.0
        %1756 = vmatmul.mubr.f32.gmra.mxu0 %v1614
        %v1757 = vpop.f32.mrf.mxu0
        %v1758 = vadd.f32 %v1567, %v1757
        %v1759 = vpop.f32.mrf.mxu0
        %1760 = vdwg.mxu0
        %v1761 = vld [vmem:[#allocation2 + $0xe8] sm:$0xff]
        %v1762 = vld [vmem:[%s2 + $0x6] sm:$0x1]
        %v1763 = vlaneseq
        %v1764 = vshrl.u32 %v1763, 7
        %v1765 = vsub.s32 0, %v1764
        %v1766 = vrot.slane %v1762, %v1765
        %v1768 = vsel %vm211, %v1683, 0
        %v1771 = vsel %vm211, %v1688, 0
        %v1774 = vsel %vm211, %v1693, 0
        %v1777 = vsel %vm211, %v1698, 0
        %v1780 = vsel %vm211, %v1703, 0
        %v1783 = vsel %vm211, %v1708, 0
        %v1786 = vsel %vm211, %v1713, 0
        %v1789 = vsel %vm211, %v1718, 0
        %v1792 = vsel %vm211, %v1723, 0
        %v1795 = vsel %vm211, %v1728, 0
        %v1798 = vsel %vm211, %v1733, 0
        %v1801 = vsel %vm211, %v1738, 0
        %v1804 = vsel %vm211, %v1743, 0
        %v1807 = vsel %vm211, %v1748, 0
        %v1810 = vsel %vm211, %v1753, 0
        %v1813 = vsel %vm211, %v1758, 0
        %1815 = vmatprep.subr.mxu0 0.0
        %1816 = vmatpush1.msra.mxu0 0.0
        %1817 = vmatprep.subr.mxu0 0.0
        %1818 = vmatpush1.msra.mxu0 0.0
        %1819 = vmatprep.subr.mxu0 0.0
        %1820 = vmatpush1.msra.mxu0 0.0
        %1821 = vmatprep.subr.mxu0 0.0
        %1822 = vmatpush1.msra.mxu0 0.0
        %1823 = vmatprep.subr.mxu0 0.0
        %1824 = vmatpush1.msra.mxu0 0.0
        %1825 = vmatprep.subr.mxu0 0.0
        %1826 = vmatpush1.msra.mxu0 0.0
        %1827 = vmatprep.subr.mxu0 0.0
        %1828 = vmatpush1.msra.mxu0 0.0
        %1829 = vmatprep.subr.mxu0 0.0
        %1830 = vmatpush1.msra.mxu0 0.0
        %1831 = vmatprep.subr.mxu0 0.0
        %1832 = vmatpush1.msra.mxu0 0.0
        %1833 = vmatprep.subr.mxu0 0.0
        %1834 = vmatpush1.msra.mxu0 0.0
        %1835 = vmatprep.subr.mxu0 0.0
        %1836 = vmatpush1.msra.mxu0 0.0
        %1837 = vmatprep.subr.mxu0 0.0
        %1838 = vmatpush1.msra.mxu0 0.0
        %1839 = vmatprep.subr.mxu0 0.0
        %1840 = vmatpush1.msra.mxu0 0.0
        %1841 = vmatprep.subr.mxu0 0.0
        %1842 = vmatpush1.msra.mxu0 0.0
        %1843 = vmatprep.subr.mxu0 0.0
        %1844 = vmatpush1.msra.mxu0 0.0
        %1845 = vmatprep.subr.mxu0 0.0
        %1846 = vmatpush1.msra.mxu0 %v1761
        %1847 = vmatprep.subr.mxu0 0.0
        %1848 = vmatpush2.msra.mxu0 0.0
        %1849 = vmatprep.subr.mxu0 0.0
        %1850 = vmatpush2.msra.mxu0 0.0
        %1851 = vmatprep.subr.mxu0 0.0
        %1852 = vmatpush2.msra.mxu0 0.0
        %1853 = vmatprep.subr.mxu0 0.0
        %1854 = vmatpush2.msra.mxu0 0.0
        %1855 = vmatprep.subr.mxu0 0.0
        %1856 = vmatpush2.msra.mxu0 0.0
        %1857 = vmatprep.subr.mxu0 0.0
        %1858 = vmatpush2.msra.mxu0 0.0
        %1859 = vmatprep.subr.mxu0 0.0
        %1860 = vmatpush2.msra.mxu0 0.0
        %1861 = vmatprep.subr.mxu0 0.0
        %1862 = vmatpush2.msra.mxu0 0.0
        %1863 = vmatprep.subr.mxu0 0.0
        %1864 = vmatpush2.msra.mxu0 0.0
        %1865 = vmatprep.subr.mxu0 0.0
        %1866 = vmatpush2.msra.mxu0 0.0
        %1867 = vmatprep.subr.mxu0 0.0
        %1868 = vmatpush2.msra.mxu0 0.0
        %1869 = vmatprep.subr.mxu0 0.0
        %1870 = vmatpush2.msra.mxu0 0.0
        %1871 = vmatprep.subr.mxu0 0.0
        %1872 = vmatpush2.msra.mxu0 0.0
        %1873 = vmatprep.subr.mxu0 0.0
        %1874 = vmatpush2.msra.mxu0 0.0
        %1875 = vmatprep.subr.mxu0 0.0
        %1876 = vmatpush2.msra.mxu0 0.0
        %1877 = vmatprep.subr.mxu0 0.0
        %1878 = vmatpush2.msra.mxu0 0.0
        %1879 = vmatprep.mubr.f32.mxu0 0.0
        %1880 = vmatmul.mubr.f32.gmra.mxu0 %v1768
        %v1881 = vpop.f32.mrf.mxu0
        %v1882 = vadd.f32 %v1766, %v1881
        %v1883 = vpop.f32.mrf.mxu0
        %1884 = vmatprep.mubr.f32.mxu0 0.0
        %1885 = vmatmul.mubr.f32.gmra.mxu0 %v1771
        %v1886 = vpop.f32.mrf.mxu0
        %v1887 = vadd.f32 %v1766, %v1886
        %v1888 = vpop.f32.mrf.mxu0
        %1889 = vmatprep.mubr.f32.mxu0 0.0
        %1890 = vmatmul.mubr.f32.gmra.mxu0 %v1774
        %v1891 = vpop.f32.mrf.mxu0
        %v1892 = vadd.f32 %v1766, %v1891
        %v1893 = vpop.f32.mrf.mxu0
        %1894 = vmatprep.mubr.f32.mxu0 0.0
        %1895 = vmatmul.mubr.f32.gmra.mxu0 %v1777
        %v1896 = vpop.f32.mrf.mxu0
        %v1897 = vadd.f32 %v1766, %v1896
        %v1898 = vpop.f32.mrf.mxu0
        %1899 = vmatprep.mubr.f32.mxu0 0.0
        %1900 = vmatmul.mubr.f32.gmra.mxu0 %v1780
        %v1901 = vpop.f32.mrf.mxu0
        %v1902 = vadd.f32 %v1766, %v1901
        %v1903 = vpop.f32.mrf.mxu0
        %1904 = vmatprep.mubr.f32.mxu0 0.0
        %1905 = vmatmul.mubr.f32.gmra.mxu0 %v1783
        %v1906 = vpop.f32.mrf.mxu0
        %v1907 = vadd.f32 %v1766, %v1906
        %v1908 = vpop.f32.mrf.mxu0
        %1909 = vmatprep.mubr.f32.mxu0 0.0
        %1910 = vmatmul.mubr.f32.gmra.mxu0 %v1786
        %v1911 = vpop.f32.mrf.mxu0
        %v1912 = vadd.f32 %v1766, %v1911
        %v1913 = vpop.f32.mrf.mxu0
        %1914 = vmatprep.mubr.f32.mxu0 0.0
        %1915 = vmatmul.mubr.f32.gmra.mxu0 %v1789
        %v1916 = vpop.f32.mrf.mxu0
        %v1917 = vadd.f32 %v1766, %v1916
        %v1918 = vpop.f32.mrf.mxu0
        %1919 = vmatprep.mubr.f32.mxu0 0.0
        %1920 = vmatmul.mubr.f32.gmra.mxu0 %v1792
        %v1921 = vpop.f32.mrf.mxu0
        %v1922 = vadd.f32 %v1766, %v1921
        %v1923 = vpop.f32.mrf.mxu0
        %1924 = vmatprep.mubr.f32.mxu0 0.0
        %1925 = vmatmul.mubr.f32.gmra.mxu0 %v1795
        %v1926 = vpop.f32.mrf.mxu0
        %v1927 = vadd.f32 %v1766, %v1926
        %v1928 = vpop.f32.mrf.mxu0
        %1929 = vmatprep.mubr.f32.mxu0 0.0
        %1930 = vmatmul.mubr.f32.gmra.mxu0 %v1798
        %v1931 = vpop.f32.mrf.mxu0
        %v1932 = vadd.f32 %v1766, %v1931
        %v1933 = vpop.f32.mrf.mxu0
        %1934 = vmatprep.mubr.f32.mxu0 0.0
        %1935 = vmatmul.mubr.f32.gmra.mxu0 %v1801
        %v1936 = vpop.f32.mrf.mxu0
        %v1937 = vadd.f32 %v1766, %v1936
        %v1938 = vpop.f32.mrf.mxu0
        %1939 = vmatprep.mubr.f32.mxu0 0.0
        %1940 = vmatmul.mubr.f32.gmra.mxu0 %v1804
        %v1941 = vpop.f32.mrf.mxu0
        %v1942 = vadd.f32 %v1766, %v1941
        %v1943 = vpop.f32.mrf.mxu0
        %1944 = vmatprep.mubr.f32.mxu0 0.0
        %1945 = vmatmul.mubr.f32.gmra.mxu0 %v1807
        %v1946 = vpop.f32.mrf.mxu0
        %v1947 = vadd.f32 %v1766, %v1946
        %v1948 = vpop.f32.mrf.mxu0
        %1949 = vmatprep.mubr.f32.mxu0 0.0
        %1950 = vmatmul.mubr.f32.gmra.mxu0 %v1810
        %v1951 = vpop.f32.mrf.mxu0
        %v1952 = vadd.f32 %v1766, %v1951
        %v1953 = vpop.f32.mrf.mxu0
        %1954 = vmatprep.mubr.f32.mxu0 0.0
        %1955 = vmatmul.mubr.f32.gmra.mxu0 %v1813
        %v1956 = vpop.f32.mrf.mxu0
        %v1957 = vadd.f32 %v1766, %v1956
        %v1958 = vpop.f32.mrf.mxu0
        %1959 = vdwg.mxu0
        %1976 = vrot.lane.b32.xlu0 %v327, 96
        %v1977 = vpop.permute.xlu0 %1976
        %1978 = vrot.lane.b32.xlu0 %v332, 96
        %v1979 = vpop.permute.xlu0 %1978
        %1980 = vrot.lane.b32.xlu0 %v337, 96
        %v1981 = vpop.permute.xlu0 %1980
        %1982 = vrot.lane.b32.xlu0 %v342, 96
        %v1983 = vpop.permute.xlu0 %1982
        %1984 = vrot.lane.b32.xlu0 %v347, 96
        %v1985 = vpop.permute.xlu0 %1984
        %1986 = vrot.lane.b32.xlu0 %v352, 96
        %v1987 = vpop.permute.xlu0 %1986
        %1988 = vrot.lane.b32.xlu0 %v357, 96
        %v1989 = vpop.permute.xlu0 %1988
        %1990 = vrot.lane.b32.xlu0 %v362, 96
        %v1991 = vpop.permute.xlu0 %1990
        %1992 = vrot.lane.b32.xlu0 %v367, 96
        %v1993 = vpop.permute.xlu0 %1992
        %1994 = vrot.lane.b32.xlu0 %v372, 96
        %v1995 = vpop.permute.xlu0 %1994
        %1996 = vrot.lane.b32.xlu0 %v377, 96
        %v1997 = vpop.permute.xlu0 %1996
        %1998 = vrot.lane.b32.xlu0 %v382, 96
        %v1999 = vpop.permute.xlu0 %1998
        %2000 = vrot.lane.b32.xlu0 %v387, 96
        %v2001 = vpop.permute.xlu0 %2000
        %2002 = vrot.lane.b32.xlu0 %v392, 96
        %v2003 = vpop.permute.xlu0 %2002
        %2004 = vrot.lane.b32.xlu0 %v397, 96
        %v2005 = vpop.permute.xlu0 %2004
        %2006 = vrot.lane.b32.xlu0 %v402, 96
        %v2007 = vpop.permute.xlu0 %2006
        %v2024 = vadd.f32 %v1882, %v1977
        %v2025 = vadd.f32 %v1887, %v1979
        %v2026 = vadd.f32 %v1892, %v1981
        %v2027 = vadd.f32 %v1897, %v1983
        %v2028 = vadd.f32 %v1902, %v1985
        %v2029 = vadd.f32 %v1907, %v1987
        %v2030 = vadd.f32 %v1912, %v1989
        %v2031 = vadd.f32 %v1917, %v1991
        %v2032 = vadd.f32 %v1922, %v1993
        %v2033 = vadd.f32 %v1927, %v1995
        %v2034 = vadd.f32 %v1932, %v1997
        %v2035 = vadd.f32 %v1937, %v1999
        %v2036 = vadd.f32 %v1942, %v2001
        %v2037 = vadd.f32 %v1947, %v2003
        %v2038 = vadd.f32 %v1952, %v2005
        %v2039 = vadd.f32 %v1957, %v2007
        %vm2040 = vcmp.gt.f32.partialorder %v2024, 0.0
        %vm2041 = vcmp.gt.f32.partialorder %v2025, 0.0
        %vm2042 = vcmp.gt.f32.partialorder %v2026, 0.0
        %vm2043 = vcmp.gt.f32.partialorder %v2027, 0.0
        %vm2044 = vcmp.gt.f32.partialorder %v2028, 0.0
        %vm2045 = vcmp.gt.f32.partialorder %v2029, 0.0
        %vm2046 = vcmp.gt.f32.partialorder %v2030, 0.0
        %vm2047 = vcmp.gt.f32.partialorder %v2031, 0.0
        %vm2048 = vcmp.gt.f32.partialorder %v2032, 0.0
        %vm2049 = vcmp.gt.f32.partialorder %v2033, 0.0
        %vm2050 = vcmp.gt.f32.partialorder %v2034, 0.0
        %vm2051 = vcmp.gt.f32.partialorder %v2035, 0.0
        %vm2052 = vcmp.gt.f32.partialorder %v2036, 0.0
        %vm2053 = vcmp.gt.f32.partialorder %v2037, 0.0
        %vm2054 = vcmp.gt.f32.partialorder %v2038, 0.0
        %vm2055 = vcmp.gt.f32.partialorder %v2039, 0.0
        %v2056 = vmul.f32 %v2024, 0.2
        %v2057 = vmul.f32 %v2025, 0.2
        %v2058 = vmul.f32 %v2026, 0.2
        %v2059 = vmul.f32 %v2027, 0.2
        %v2060 = vmul.f32 %v2028, 0.2
        %v2061 = vmul.f32 %v2029, 0.2
        %v2062 = vmul.f32 %v2030, 0.2
        %v2063 = vmul.f32 %v2031, 0.2
        %v2064 = vmul.f32 %v2032, 0.2
        %v2065 = vmul.f32 %v2033, 0.2
        %v2066 = vmul.f32 %v2034, 0.2
        %v2067 = vmul.f32 %v2035, 0.2
        %v2068 = vmul.f32 %v2036, 0.2
        %v2069 = vmul.f32 %v2037, 0.2
        %v2070 = vmul.f32 %v2038, 0.2
        %v2071 = vmul.f32 %v2039, 0.2
        %v2072 = vsel %vm2040, %v2024, %v2056
        %v2073 = vsel %vm2041, %v2025, %v2057
        %v2074 = vsel %vm2042, %v2026, %v2058
        %v2075 = vsel %vm2043, %v2027, %v2059
        %v2076 = vsel %vm2044, %v2028, %v2060
        %v2077 = vsel %vm2045, %v2029, %v2061
        %v2078 = vsel %vm2046, %v2030, %v2062
        %v2079 = vsel %vm2047, %v2031, %v2063
        %v2080 = vsel %vm2048, %v2032, %v2064
        %v2081 = vsel %vm2049, %v2033, %v2065
        %v2082 = vsel %vm2050, %v2034, %v2066
        %v2083 = vsel %vm2051, %v2035, %v2067
        %v2084 = vsel %vm2052, %v2036, %v2068
        %v2085 = vsel %vm2053, %v2037, %v2069
        %v2086 = vsel %vm2054, %v2038, %v2070
        %v2087 = vsel %vm2055, %v2039, %v2071
        %vm2088 = vcmp.gt.f32.partialorder %v1882, 0.0
        %vm2089 = vcmp.gt.f32.partialorder %v1887, 0.0
        %vm2090 = vcmp.gt.f32.partialorder %v1892, 0.0
        %vm2091 = vcmp.gt.f32.partialorder %v1897, 0.0
        %vm2092 = vcmp.gt.f32.partialorder %v1902, 0.0
        %vm2093 = vcmp.gt.f32.partialorder %v1907, 0.0
        %vm2094 = vcmp.gt.f32.partialorder %v1912, 0.0
        %vm2095 = vcmp.gt.f32.partialorder %v1917, 0.0
        %vm2096 = vcmp.gt.f32.partialorder %v1922, 0.0
        %vm2097 = vcmp.gt.f32.partialorder %v1927, 0.0
        %vm2098 = vcmp.gt.f32.partialorder %v1932, 0.0
        %vm2099 = vcmp.gt.f32.partialorder %v1937, 0.0
        %vm2100 = vcmp.gt.f32.partialorder %v1942, 0.0
        %vm2101 = vcmp.gt.f32.partialorder %v1947, 0.0
        %vm2102 = vcmp.gt.f32.partialorder %v1952, 0.0
        %vm2103 = vcmp.gt.f32.partialorder %v1957, 0.0
        %v2104 = vmul.f32 %v1882, 0.2
        %v2105 = vmul.f32 %v1887, 0.2
        %v2106 = vmul.f32 %v1892, 0.2
        %v2107 = vmul.f32 %v1897, 0.2
        %v2108 = vmul.f32 %v1902, 0.2
        %v2109 = vmul.f32 %v1907, 0.2
        %v2110 = vmul.f32 %v1912, 0.2
        %v2111 = vmul.f32 %v1917, 0.2
        %v2112 = vmul.f32 %v1922, 0.2
        %v2113 = vmul.f32 %v1927, 0.2
        %v2114 = vmul.f32 %v1932, 0.2
        %v2115 = vmul.f32 %v1937, 0.2
        %v2116 = vmul.f32 %v1942, 0.2
        %v2117 = vmul.f32 %v1947, 0.2
        %v2118 = vmul.f32 %v1952, 0.2
        %v2119 = vmul.f32 %v1957, 0.2
        %v2120 = vsel %vm2088, %v1882, %v2104
        %v2121 = vsel %vm2089, %v1887, %v2105
        %v2122 = vsel %vm2090, %v1892, %v2106
        %v2123 = vsel %vm2091, %v1897, %v2107
        %v2124 = vsel %vm2092, %v1902, %v2108
        %v2125 = vsel %vm2093, %v1907, %v2109
        %v2126 = vsel %vm2094, %v1912, %v2110
        %v2127 = vsel %vm2095, %v1917, %v2111
        %v2128 = vsel %vm2096, %v1922, %v2112
        %v2129 = vsel %vm2097, %v1927, %v2113
        %v2130 = vsel %vm2098, %v1932, %v2114
        %v2131 = vsel %vm2099, %v1937, %v2115
        %v2132 = vsel %vm2100, %v1942, %v2116
        %v2133 = vsel %vm2101, %v1947, %v2117
        %v2134 = vsel %vm2102, %v1952, %v2118
        %v2135 = vsel %vm2103, %v1957, %v2119
        %v2136 = vsel %vm462, %v2072, %v2120
        %v2137 = vsel %vm462, %v2073, %v2121
        %v2138 = vsel %vm462, %v2074, %v2122
        %v2139 = vsel %vm462, %v2075, %v2123
        %v2140 = vsel %vm462, %v2076, %v2124
        %v2141 = vsel %vm462, %v2077, %v2125
        %v2142 = vsel %vm462, %v2078, %v2126
        %v2143 = vsel %vm462, %v2079, %v2127
        %v2144 = vsel %vm462, %v2080, %v2128
        %v2145 = vsel %vm462, %v2081, %v2129
        %v2146 = vsel %vm462, %v2082, %v2130
        %v2147 = vsel %vm462, %v2083, %v2131
        %v2148 = vsel %vm462, %v2084, %v2132
        %v2149 = vsel %vm462, %v2085, %v2133
        %v2150 = vsel %vm462, %v2086, %v2134
        %v2151 = vsel %vm462, %v2087, %v2135
        %v2152 = vld [vmem:[#allocation2 + $0xf0] sm:$0xff]
        %v2153 = vld [vmem:[#allocation2 + $0xf8] sm:$0xff]
        %v2154 = vld [vmem:[#allocation2 + $0x100] sm:$0xff]
        %v2155 = vld [vmem:[#allocation2 + $0x108] sm:$0xff]
        %v2156 = vld [vmem:[#allocation2 + $0x110] sm:$0xff]
        %v2157 = vld [vmem:[#allocation2 + $0x118] sm:$0xff]
        %v2158 = vld [vmem:[#allocation2 + $0x120] sm:$0xff]
        %v2159 = vld [vmem:[#allocation2 + $0x128] sm:$0xff]
        %v2160 = vld [vmem:[%s2 + $0x7] sm:$0x1]
        %v2161 = vlaneseq
        %v2162 = vshrl.u32 %v2161, 7
        %v2163 = vsub.s32 0, %v2162
        %v2164 = vrot.slane %v2160, %v2163
        %v2166 = vsel %vm765, %v2136, 0
        %v2169 = vsel %vm765, %v2137, 0
        %v2172 = vsel %vm765, %v2138, 0
        %v2175 = vsel %vm765, %v2139, 0
        %v2178 = vsel %vm765, %v2140, 0
        %v2181 = vsel %vm765, %v2141, 0
        %v2184 = vsel %vm765, %v2142, 0
        %v2187 = vsel %vm765, %v2143, 0
        %v2190 = vsel %vm765, %v2144, 0
        %v2193 = vsel %vm765, %v2145, 0
        %v2196 = vsel %vm765, %v2146, 0
        %v2199 = vsel %vm765, %v2147, 0
        %v2202 = vsel %vm765, %v2148, 0
        %v2205 = vsel %vm765, %v2149, 0
        %v2208 = vsel %vm765, %v2150, 0
        %v2211 = vsel %vm765, %v2151, 0
        %2213 = vmatprep.subr.mxu0 0.0
        %2214 = vmatpush1.msra.mxu0 0.0
        %2215 = vmatprep.subr.mxu0 0.0
        %2216 = vmatpush1.msra.mxu0 0.0
        %2217 = vmatprep.subr.mxu0 0.0
        %2218 = vmatpush1.msra.mxu0 0.0
        %2219 = vmatprep.subr.mxu0 0.0
        %2220 = vmatpush1.msra.mxu0 0.0
        %2221 = vmatprep.subr.mxu0 0.0
        %2222 = vmatpush1.msra.mxu0 0.0
        %2223 = vmatprep.subr.mxu0 0.0
        %2224 = vmatpush1.msra.mxu0 0.0
        %2225 = vmatprep.subr.mxu0 0.0
        %2226 = vmatpush1.msra.mxu0 0.0
        %2227 = vmatprep.subr.mxu0 0.0
        %2228 = vmatpush1.msra.mxu0 0.0
        %2229 = vmatprep.subr.mxu0 0.0
        %2230 = vmatpush1.msra.mxu0 %v2159
        %2231 = vmatprep.subr.mxu0 0.0
        %2232 = vmatpush1.msra.mxu0 %v2158
        %2233 = vmatprep.subr.mxu0 0.0
        %2234 = vmatpush1.msra.mxu0 %v2157
        %2235 = vmatprep.subr.mxu0 0.0
        %2236 = vmatpush1.msra.mxu0 %v2156
        %2237 = vmatprep.subr.mxu0 0.0
        %2238 = vmatpush1.msra.mxu0 %v2155
        %2239 = vmatprep.subr.mxu0 0.0
        %2240 = vmatpush1.msra.mxu0 %v2154
        %2241 = vmatprep.subr.mxu0 0.0
        %2242 = vmatpush1.msra.mxu0 %v2153
        %2243 = vmatprep.subr.mxu0 0.0
        %2244 = vmatpush1.msra.mxu0 %v2152
        %2245 = vmatprep.subr.mxu0 0.0
        %2246 = vmatpush2.msra.mxu0 0.0
        %2247 = vmatprep.subr.mxu0 0.0
        %2248 = vmatpush2.msra.mxu0 0.0
        %2249 = vmatprep.subr.mxu0 0.0
        %2250 = vmatpush2.msra.mxu0 0.0
        %2251 = vmatprep.subr.mxu0 0.0
        %2252 = vmatpush2.msra.mxu0 0.0
        %2253 = vmatprep.subr.mxu0 0.0
        %2254 = vmatpush2.msra.mxu0 0.0
        %2255 = vmatprep.subr.mxu0 0.0
        %2256 = vmatpush2.msra.mxu0 0.0
        %2257 = vmatprep.subr.mxu0 0.0
        %2258 = vmatpush2.msra.mxu0 0.0
        %2259 = vmatprep.subr.mxu0 0.0
        %2260 = vmatpush2.msra.mxu0 0.0
        %2261 = vmatprep.subr.mxu0 0.0
        %2262 = vmatpush2.msra.mxu0 0.0
        %2263 = vmatprep.subr.mxu0 0.0
        %2264 = vmatpush2.msra.mxu0 0.0
        %2265 = vmatprep.subr.mxu0 0.0
        %2266 = vmatpush2.msra.mxu0 0.0
        %2267 = vmatprep.subr.mxu0 0.0
        %2268 = vmatpush2.msra.mxu0 0.0
        %2269 = vmatprep.subr.mxu0 0.0
        %2270 = vmatpush2.msra.mxu0 0.0
        %2271 = vmatprep.subr.mxu0 0.0
        %2272 = vmatpush2.msra.mxu0 0.0
        %2273 = vmatprep.subr.mxu0 0.0
        %2274 = vmatpush2.msra.mxu0 0.0
        %2275 = vmatprep.subr.mxu0 0.0
        %2276 = vmatpush2.msra.mxu0 0.0
        %2277 = vmatprep.mubr.f32.mxu0 0.0
        %2278 = vmatmul.mubr.f32.gmra.mxu0 %v2166
        %v2279 = vpop.f32.mrf.mxu0
        %v2280 = vadd.f32 %v2164, %v2279
        %v2281 = vpop.f32.mrf.mxu0
        %2282 = vmatprep.mubr.f32.mxu0 0.0
        %2283 = vmatmul.mubr.f32.gmra.mxu0 %v2169
        %v2284 = vpop.f32.mrf.mxu0
        %v2285 = vadd.f32 %v2164, %v2284
        %v2286 = vpop.f32.mrf.mxu0
        %2287 = vmatprep.mubr.f32.mxu0 0.0
        %2288 = vmatmul.mubr.f32.gmra.mxu0 %v2172
        %v2289 = vpop.f32.mrf.mxu0
        %v2290 = vadd.f32 %v2164, %v2289
        %v2291 = vpop.f32.mrf.mxu0
        %2292 = vmatprep.mubr.f32.mxu0 0.0
        %2293 = vmatmul.mubr.f32.gmra.mxu0 %v2175
        %v2294 = vpop.f32.mrf.mxu0
        %v2295 = vadd.f32 %v2164, %v2294
        %v2296 = vpop.f32.mrf.mxu0
        %2297 = vmatprep.mubr.f32.mxu0 0.0
        %2298 = vmatmul.mubr.f32.gmra.mxu0 %v2178
        %v2299 = vpop.f32.mrf.mxu0
        %v2300 = vadd.f32 %v2164, %v2299
        %v2301 = vpop.f32.mrf.mxu0
        %2302 = vmatprep.mubr.f32.mxu0 0.0
        %2303 = vmatmul.mubr.f32.gmra.mxu0 %v2181
        %v2304 = vpop.f32.mrf.mxu0
        %v2305 = vadd.f32 %v2164, %v2304
        %v2306 = vpop.f32.mrf.mxu0
        %2307 = vmatprep.mubr.f32.mxu0 0.0
        %2308 = vmatmul.mubr.f32.gmra.mxu0 %v2184
        %v2309 = vpop.f32.mrf.mxu0
        %v2310 = vadd.f32 %v2164, %v2309
        %v2311 = vpop.f32.mrf.mxu0
        %2312 = vmatprep.mubr.f32.mxu0 0.0
        %2313 = vmatmul.mubr.f32.gmra.mxu0 %v2187
        %v2314 = vpop.f32.mrf.mxu0
        %v2315 = vadd.f32 %v2164, %v2314
        %v2316 = vpop.f32.mrf.mxu0
        %2317 = vmatprep.mubr.f32.mxu0 0.0
        %2318 = vmatmul.mubr.f32.gmra.mxu0 %v2190
        %v2319 = vpop.f32.mrf.mxu0
        %v2320 = vadd.f32 %v2164, %v2319
        %v2321 = vpop.f32.mrf.mxu0
        %2322 = vmatprep.mubr.f32.mxu0 0.0
        %2323 = vmatmul.mubr.f32.gmra.mxu0 %v2193
        %v2324 = vpop.f32.mrf.mxu0
        %v2325 = vadd.f32 %v2164, %v2324
        %v2326 = vpop.f32.mrf.mxu0
        %2327 = vmatprep.mubr.f32.mxu0 0.0
        %2328 = vmatmul.mubr.f32.gmra.mxu0 %v2196
        %v2329 = vpop.f32.mrf.mxu0
        %v2330 = vadd.f32 %v2164, %v2329
        %v2331 = vpop.f32.mrf.mxu0
        %2332 = vmatprep.mubr.f32.mxu0 0.0
        %2333 = vmatmul.mubr.f32.gmra.mxu0 %v2199
        %v2334 = vpop.f32.mrf.mxu0
        %v2335 = vadd.f32 %v2164, %v2334
        %v2336 = vpop.f32.mrf.mxu0
        %2337 = vmatprep.mubr.f32.mxu0 0.0
        %2338 = vmatmul.mubr.f32.gmra.mxu0 %v2202
        %v2339 = vpop.f32.mrf.mxu0
        %v2340 = vadd.f32 %v2164, %v2339
        %v2341 = vpop.f32.mrf.mxu0
        %2342 = vmatprep.mubr.f32.mxu0 0.0
        %2343 = vmatmul.mubr.f32.gmra.mxu0 %v2205
        %v2344 = vpop.f32.mrf.mxu0
        %v2345 = vadd.f32 %v2164, %v2344
        %v2346 = vpop.f32.mrf.mxu0
        %2347 = vmatprep.mubr.f32.mxu0 0.0
        %2348 = vmatmul.mubr.f32.gmra.mxu0 %v2208
        %v2349 = vpop.f32.mrf.mxu0
        %v2350 = vadd.f32 %v2164, %v2349
        %v2351 = vpop.f32.mrf.mxu0
        %2352 = vmatprep.mubr.f32.mxu0 0.0
        %2353 = vmatmul.mubr.f32.gmra.mxu0 %v2211
        %v2354 = vpop.f32.mrf.mxu0
        %v2355 = vadd.f32 %v2164, %v2354
        %v2356 = vpop.f32.mrf.mxu0
        %2357 = vdwg.mxu0
        %vm2358 = vcmp.gt.f32.partialorder %v2280, 0.0
        %vm2359 = vcmp.gt.f32.partialorder %v2285, 0.0
        %vm2360 = vcmp.gt.f32.partialorder %v2290, 0.0
        %vm2361 = vcmp.gt.f32.partialorder %v2295, 0.0
        %vm2362 = vcmp.gt.f32.partialorder %v2300, 0.0
        %vm2363 = vcmp.gt.f32.partialorder %v2305, 0.0
        %vm2364 = vcmp.gt.f32.partialorder %v2310, 0.0
        %vm2365 = vcmp.gt.f32.partialorder %v2315, 0.0
        %vm2366 = vcmp.gt.f32.partialorder %v2320, 0.0
        %vm2367 = vcmp.gt.f32.partialorder %v2325, 0.0
        %vm2368 = vcmp.gt.f32.partialorder %v2330, 0.0
        %vm2369 = vcmp.gt.f32.partialorder %v2335, 0.0
        %vm2370 = vcmp.gt.f32.partialorder %v2340, 0.0
        %vm2371 = vcmp.gt.f32.partialorder %v2345, 0.0
        %vm2372 = vcmp.gt.f32.partialorder %v2350, 0.0
        %vm2373 = vcmp.gt.f32.partialorder %v2355, 0.0
        %v2374 = vmul.f32 %v2280, 0.2
        %v2375 = vmul.f32 %v2285, 0.2
        %v2376 = vmul.f32 %v2290, 0.2
        %v2377 = vmul.f32 %v2295, 0.2
        %v2378 = vmul.f32 %v2300, 0.2
        %v2379 = vmul.f32 %v2305, 0.2
        %v2380 = vmul.f32 %v2310, 0.2
        %v2381 = vmul.f32 %v2315, 0.2
        %v2382 = vmul.f32 %v2320, 0.2
        %v2383 = vmul.f32 %v2325, 0.2
        %v2384 = vmul.f32 %v2330, 0.2
        %v2385 = vmul.f32 %v2335, 0.2
        %v2386 = vmul.f32 %v2340, 0.2
        %v2387 = vmul.f32 %v2345, 0.2
        %v2388 = vmul.f32 %v2350, 0.2
        %v2389 = vmul.f32 %v2355, 0.2
        %v2390 = vsel %vm2358, %v2280, %v2374
        %v2391 = vsel %vm2359, %v2285, %v2375
        %v2392 = vsel %vm2360, %v2290, %v2376
        %v2393 = vsel %vm2361, %v2295, %v2377
        %v2394 = vsel %vm2362, %v2300, %v2378
        %v2395 = vsel %vm2363, %v2305, %v2379
        %v2396 = vsel %vm2364, %v2310, %v2380
        %v2397 = vsel %vm2365, %v2315, %v2381
        %v2398 = vsel %vm2366, %v2320, %v2382
        %v2399 = vsel %vm2367, %v2325, %v2383
        %v2400 = vsel %vm2368, %v2330, %v2384
        %v2401 = vsel %vm2369, %v2335, %v2385
        %v2402 = vsel %vm2370, %v2340, %v2386
        %v2403 = vsel %vm2371, %v2345, %v2387
        %v2404 = vsel %vm2372, %v2350, %v2388
        %v2405 = vsel %vm2373, %v2355, %v2389
        %v2406 = vld [vmem:[#allocation2 + $0x130] sm:$0xff]
        %v2407 = vld [vmem:[#allocation2 + $0x138] sm:$0xff]
        %v2408 = vld [vmem:[#allocation2 + $0x140] sm:$0xff]
        %v2409 = vld [vmem:[#allocation2 + $0x148] sm:$0xff]
        %v2410 = vld [vmem:[#allocation2 + $0x150] sm:$0xff]
        %v2411 = vld [vmem:[#allocation2 + $0x158] sm:$0xff]
        %v2412 = vld [vmem:[#allocation2 + $0x160] sm:$0xff]
        %v2413 = vld [vmem:[#allocation2 + $0x168] sm:$0xff]
        %v2414 = vld [vmem:[%s2 + $0x8] sm:$0x1]
        %v2415 = vlaneseq
        %v2416 = vshrl.u32 %v2415, 7
        %v2417 = vsub.s32 0, %v2416
        %v2418 = vrot.slane %v2414, %v2417
        %v2420 = vsel %vm765, %v2390, 0
        %v2423 = vsel %vm765, %v2391, 0
        %v2426 = vsel %vm765, %v2392, 0
        %v2429 = vsel %vm765, %v2393, 0
        %v2432 = vsel %vm765, %v2394, 0
        %v2435 = vsel %vm765, %v2395, 0
        %v2438 = vsel %vm765, %v2396, 0
        %v2441 = vsel %vm765, %v2397, 0
        %v2444 = vsel %vm765, %v2398, 0
        %v2447 = vsel %vm765, %v2399, 0
        %v2450 = vsel %vm765, %v2400, 0
        %v2453 = vsel %vm765, %v2401, 0
        %v2456 = vsel %vm765, %v2402, 0
        %v2459 = vsel %vm765, %v2403, 0
        %v2462 = vsel %vm765, %v2404, 0
        %v2465 = vsel %vm765, %v2405, 0
        %2467 = vmatprep.subr.mxu0 0.0
        %2468 = vmatpush1.msra.mxu0 0.0
        %2469 = vmatprep.subr.mxu0 0.0
        %2470 = vmatpush1.msra.mxu0 0.0
        %2471 = vmatprep.subr.mxu0 0.0
        %2472 = vmatpush1.msra.mxu0 0.0
        %2473 = vmatprep.subr.mxu0 0.0
        %2474 = vmatpush1.msra.mxu0 0.0
        %2475 = vmatprep.subr.mxu0 0.0
        %2476 = vmatpush1.msra.mxu0 0.0
        %2477 = vmatprep.subr.mxu0 0.0
        %2478 = vmatpush1.msra.mxu0 0.0
        %2479 = vmatprep.subr.mxu0 0.0
        %2480 = vmatpush1.msra.mxu0 0.0
        %2481 = vmatprep.subr.mxu0 0.0
        %2482 = vmatpush1.msra.mxu0 0.0
        %2483 = vmatprep.subr.mxu0 0.0
        %2484 = vmatpush1.msra.mxu0 %v2413
        %2485 = vmatprep.subr.mxu0 0.0
        %2486 = vmatpush1.msra.mxu0 %v2412
        %2487 = vmatprep.subr.mxu0 0.0
        %2488 = vmatpush1.msra.mxu0 %v2411
        %2489 = vmatprep.subr.mxu0 0.0
        %2490 = vmatpush1.msra.mxu0 %v2410
        %2491 = vmatprep.subr.mxu0 0.0
        %2492 = vmatpush1.msra.mxu0 %v2409
        %2493 = vmatprep.subr.mxu0 0.0
        %2494 = vmatpush1.msra.mxu0 %v2408
        %2495 = vmatprep.subr.mxu0 0.0
        %2496 = vmatpush1.msra.mxu0 %v2407
        %2497 = vmatprep.subr.mxu0 0.0
        %2498 = vmatpush1.msra.mxu0 %v2406
        %2499 = vmatprep.subr.mxu0 0.0
        %2500 = vmatpush2.msra.mxu0 0.0
        %2501 = vmatprep.subr.mxu0 0.0
        %2502 = vmatpush2.msra.mxu0 0.0
        %2503 = vmatprep.subr.mxu0 0.0
        %2504 = vmatpush2.msra.mxu0 0.0
        %2505 = vmatprep.subr.mxu0 0.0
        %2506 = vmatpush2.msra.mxu0 0.0
        %2507 = vmatprep.subr.mxu0 0.0
        %2508 = vmatpush2.msra.mxu0 0.0
        %2509 = vmatprep.subr.mxu0 0.0
        %2510 = vmatpush2.msra.mxu0 0.0
        %2511 = vmatprep.subr.mxu0 0.0
        %2512 = vmatpush2.msra.mxu0 0.0
        %2513 = vmatprep.subr.mxu0 0.0
        %2514 = vmatpush2.msra.mxu0 0.0
        %2515 = vmatprep.subr.mxu0 0.0
        %2516 = vmatpush2.msra.mxu0 0.0
        %2517 = vmatprep.subr.mxu0 0.0
        %2518 = vmatpush2.msra.mxu0 0.0
        %2519 = vmatprep.subr.mxu0 0.0
        %2520 = vmatpush2.msra.mxu0 0.0
        %2521 = vmatprep.subr.mxu0 0.0
        %2522 = vmatpush2.msra.mxu0 0.0
        %2523 = vmatprep.subr.mxu0 0.0
        %2524 = vmatpush2.msra.mxu0 0.0
        %2525 = vmatprep.subr.mxu0 0.0
        %2526 = vmatpush2.msra.mxu0 0.0
        %2527 = vmatprep.subr.mxu0 0.0
        %2528 = vmatpush2.msra.mxu0 0.0
        %2529 = vmatprep.subr.mxu0 0.0
        %2530 = vmatpush2.msra.mxu0 0.0
        %2531 = vmatprep.mubr.f32.mxu0 0.0
        %2532 = vmatmul.mubr.f32.gmra.mxu0 %v2420
        %v2533 = vpop.f32.mrf.mxu0
        %v2534 = vadd.f32 %v2418, %v2533
        %v2535 = vpop.f32.mrf.mxu0
        %2536 = vmatprep.mubr.f32.mxu0 0.0
        %2537 = vmatmul.mubr.f32.gmra.mxu0 %v2423
        %v2538 = vpop.f32.mrf.mxu0
        %v2539 = vadd.f32 %v2418, %v2538
        %v2540 = vpop.f32.mrf.mxu0
        %2541 = vmatprep.mubr.f32.mxu0 0.0
        %2542 = vmatmul.mubr.f32.gmra.mxu0 %v2426
        %v2543 = vpop.f32.mrf.mxu0
        %v2544 = vadd.f32 %v2418, %v2543
        %v2545 = vpop.f32.mrf.mxu0
        %2546 = vmatprep.mubr.f32.mxu0 0.0
        %2547 = vmatmul.mubr.f32.gmra.mxu0 %v2429
        %v2548 = vpop.f32.mrf.mxu0
        %v2549 = vadd.f32 %v2418, %v2548
        %v2550 = vpop.f32.mrf.mxu0
        %2551 = vmatprep.mubr.f32.mxu0 0.0
        %2552 = vmatmul.mubr.f32.gmra.mxu0 %v2432
        %v2553 = vpop.f32.mrf.mxu0
        %v2554 = vadd.f32 %v2418, %v2553
        %v2555 = vpop.f32.mrf.mxu0
        %2556 = vmatprep.mubr.f32.mxu0 0.0
        %2557 = vmatmul.mubr.f32.gmra.mxu0 %v2435
        %v2558 = vpop.f32.mrf.mxu0
        %v2559 = vadd.f32 %v2418, %v2558
        %v2560 = vpop.f32.mrf.mxu0
        %2561 = vmatprep.mubr.f32.mxu0 0.0
        %2562 = vmatmul.mubr.f32.gmra.mxu0 %v2438
        %v2563 = vpop.f32.mrf.mxu0
        %v2564 = vadd.f32 %v2418, %v2563
        %v2565 = vpop.f32.mrf.mxu0
        %2566 = vmatprep.mubr.f32.mxu0 0.0
        %2567 = vmatmul.mubr.f32.gmra.mxu0 %v2441
        %v2568 = vpop.f32.mrf.mxu0
        %v2569 = vadd.f32 %v2418, %v2568
        %v2570 = vpop.f32.mrf.mxu0
        %2571 = vmatprep.mubr.f32.mxu0 0.0
        %2572 = vmatmul.mubr.f32.gmra.mxu0 %v2444
        %v2573 = vpop.f32.mrf.mxu0
        %v2574 = vadd.f32 %v2418, %v2573
        %v2575 = vpop.f32.mrf.mxu0
        %2576 = vmatprep.mubr.f32.mxu0 0.0
        %2577 = vmatmul.mubr.f32.gmra.mxu0 %v2447
        %v2578 = vpop.f32.mrf.mxu0
        %v2579 = vadd.f32 %v2418, %v2578
        %v2580 = vpop.f32.mrf.mxu0
        %2581 = vmatprep.mubr.f32.mxu0 0.0
        %2582 = vmatmul.mubr.f32.gmra.mxu0 %v2450
        %v2583 = vpop.f32.mrf.mxu0
        %v2584 = vadd.f32 %v2418, %v2583
        %v2585 = vpop.f32.mrf.mxu0
        %2586 = vmatprep.mubr.f32.mxu0 0.0
        %2587 = vmatmul.mubr.f32.gmra.mxu0 %v2453
        %v2588 = vpop.f32.mrf.mxu0
        %v2589 = vadd.f32 %v2418, %v2588
        %v2590 = vpop.f32.mrf.mxu0
        %2591 = vmatprep.mubr.f32.mxu0 0.0
        %2592 = vmatmul.mubr.f32.gmra.mxu0 %v2456
        %v2593 = vpop.f32.mrf.mxu0
        %v2594 = vadd.f32 %v2418, %v2593
        %v2595 = vpop.f32.mrf.mxu0
        %2596 = vmatprep.mubr.f32.mxu0 0.0
        %2597 = vmatmul.mubr.f32.gmra.mxu0 %v2459
        %v2598 = vpop.f32.mrf.mxu0
        %v2599 = vadd.f32 %v2418, %v2598
        %v2600 = vpop.f32.mrf.mxu0
        %2601 = vmatprep.mubr.f32.mxu0 0.0
        %2602 = vmatmul.mubr.f32.gmra.mxu0 %v2462
        %v2603 = vpop.f32.mrf.mxu0
        %v2604 = vadd.f32 %v2418, %v2603
        %v2605 = vpop.f32.mrf.mxu0
        %2606 = vmatprep.mubr.f32.mxu0 0.0
        %2607 = vmatmul.mubr.f32.gmra.mxu0 %v2465
        %v2608 = vpop.f32.mrf.mxu0
        %v2609 = vadd.f32 %v2418, %v2608
        %v2610 = vpop.f32.mrf.mxu0
        %2611 = vdwg.mxu0
        %vm2612 = vcmp.gt.f32.partialorder %v2534, 0.0
        %vm2613 = vcmp.gt.f32.partialorder %v2539, 0.0
        %vm2614 = vcmp.gt.f32.partialorder %v2544, 0.0
        %vm2615 = vcmp.gt.f32.partialorder %v2549, 0.0
        %vm2616 = vcmp.gt.f32.partialorder %v2554, 0.0
        %vm2617 = vcmp.gt.f32.partialorder %v2559, 0.0
        %vm2618 = vcmp.gt.f32.partialorder %v2564, 0.0
        %vm2619 = vcmp.gt.f32.partialorder %v2569, 0.0
        %vm2620 = vcmp.gt.f32.partialorder %v2574, 0.0
        %vm2621 = vcmp.gt.f32.partialorder %v2579, 0.0
        %vm2622 = vcmp.gt.f32.partialorder %v2584, 0.0
        %vm2623 = vcmp.gt.f32.partialorder %v2589, 0.0
        %vm2624 = vcmp.gt.f32.partialorder %v2594, 0.0
        %vm2625 = vcmp.gt.f32.partialorder %v2599, 0.0
        %vm2626 = vcmp.gt.f32.partialorder %v2604, 0.0
        %vm2627 = vcmp.gt.f32.partialorder %v2609, 0.0
        %v2628 = vmul.f32 %v2534, 0.2
        %v2629 = vmul.f32 %v2539, 0.2
        %v2630 = vmul.f32 %v2544, 0.2
        %v2631 = vmul.f32 %v2549, 0.2
        %v2632 = vmul.f32 %v2554, 0.2
        %v2633 = vmul.f32 %v2559, 0.2
        %v2634 = vmul.f32 %v2564, 0.2
        %v2635 = vmul.f32 %v2569, 0.2
        %v2636 = vmul.f32 %v2574, 0.2
        %v2637 = vmul.f32 %v2579, 0.2
        %v2638 = vmul.f32 %v2584, 0.2
        %v2639 = vmul.f32 %v2589, 0.2
        %v2640 = vmul.f32 %v2594, 0.2
        %v2641 = vmul.f32 %v2599, 0.2
        %v2642 = vmul.f32 %v2604, 0.2
        %v2643 = vmul.f32 %v2609, 0.2
        %v2644 = vsel %vm2612, %v2534, %v2628
        %v2645 = vsel %vm2613, %v2539, %v2629
        %v2646 = vsel %vm2614, %v2544, %v2630
        %v2647 = vsel %vm2615, %v2549, %v2631
        %v2648 = vsel %vm2616, %v2554, %v2632
        %v2649 = vsel %vm2617, %v2559, %v2633
        %v2650 = vsel %vm2618, %v2564, %v2634
        %v2651 = vsel %vm2619, %v2569, %v2635
        %v2652 = vsel %vm2620, %v2574, %v2636
        %v2653 = vsel %vm2621, %v2579, %v2637
        %v2654 = vsel %vm2622, %v2584, %v2638
        %v2655 = vsel %vm2623, %v2589, %v2639
        %v2656 = vsel %vm2624, %v2594, %v2640
        %v2657 = vsel %vm2625, %v2599, %v2641
        %v2658 = vsel %vm2626, %v2604, %v2642
        %v2659 = vsel %vm2627, %v2609, %v2643
        %v2660 = vld [vmem:[#allocation2 + $0x170] sm:$0xff]
        %v2661 = vld [vmem:[#allocation2 + $0x178] sm:$0xff]
        %v2662 = vld [vmem:[#allocation2 + $0x180] sm:$0xff]
        %v2663 = vld [vmem:[#allocation2 + $0x188] sm:$0xff]
        %v2664 = vld [vmem:[#allocation2 + $0x190] sm:$0xff]
        %v2665 = vld [vmem:[#allocation2 + $0x198] sm:$0xff]
        %v2666 = vld [vmem:[#allocation2 + $0x1a0] sm:$0xff]
        %v2667 = vld [vmem:[#allocation2 + $0x1a8] sm:$0xff]
        %v2668 = vld [vmem:[%s2 + $0x9] sm:$0x1]
        %v2669 = vlaneseq
        %v2670 = vshrl.u32 %v2669, 7
        %v2671 = vsub.s32 0, %v2670
        %v2672 = vrot.slane %v2668, %v2671
        %2673 = vrot.lane.b32.xlu0 %v2390, 64
        %v2674 = vpop.permute.xlu0 %2673
        %2675 = vrot.lane.b32.xlu0 %v2391, 64
        %v2676 = vpop.permute.xlu0 %2675
        %2677 = vrot.lane.b32.xlu0 %v2392, 64
        %v2678 = vpop.permute.xlu0 %2677
        %2679 = vrot.lane.b32.xlu0 %v2393, 64
        %v2680 = vpop.permute.xlu0 %2679
        %2681 = vrot.lane.b32.xlu0 %v2394, 64
        %v2682 = vpop.permute.xlu0 %2681
        %2683 = vrot.lane.b32.xlu0 %v2395, 64
        %v2684 = vpop.permute.xlu0 %2683
        %2685 = vrot.lane.b32.xlu0 %v2396, 64
        %v2686 = vpop.permute.xlu0 %2685
        %2687 = vrot.lane.b32.xlu0 %v2397, 64
        %v2688 = vpop.permute.xlu0 %2687
        %2689 = vrot.lane.b32.xlu0 %v2398, 64
        %v2690 = vpop.permute.xlu0 %2689
        %2691 = vrot.lane.b32.xlu0 %v2399, 64
        %v2692 = vpop.permute.xlu0 %2691
        %2693 = vrot.lane.b32.xlu0 %v2400, 64
        %v2694 = vpop.permute.xlu0 %2693
        %2695 = vrot.lane.b32.xlu0 %v2401, 64
        %v2696 = vpop.permute.xlu0 %2695
        %2697 = vrot.lane.b32.xlu0 %v2402, 64
        %v2698 = vpop.permute.xlu0 %2697
        %2699 = vrot.lane.b32.xlu0 %v2403, 64
        %v2700 = vpop.permute.xlu0 %2699
        %2701 = vrot.lane.b32.xlu0 %v2404, 64
        %v2702 = vpop.permute.xlu0 %2701
        %2703 = vrot.lane.b32.xlu0 %v2405, 64
        %v2704 = vpop.permute.xlu0 %2703
        %v2705 = vsel %vm765, %v2674, 0
        %v2707 = vsel %vm765, %v2676, 0
        %v2709 = vsel %vm765, %v2678, 0
        %v2711 = vsel %vm765, %v2680, 0
        %v2713 = vsel %vm765, %v2682, 0
        %v2715 = vsel %vm765, %v2684, 0
        %v2717 = vsel %vm765, %v2686, 0
        %v2719 = vsel %vm765, %v2688, 0
        %v2721 = vsel %vm765, %v2690, 0
        %v2723 = vsel %vm765, %v2692, 0
        %v2725 = vsel %vm765, %v2694, 0
        %v2727 = vsel %vm765, %v2696, 0
        %v2729 = vsel %vm765, %v2698, 0
        %v2731 = vsel %vm765, %v2700, 0
        %v2733 = vsel %vm765, %v2702, 0
        %v2735 = vsel %vm765, %v2704, 0
        %2737 = vmatprep.subr.mxu0 0.0
        %2738 = vmatpush1.msra.mxu0 0.0
        %2739 = vmatprep.subr.mxu0 0.0
        %2740 = vmatpush1.msra.mxu0 0.0
        %2741 = vmatprep.subr.mxu0 0.0
        %2742 = vmatpush1.msra.mxu0 0.0
        %2743 = vmatprep.subr.mxu0 0.0
        %2744 = vmatpush1.msra.mxu0 0.0
        %2745 = vmatprep.subr.mxu0 0.0
        %2746 = vmatpush1.msra.mxu0 0.0
        %2747 = vmatprep.subr.mxu0 0.0
        %2748 = vmatpush1.msra.mxu0 0.0
        %2749 = vmatprep.subr.mxu0 0.0
        %2750 = vmatpush1.msra.mxu0 0.0
        %2751 = vmatprep.subr.mxu0 0.0
        %2752 = vmatpush1.msra.mxu0 0.0
        %2753 = vmatprep.subr.mxu0 0.0
        %2754 = vmatpush1.msra.mxu0 %v2667
        %2755 = vmatprep.subr.mxu0 0.0
        %2756 = vmatpush1.msra.mxu0 %v2666
        %2757 = vmatprep.subr.mxu0 0.0
        %2758 = vmatpush1.msra.mxu0 %v2665
        %2759 = vmatprep.subr.mxu0 0.0
        %2760 = vmatpush1.msra.mxu0 %v2664
        %2761 = vmatprep.subr.mxu0 0.0
        %2762 = vmatpush1.msra.mxu0 %v2663
        %2763 = vmatprep.subr.mxu0 0.0
        %2764 = vmatpush1.msra.mxu0 %v2662
        %2765 = vmatprep.subr.mxu0 0.0
        %2766 = vmatpush1.msra.mxu0 %v2661
        %2767 = vmatprep.subr.mxu0 0.0
        %2768 = vmatpush1.msra.mxu0 %v2660
        %2769 = vmatprep.subr.mxu0 0.0
        %2770 = vmatpush2.msra.mxu0 0.0
        %2771 = vmatprep.subr.mxu0 0.0
        %2772 = vmatpush2.msra.mxu0 0.0
        %2773 = vmatprep.subr.mxu0 0.0
        %2774 = vmatpush2.msra.mxu0 0.0
        %2775 = vmatprep.subr.mxu0 0.0
        %2776 = vmatpush2.msra.mxu0 0.0
        %2777 = vmatprep.subr.mxu0 0.0
        %2778 = vmatpush2.msra.mxu0 0.0
        %2779 = vmatprep.subr.mxu0 0.0
        %2780 = vmatpush2.msra.mxu0 0.0
        %2781 = vmatprep.subr.mxu0 0.0
        %2782 = vmatpush2.msra.mxu0 0.0
        %2783 = vmatprep.subr.mxu0 0.0
        %2784 = vmatpush2.msra.mxu0 0.0
        %2785 = vmatprep.subr.mxu0 0.0
        %2786 = vmatpush2.msra.mxu0 0.0
        %2787 = vmatprep.subr.mxu0 0.0
        %2788 = vmatpush2.msra.mxu0 0.0
        %2789 = vmatprep.subr.mxu0 0.0
        %2790 = vmatpush2.msra.mxu0 0.0
        %2791 = vmatprep.subr.mxu0 0.0
        %2792 = vmatpush2.msra.mxu0 0.0
        %2793 = vmatprep.subr.mxu0 0.0
        %2794 = vmatpush2.msra.mxu0 0.0
        %2795 = vmatprep.subr.mxu0 0.0
        %2796 = vmatpush2.msra.mxu0 0.0
        %2797 = vmatprep.subr.mxu0 0.0
        %2798 = vmatpush2.msra.mxu0 0.0
        %2799 = vmatprep.subr.mxu0 0.0
        %2800 = vmatpush2.msra.mxu0 0.0
        %2801 = vmatprep.mubr.f32.mxu0 0.0
        %2802 = vmatmul.mubr.f32.gmra.mxu0 %v2705
        %v2803 = vpop.f32.mrf.mxu0
        %v2804 = vadd.f32 %v2672, %v2803
        %v2805 = vpop.f32.mrf.mxu0
        %2806 = vmatprep.mubr.f32.mxu0 0.0
        %2807 = vmatmul.mubr.f32.gmra.mxu0 %v2707
        %v2808 = vpop.f32.mrf.mxu0
        %v2809 = vadd.f32 %v2672, %v2808
        %v2810 = vpop.f32.mrf.mxu0
        %2811 = vmatprep.mubr.f32.mxu0 0.0
        %2812 = vmatmul.mubr.f32.gmra.mxu0 %v2709
        %v2813 = vpop.f32.mrf.mxu0
        %v2814 = vadd.f32 %v2672, %v2813
        %v2815 = vpop.f32.mrf.mxu0
        %2816 = vmatprep.mubr.f32.mxu0 0.0
        %2817 = vmatmul.mubr.f32.gmra.mxu0 %v2711
        %v2818 = vpop.f32.mrf.mxu0
        %v2819 = vadd.f32 %v2672, %v2818
        %v2820 = vpop.f32.mrf.mxu0
        %2821 = vmatprep.mubr.f32.mxu0 0.0
        %2822 = vmatmul.mubr.f32.gmra.mxu0 %v2713
        %v2823 = vpop.f32.mrf.mxu0
        %v2824 = vadd.f32 %v2672, %v2823
        %v2825 = vpop.f32.mrf.mxu0
        %2826 = vmatprep.mubr.f32.mxu0 0.0
        %2827 = vmatmul.mubr.f32.gmra.mxu0 %v2715
        %v2828 = vpop.f32.mrf.mxu0
        %v2829 = vadd.f32 %v2672, %v2828
        %v2830 = vpop.f32.mrf.mxu0
        %2831 = vmatprep.mubr.f32.mxu0 0.0
        %2832 = vmatmul.mubr.f32.gmra.mxu0 %v2717
        %v2833 = vpop.f32.mrf.mxu0
        %v2834 = vadd.f32 %v2672, %v2833
        %v2835 = vpop.f32.mrf.mxu0
        %2836 = vmatprep.mubr.f32.mxu0 0.0
        %2837 = vmatmul.mubr.f32.gmra.mxu0 %v2719
        %v2838 = vpop.f32.mrf.mxu0
        %v2839 = vadd.f32 %v2672, %v2838
        %v2840 = vpop.f32.mrf.mxu0
        %2841 = vmatprep.mubr.f32.mxu0 0.0
        %2842 = vmatmul.mubr.f32.gmra.mxu0 %v2721
        %v2843 = vpop.f32.mrf.mxu0
        %v2844 = vadd.f32 %v2672, %v2843
        %v2845 = vpop.f32.mrf.mxu0
        %2846 = vmatprep.mubr.f32.mxu0 0.0
        %2847 = vmatmul.mubr.f32.gmra.mxu0 %v2723
        %v2848 = vpop.f32.mrf.mxu0
        %v2849 = vadd.f32 %v2672, %v2848
        %v2850 = vpop.f32.mrf.mxu0
        %2851 = vmatprep.mubr.f32.mxu0 0.0
        %2852 = vmatmul.mubr.f32.gmra.mxu0 %v2725
        %v2853 = vpop.f32.mrf.mxu0
        %v2854 = vadd.f32 %v2672, %v2853
        %v2855 = vpop.f32.mrf.mxu0
        %2856 = vmatprep.mubr.f32.mxu0 0.0
        %2857 = vmatmul.mubr.f32.gmra.mxu0 %v2727
        %v2858 = vpop.f32.mrf.mxu0
        %v2859 = vadd.f32 %v2672, %v2858
        %v2860 = vpop.f32.mrf.mxu0
        %2861 = vmatprep.mubr.f32.mxu0 0.0
        %2862 = vmatmul.mubr.f32.gmra.mxu0 %v2729
        %v2863 = vpop.f32.mrf.mxu0
        %v2864 = vadd.f32 %v2672, %v2863
        %v2865 = vpop.f32.mrf.mxu0
        %2866 = vmatprep.mubr.f32.mxu0 0.0
        %2867 = vmatmul.mubr.f32.gmra.mxu0 %v2731
        %v2868 = vpop.f32.mrf.mxu0
        %v2869 = vadd.f32 %v2672, %v2868
        %v2870 = vpop.f32.mrf.mxu0
        %2871 = vmatprep.mubr.f32.mxu0 0.0
        %2872 = vmatmul.mubr.f32.gmra.mxu0 %v2733
        %v2873 = vpop.f32.mrf.mxu0
        %v2874 = vadd.f32 %v2672, %v2873
        %v2875 = vpop.f32.mrf.mxu0
        %2876 = vmatprep.mubr.f32.mxu0 0.0
        %2877 = vmatmul.mubr.f32.gmra.mxu0 %v2735
        %v2878 = vpop.f32.mrf.mxu0
        %v2879 = vadd.f32 %v2672, %v2878
        %v2880 = vpop.f32.mrf.mxu0
        %2881 = vdwg.mxu0
        %vm2882 = vcmp.gt.f32.partialorder %v2804, 0.0
        %vm2883 = vcmp.gt.f32.partialorder %v2809, 0.0
        %vm2884 = vcmp.gt.f32.partialorder %v2814, 0.0
        %vm2885 = vcmp.gt.f32.partialorder %v2819, 0.0
        %vm2886 = vcmp.gt.f32.partialorder %v2824, 0.0
        %vm2887 = vcmp.gt.f32.partialorder %v2829, 0.0
        %vm2888 = vcmp.gt.f32.partialorder %v2834, 0.0
        %vm2889 = vcmp.gt.f32.partialorder %v2839, 0.0
        %vm2890 = vcmp.gt.f32.partialorder %v2844, 0.0
        %vm2891 = vcmp.gt.f32.partialorder %v2849, 0.0
        %vm2892 = vcmp.gt.f32.partialorder %v2854, 0.0
        %vm2893 = vcmp.gt.f32.partialorder %v2859, 0.0
        %vm2894 = vcmp.gt.f32.partialorder %v2864, 0.0
        %vm2895 = vcmp.gt.f32.partialorder %v2869, 0.0
        %vm2896 = vcmp.gt.f32.partialorder %v2874, 0.0
        %vm2897 = vcmp.gt.f32.partialorder %v2879, 0.0
        %v2898 = vmul.f32 %v2804, 0.2
        %v2899 = vmul.f32 %v2809, 0.2
        %v2900 = vmul.f32 %v2814, 0.2
        %v2901 = vmul.f32 %v2819, 0.2
        %v2902 = vmul.f32 %v2824, 0.2
        %v2903 = vmul.f32 %v2829, 0.2
        %v2904 = vmul.f32 %v2834, 0.2
        %v2905 = vmul.f32 %v2839, 0.2
        %v2906 = vmul.f32 %v2844, 0.2
        %v2907 = vmul.f32 %v2849, 0.2
        %v2908 = vmul.f32 %v2854, 0.2
        %v2909 = vmul.f32 %v2859, 0.2
        %v2910 = vmul.f32 %v2864, 0.2
        %v2911 = vmul.f32 %v2869, 0.2
        %v2912 = vmul.f32 %v2874, 0.2
        %v2913 = vmul.f32 %v2879, 0.2
        %v2914 = vsel %vm2882, %v2804, %v2898
        %v2915 = vsel %vm2883, %v2809, %v2899
        %v2916 = vsel %vm2884, %v2814, %v2900
        %v2917 = vsel %vm2885, %v2819, %v2901
        %v2918 = vsel %vm2886, %v2824, %v2902
        %v2919 = vsel %vm2887, %v2829, %v2903
        %v2920 = vsel %vm2888, %v2834, %v2904
        %v2921 = vsel %vm2889, %v2839, %v2905
        %v2922 = vsel %vm2890, %v2844, %v2906
        %v2923 = vsel %vm2891, %v2849, %v2907
        %v2924 = vsel %vm2892, %v2854, %v2908
        %v2925 = vsel %vm2893, %v2859, %v2909
        %v2926 = vsel %vm2894, %v2864, %v2910
        %v2927 = vsel %vm2895, %v2869, %v2911
        %v2928 = vsel %vm2896, %v2874, %v2912
        %v2929 = vsel %vm2897, %v2879, %v2913
        %v2930 = vld [vmem:[#allocation2 + $0x1b0] sm:$0xff]
        %v2931 = vld [vmem:[#allocation2 + $0x1b8] sm:$0xff]
        %v2932 = vld [vmem:[#allocation2 + $0x1c0] sm:$0xff]
        %v2933 = vld [vmem:[#allocation2 + $0x1c8] sm:$0xff]
        %v2934 = vld [vmem:[#allocation2 + $0x1d0] sm:$0xff]
        %v2935 = vld [vmem:[#allocation2 + $0x1d8] sm:$0xff]
        %v2936 = vld [vmem:[#allocation2 + $0x1e0] sm:$0xff]
        %v2937 = vld [vmem:[#allocation2 + $0x1e8] sm:$0xff]
        %v2938 = vld [vmem:[#allocation2 + $0x1f0] sm:$0xff]
        %v2939 = vld [vmem:[#allocation2 + $0x1f8] sm:$0xff]
        %v2940 = vld [vmem:[#allocation2 + $0x200] sm:$0xff]
        %v2941 = vld [vmem:[#allocation2 + $0x208] sm:$0xff]
        %v2942 = vld [vmem:[#allocation2 + $0x210] sm:$0xff]
        %v2943 = vld [vmem:[#allocation2 + $0x218] sm:$0xff]
        %v2944 = vld [vmem:[#allocation2 + $0x220] sm:$0xff]
        %v2945 = vld [vmem:[#allocation2 + $0x228] sm:$0xff]
        %v2946 = vld [vmem:[%s2 + $0xa] sm:$0x1]
        %v2947 = vlaneseq
        %v2948 = vshrl.u32 %v2947, 7
        %v2949 = vsub.s32 0, %v2948
        %v2950 = vrot.slane %v2946, %v2949
        %2951 = vmatprep.subr.mxu0 0.0
        %2952 = vmatpush1.msra.mxu0 %v2945
        %2953 = vmatprep.subr.mxu0 0.0
        %2954 = vmatpush1.msra.mxu0 %v2944
        %2955 = vmatprep.subr.mxu0 0.0
        %2956 = vmatpush1.msra.mxu0 %v2943
        %2957 = vmatprep.subr.mxu0 0.0
        %2958 = vmatpush1.msra.mxu0 %v2942
        %2959 = vmatprep.subr.mxu0 0.0
        %2960 = vmatpush1.msra.mxu0 %v2941
        %2961 = vmatprep.subr.mxu0 0.0
        %2962 = vmatpush1.msra.mxu0 %v2940
        %2963 = vmatprep.subr.mxu0 0.0
        %2964 = vmatpush1.msra.mxu0 %v2939
        %2965 = vmatprep.subr.mxu0 0.0
        %2966 = vmatpush1.msra.mxu0 %v2938
        %2967 = vmatprep.subr.mxu0 0.0
        %2968 = vmatpush1.msra.mxu0 %v2937
        %2969 = vmatprep.subr.mxu0 0.0
        %2970 = vmatpush1.msra.mxu0 %v2936
        %2971 = vmatprep.subr.mxu0 0.0
        %2972 = vmatpush1.msra.mxu0 %v2935
        %2973 = vmatprep.subr.mxu0 0.0
        %2974 = vmatpush1.msra.mxu0 %v2934
        %2975 = vmatprep.subr.mxu0 0.0
        %2976 = vmatpush1.msra.mxu0 %v2933
        %2977 = vmatprep.subr.mxu0 0.0
        %2978 = vmatpush1.msra.mxu0 %v2932
        %2979 = vmatprep.subr.mxu0 0.0
        %2980 = vmatpush1.msra.mxu0 %v2931
        %2981 = vmatprep.subr.mxu0 0.0
        %2982 = vmatpush1.msra.mxu0 %v2930
        %2983 = vmatprep.subr.mxu0 0.0
        %2984 = vmatpush2.msra.mxu0 0.0
        %2985 = vmatprep.subr.mxu0 0.0
        %2986 = vmatpush2.msra.mxu0 0.0
        %2987 = vmatprep.subr.mxu0 0.0
        %2988 = vmatpush2.msra.mxu0 0.0
        %2989 = vmatprep.subr.mxu0 0.0
        %2990 = vmatpush2.msra.mxu0 0.0
        %2991 = vmatprep.subr.mxu0 0.0
        %2992 = vmatpush2.msra.mxu0 0.0
        %2993 = vmatprep.subr.mxu0 0.0
        %2994 = vmatpush2.msra.mxu0 0.0
        %2995 = vmatprep.subr.mxu0 0.0
        %2996 = vmatpush2.msra.mxu0 0.0
        %2997 = vmatprep.subr.mxu0 0.0
        %2998 = vmatpush2.msra.mxu0 0.0
        %2999 = vmatprep.subr.mxu0 0.0
        %3000 = vmatpush2.msra.mxu0 0.0
        %3001 = vmatprep.subr.mxu0 0.0
        %3002 = vmatpush2.msra.mxu0 0.0
        %3003 = vmatprep.subr.mxu0 0.0
        %3004 = vmatpush2.msra.mxu0 0.0
        %3005 = vmatprep.subr.mxu0 0.0
        %3006 = vmatpush2.msra.mxu0 0.0
        %3007 = vmatprep.subr.mxu0 0.0
        %3008 = vmatpush2.msra.mxu0 0.0
        %3009 = vmatprep.subr.mxu0 0.0
        %3010 = vmatpush2.msra.mxu0 0.0
        %3011 = vmatprep.subr.mxu0 0.0
        %3012 = vmatpush2.msra.mxu0 0.0
        %3013 = vmatprep.subr.mxu0 0.0
        %3014 = vmatpush2.msra.mxu0 0.0
        %3015 = vmatprep.mubr.f32.mxu0 0.0
        %3016 = vmatmul.mubr.f32.gmra.mxu0 %v2644
        %v3017 = vpop.f32.mrf.mxu0
        %v3018 = vadd.f32 %v2950, %v3017
        %v3019 = vpop.f32.mrf.mxu0
        %3020 = vmatprep.mubr.f32.mxu0 0.0
        %3021 = vmatmul.mubr.f32.gmra.mxu0 %v2645
        %v3022 = vpop.f32.mrf.mxu0
        %v3023 = vadd.f32 %v2950, %v3022
        %v3024 = vpop.f32.mrf.mxu0
        %3025 = vmatprep.mubr.f32.mxu0 0.0
        %3026 = vmatmul.mubr.f32.gmra.mxu0 %v2646
        %v3027 = vpop.f32.mrf.mxu0
        %v3028 = vadd.f32 %v2950, %v3027
        %v3029 = vpop.f32.mrf.mxu0
        %3030 = vmatprep.mubr.f32.mxu0 0.0
        %3031 = vmatmul.mubr.f32.gmra.mxu0 %v2647
        %v3032 = vpop.f32.mrf.mxu0
        %v3033 = vadd.f32 %v2950, %v3032
        %v3034 = vpop.f32.mrf.mxu0
        %3035 = vmatprep.mubr.f32.mxu0 0.0
        %3036 = vmatmul.mubr.f32.gmra.mxu0 %v2648
        %v3037 = vpop.f32.mrf.mxu0
        %v3038 = vadd.f32 %v2950, %v3037
        %v3039 = vpop.f32.mrf.mxu0
        %3040 = vmatprep.mubr.f32.mxu0 0.0
        %3041 = vmatmul.mubr.f32.gmra.mxu0 %v2649
        %v3042 = vpop.f32.mrf.mxu0
        %v3043 = vadd.f32 %v2950, %v3042
        %v3044 = vpop.f32.mrf.mxu0
        %3045 = vmatprep.mubr.f32.mxu0 0.0
        %3046 = vmatmul.mubr.f32.gmra.mxu0 %v2650
        %v3047 = vpop.f32.mrf.mxu0
        %v3048 = vadd.f32 %v2950, %v3047
        %v3049 = vpop.f32.mrf.mxu0
        %3050 = vmatprep.mubr.f32.mxu0 0.0
        %3051 = vmatmul.mubr.f32.gmra.mxu0 %v2651
        %v3052 = vpop.f32.mrf.mxu0
        %v3053 = vadd.f32 %v2950, %v3052
        %v3054 = vpop.f32.mrf.mxu0
        %3055 = vmatprep.mubr.f32.mxu0 0.0
        %3056 = vmatmul.mubr.f32.gmra.mxu0 %v2652
        %v3057 = vpop.f32.mrf.mxu0
        %v3058 = vadd.f32 %v2950, %v3057
        %v3059 = vpop.f32.mrf.mxu0
        %3060 = vmatprep.mubr.f32.mxu0 0.0
        %3061 = vmatmul.mubr.f32.gmra.mxu0 %v2653
        %v3062 = vpop.f32.mrf.mxu0
        %v3063 = vadd.f32 %v2950, %v3062
        %v3064 = vpop.f32.mrf.mxu0
        %3065 = vmatprep.mubr.f32.mxu0 0.0
        %3066 = vmatmul.mubr.f32.gmra.mxu0 %v2654
        %v3067 = vpop.f32.mrf.mxu0
        %v3068 = vadd.f32 %v2950, %v3067
        %v3069 = vpop.f32.mrf.mxu0
        %3070 = vmatprep.mubr.f32.mxu0 0.0
        %3071 = vmatmul.mubr.f32.gmra.mxu0 %v2655
        %v3072 = vpop.f32.mrf.mxu0
        %v3073 = vadd.f32 %v2950, %v3072
        %v3074 = vpop.f32.mrf.mxu0
        %3075 = vmatprep.mubr.f32.mxu0 0.0
        %3076 = vmatmul.mubr.f32.gmra.mxu0 %v2656
        %v3077 = vpop.f32.mrf.mxu0
        %v3078 = vadd.f32 %v2950, %v3077
        %v3079 = vpop.f32.mrf.mxu0
        %3080 = vmatprep.mubr.f32.mxu0 0.0
        %3081 = vmatmul.mubr.f32.gmra.mxu0 %v2657
        %v3082 = vpop.f32.mrf.mxu0
        %v3083 = vadd.f32 %v2950, %v3082
        %v3084 = vpop.f32.mrf.mxu0
        %3085 = vmatprep.mubr.f32.mxu0 0.0
        %3086 = vmatmul.mubr.f32.gmra.mxu0 %v2658
        %v3087 = vpop.f32.mrf.mxu0
        %v3088 = vadd.f32 %v2950, %v3087
        %v3089 = vpop.f32.mrf.mxu0
        %3090 = vmatprep.mubr.f32.mxu0 0.0
        %3091 = vmatmul.mubr.f32.gmra.mxu0 %v2659
        %v3092 = vpop.f32.mrf.mxu0
        %v3093 = vadd.f32 %v2950, %v3092
        %v3094 = vpop.f32.mrf.mxu0
        %3095 = vdwg.mxu0
        %vm3096 = vcmp.gt.f32.partialorder %v3018, 0.0
        %vm3097 = vcmp.gt.f32.partialorder %v3023, 0.0
        %vm3098 = vcmp.gt.f32.partialorder %v3028, 0.0
        %vm3099 = vcmp.gt.f32.partialorder %v3033, 0.0
        %vm3100 = vcmp.gt.f32.partialorder %v3038, 0.0
        %vm3101 = vcmp.gt.f32.partialorder %v3043, 0.0
        %vm3102 = vcmp.gt.f32.partialorder %v3048, 0.0
        %vm3103 = vcmp.gt.f32.partialorder %v3053, 0.0
        %vm3104 = vcmp.gt.f32.partialorder %v3058, 0.0
        %vm3105 = vcmp.gt.f32.partialorder %v3063, 0.0
        %vm3106 = vcmp.gt.f32.partialorder %v3068, 0.0
        %vm3107 = vcmp.gt.f32.partialorder %v3073, 0.0
        %vm3108 = vcmp.gt.f32.partialorder %v3078, 0.0
        %vm3109 = vcmp.gt.f32.partialorder %v3083, 0.0
        %vm3110 = vcmp.gt.f32.partialorder %v3088, 0.0
        %vm3111 = vcmp.gt.f32.partialorder %v3093, 0.0
        %v3112 = vmul.f32 %v3018, 0.2
        %v3113 = vmul.f32 %v3023, 0.2
        %v3114 = vmul.f32 %v3028, 0.2
        %v3115 = vmul.f32 %v3033, 0.2
        %v3116 = vmul.f32 %v3038, 0.2
        %v3117 = vmul.f32 %v3043, 0.2
        %v3118 = vmul.f32 %v3048, 0.2
        %v3119 = vmul.f32 %v3053, 0.2
        %v3120 = vmul.f32 %v3058, 0.2
        %v3121 = vmul.f32 %v3063, 0.2
        %v3122 = vmul.f32 %v3068, 0.2
        %v3123 = vmul.f32 %v3073, 0.2
        %v3124 = vmul.f32 %v3078, 0.2
        %v3125 = vmul.f32 %v3083, 0.2
        %v3126 = vmul.f32 %v3088, 0.2
        %v3127 = vmul.f32 %v3093, 0.2
        %v3128 = vsel %vm3096, %v3018, %v3112
        %v3129 = vsel %vm3097, %v3023, %v3113
        %v3130 = vsel %vm3098, %v3028, %v3114
        %v3131 = vsel %vm3099, %v3033, %v3115
        %v3132 = vsel %vm3100, %v3038, %v3116
        %v3133 = vsel %vm3101, %v3043, %v3117
        %v3134 = vsel %vm3102, %v3048, %v3118
        %v3135 = vsel %vm3103, %v3053, %v3119
        %v3136 = vsel %vm3104, %v3058, %v3120
        %v3137 = vsel %vm3105, %v3063, %v3121
        %v3138 = vsel %vm3106, %v3068, %v3122
        %v3139 = vsel %vm3107, %v3073, %v3123
        %v3140 = vsel %vm3108, %v3078, %v3124
        %v3141 = vsel %vm3109, %v3083, %v3125
        %v3142 = vsel %vm3110, %v3088, %v3126
        %v3143 = vsel %vm3111, %v3093, %v3127
        %v3144 = vld [vmem:[#allocation2 + $0x230] sm:$0xff]
        %v3145 = vld [vmem:[#allocation2 + $0x238] sm:$0xff]
        %v3146 = vld [vmem:[#allocation2 + $0x240] sm:$0xff]
        %v3147 = vld [vmem:[#allocation2 + $0x248] sm:$0xff]
        %v3148 = vld [vmem:[#allocation2 + $0x250] sm:$0xff]
        %v3149 = vld [vmem:[#allocation2 + $0x258] sm:$0xff]
        %v3150 = vld [vmem:[#allocation2 + $0x260] sm:$0xff]
        %v3151 = vld [vmem:[#allocation2 + $0x268] sm:$0xff]
        %v3152 = vld [vmem:[%s2 + $0xb] sm:$0x1]
        %v3153 = vlaneseq
        %v3154 = vshrl.u32 %v3153, 7
        %v3155 = vsub.s32 0, %v3154
        %v3156 = vrot.slane %v3152, %v3155
        %v3158 = vsel %vm765, %v3128, 0
        %v3161 = vsel %vm765, %v3129, 0
        %v3164 = vsel %vm765, %v3130, 0
        %v3167 = vsel %vm765, %v3131, 0
        %v3170 = vsel %vm765, %v3132, 0
        %v3173 = vsel %vm765, %v3133, 0
        %v3176 = vsel %vm765, %v3134, 0
        %v3179 = vsel %vm765, %v3135, 0
        %v3182 = vsel %vm765, %v3136, 0
        %v3185 = vsel %vm765, %v3137, 0
        %v3188 = vsel %vm765, %v3138, 0
        %v3191 = vsel %vm765, %v3139, 0
        %v3194 = vsel %vm765, %v3140, 0
        %v3197 = vsel %vm765, %v3141, 0
        %v3200 = vsel %vm765, %v3142, 0
        %v3203 = vsel %vm765, %v3143, 0
        %3205 = vmatprep.subr.mxu0 0.0
        %3206 = vmatpush1.msra.mxu0 0.0
        %3207 = vmatprep.subr.mxu0 0.0
        %3208 = vmatpush1.msra.mxu0 0.0
        %3209 = vmatprep.subr.mxu0 0.0
        %3210 = vmatpush1.msra.mxu0 0.0
        %3211 = vmatprep.subr.mxu0 0.0
        %3212 = vmatpush1.msra.mxu0 0.0
        %3213 = vmatprep.subr.mxu0 0.0
        %3214 = vmatpush1.msra.mxu0 0.0
        %3215 = vmatprep.subr.mxu0 0.0
        %3216 = vmatpush1.msra.mxu0 0.0
        %3217 = vmatprep.subr.mxu0 0.0
        %3218 = vmatpush1.msra.mxu0 0.0
        %3219 = vmatprep.subr.mxu0 0.0
        %3220 = vmatpush1.msra.mxu0 0.0
        %3221 = vmatprep.subr.mxu0 0.0
        %3222 = vmatpush1.msra.mxu0 %v3151
        %3223 = vmatprep.subr.mxu0 0.0
        %3224 = vmatpush1.msra.mxu0 %v3150
        %3225 = vmatprep.subr.mxu0 0.0
        %3226 = vmatpush1.msra.mxu0 %v3149
        %3227 = vmatprep.subr.mxu0 0.0
        %3228 = vmatpush1.msra.mxu0 %v3148
        %3229 = vmatprep.subr.mxu0 0.0
        %3230 = vmatpush1.msra.mxu0 %v3147
        %3231 = vmatprep.subr.mxu0 0.0
        %3232 = vmatpush1.msra.mxu0 %v3146
        %3233 = vmatprep.subr.mxu0 0.0
        %3234 = vmatpush1.msra.mxu0 %v3145
        %3235 = vmatprep.subr.mxu0 0.0
        %3236 = vmatpush1.msra.mxu0 %v3144
        %3237 = vmatprep.subr.mxu0 0.0
        %3238 = vmatpush2.msra.mxu0 0.0
        %3239 = vmatprep.subr.mxu0 0.0
        %3240 = vmatpush2.msra.mxu0 0.0
        %3241 = vmatprep.subr.mxu0 0.0
        %3242 = vmatpush2.msra.mxu0 0.0
        %3243 = vmatprep.subr.mxu0 0.0
        %3244 = vmatpush2.msra.mxu0 0.0
        %3245 = vmatprep.subr.mxu0 0.0
        %3246 = vmatpush2.msra.mxu0 0.0
        %3247 = vmatprep.subr.mxu0 0.0
        %3248 = vmatpush2.msra.mxu0 0.0
        %3249 = vmatprep.subr.mxu0 0.0
        %3250 = vmatpush2.msra.mxu0 0.0
        %3251 = vmatprep.subr.mxu0 0.0
        %3252 = vmatpush2.msra.mxu0 0.0
        %3253 = vmatprep.subr.mxu0 0.0
        %3254 = vmatpush2.msra.mxu0 0.0
        %3255 = vmatprep.subr.mxu0 0.0
        %3256 = vmatpush2.msra.mxu0 0.0
        %3257 = vmatprep.subr.mxu0 0.0
        %3258 = vmatpush2.msra.mxu0 0.0
        %3259 = vmatprep.subr.mxu0 0.0
        %3260 = vmatpush2.msra.mxu0 0.0
        %3261 = vmatprep.subr.mxu0 0.0
        %3262 = vmatpush2.msra.mxu0 0.0
        %3263 = vmatprep.subr.mxu0 0.0
        %3264 = vmatpush2.msra.mxu0 0.0
        %3265 = vmatprep.subr.mxu0 0.0
        %3266 = vmatpush2.msra.mxu0 0.0
        %3267 = vmatprep.subr.mxu0 0.0
        %3268 = vmatpush2.msra.mxu0 0.0
        %3269 = vmatprep.mubr.f32.mxu0 0.0
        %3270 = vmatmul.mubr.f32.gmra.mxu0 %v3158
        %v3271 = vpop.f32.mrf.mxu0
        %v3272 = vadd.f32 %v3156, %v3271
        %v3273 = vpop.f32.mrf.mxu0
        %3274 = vmatprep.mubr.f32.mxu0 0.0
        %3275 = vmatmul.mubr.f32.gmra.mxu0 %v3161
        %v3276 = vpop.f32.mrf.mxu0
        %v3277 = vadd.f32 %v3156, %v3276
        %v3278 = vpop.f32.mrf.mxu0
        %3279 = vmatprep.mubr.f32.mxu0 0.0
        %3280 = vmatmul.mubr.f32.gmra.mxu0 %v3164
        %v3281 = vpop.f32.mrf.mxu0
        %v3282 = vadd.f32 %v3156, %v3281
        %v3283 = vpop.f32.mrf.mxu0
        %3284 = vmatprep.mubr.f32.mxu0 0.0
        %3285 = vmatmul.mubr.f32.gmra.mxu0 %v3167
        %v3286 = vpop.f32.mrf.mxu0
        %v3287 = vadd.f32 %v3156, %v3286
        %v3288 = vpop.f32.mrf.mxu0
        %3289 = vmatprep.mubr.f32.mxu0 0.0
        %3290 = vmatmul.mubr.f32.gmra.mxu0 %v3170
        %v3291 = vpop.f32.mrf.mxu0
        %v3292 = vadd.f32 %v3156, %v3291
        %v3293 = vpop.f32.mrf.mxu0
        %3294 = vmatprep.mubr.f32.mxu0 0.0
        %3295 = vmatmul.mubr.f32.gmra.mxu0 %v3173
        %v3296 = vpop.f32.mrf.mxu0
        %v3297 = vadd.f32 %v3156, %v3296
        %v3298 = vpop.f32.mrf.mxu0
        %3299 = vmatprep.mubr.f32.mxu0 0.0
        %3300 = vmatmul.mubr.f32.gmra.mxu0 %v3176
        %v3301 = vpop.f32.mrf.mxu0
        %v3302 = vadd.f32 %v3156, %v3301
        %v3303 = vpop.f32.mrf.mxu0
        %3304 = vmatprep.mubr.f32.mxu0 0.0
        %3305 = vmatmul.mubr.f32.gmra.mxu0 %v3179
        %v3306 = vpop.f32.mrf.mxu0
        %v3307 = vadd.f32 %v3156, %v3306
        %v3308 = vpop.f32.mrf.mxu0
        %3309 = vmatprep.mubr.f32.mxu0 0.0
        %3310 = vmatmul.mubr.f32.gmra.mxu0 %v3182
        %v3311 = vpop.f32.mrf.mxu0
        %v3312 = vadd.f32 %v3156, %v3311
        %v3313 = vpop.f32.mrf.mxu0
        %3314 = vmatprep.mubr.f32.mxu0 0.0
        %3315 = vmatmul.mubr.f32.gmra.mxu0 %v3185
        %v3316 = vpop.f32.mrf.mxu0
        %v3317 = vadd.f32 %v3156, %v3316
        %v3318 = vpop.f32.mrf.mxu0
        %3319 = vmatprep.mubr.f32.mxu0 0.0
        %3320 = vmatmul.mubr.f32.gmra.mxu0 %v3188
        %v3321 = vpop.f32.mrf.mxu0
        %v3322 = vadd.f32 %v3156, %v3321
        %v3323 = vpop.f32.mrf.mxu0
        %3324 = vmatprep.mubr.f32.mxu0 0.0
        %3325 = vmatmul.mubr.f32.gmra.mxu0 %v3191
        %v3326 = vpop.f32.mrf.mxu0
        %v3327 = vadd.f32 %v3156, %v3326
        %v3328 = vpop.f32.mrf.mxu0
        %3329 = vmatprep.mubr.f32.mxu0 0.0
        %3330 = vmatmul.mubr.f32.gmra.mxu0 %v3194
        %v3331 = vpop.f32.mrf.mxu0
        %v3332 = vadd.f32 %v3156, %v3331
        %v3333 = vpop.f32.mrf.mxu0
        %3334 = vmatprep.mubr.f32.mxu0 0.0
        %3335 = vmatmul.mubr.f32.gmra.mxu0 %v3197
        %v3336 = vpop.f32.mrf.mxu0
        %v3337 = vadd.f32 %v3156, %v3336
        %v3338 = vpop.f32.mrf.mxu0
        %3339 = vmatprep.mubr.f32.mxu0 0.0
        %3340 = vmatmul.mubr.f32.gmra.mxu0 %v3200
        %v3341 = vpop.f32.mrf.mxu0
        %v3342 = vadd.f32 %v3156, %v3341
        %v3343 = vpop.f32.mrf.mxu0
        %3344 = vmatprep.mubr.f32.mxu0 0.0
        %3345 = vmatmul.mubr.f32.gmra.mxu0 %v3203
        %v3346 = vpop.f32.mrf.mxu0
        %v3347 = vadd.f32 %v3156, %v3346
        %v3348 = vpop.f32.mrf.mxu0
        %3349 = vdwg.mxu0
        %vm3350 = vcmp.gt.f32.partialorder %v3272, 0.0
        %vm3351 = vcmp.gt.f32.partialorder %v3277, 0.0
        %vm3352 = vcmp.gt.f32.partialorder %v3282, 0.0
        %vm3353 = vcmp.gt.f32.partialorder %v3287, 0.0
        %vm3354 = vcmp.gt.f32.partialorder %v3292, 0.0
        %vm3355 = vcmp.gt.f32.partialorder %v3297, 0.0
        %vm3356 = vcmp.gt.f32.partialorder %v3302, 0.0
        %vm3357 = vcmp.gt.f32.partialorder %v3307, 0.0
        %vm3358 = vcmp.gt.f32.partialorder %v3312, 0.0
        %vm3359 = vcmp.gt.f32.partialorder %v3317, 0.0
        %vm3360 = vcmp.gt.f32.partialorder %v3322, 0.0
        %vm3361 = vcmp.gt.f32.partialorder %v3327, 0.0
        %vm3362 = vcmp.gt.f32.partialorder %v3332, 0.0
        %vm3363 = vcmp.gt.f32.partialorder %v3337, 0.0
        %vm3364 = vcmp.gt.f32.partialorder %v3342, 0.0
        %vm3365 = vcmp.gt.f32.partialorder %v3347, 0.0
        %v3366 = vmul.f32 %v3272, 0.2
        %v3367 = vmul.f32 %v3277, 0.2
        %v3368 = vmul.f32 %v3282, 0.2
        %v3369 = vmul.f32 %v3287, 0.2
        %v3370 = vmul.f32 %v3292, 0.2
        %v3371 = vmul.f32 %v3297, 0.2
        %v3372 = vmul.f32 %v3302, 0.2
        %v3373 = vmul.f32 %v3307, 0.2
        %v3374 = vmul.f32 %v3312, 0.2
        %v3375 = vmul.f32 %v3317, 0.2
        %v3376 = vmul.f32 %v3322, 0.2
        %v3377 = vmul.f32 %v3327, 0.2
        %v3378 = vmul.f32 %v3332, 0.2
        %v3379 = vmul.f32 %v3337, 0.2
        %v3380 = vmul.f32 %v3342, 0.2
        %v3381 = vmul.f32 %v3347, 0.2
        %v3382 = vsel %vm3350, %v3272, %v3366
        %v3383 = vsel %vm3351, %v3277, %v3367
        %v3384 = vsel %vm3352, %v3282, %v3368
        %v3385 = vsel %vm3353, %v3287, %v3369
        %v3386 = vsel %vm3354, %v3292, %v3370
        %v3387 = vsel %vm3355, %v3297, %v3371
        %v3388 = vsel %vm3356, %v3302, %v3372
        %v3389 = vsel %vm3357, %v3307, %v3373
        %v3390 = vsel %vm3358, %v3312, %v3374
        %v3391 = vsel %vm3359, %v3317, %v3375
        %v3392 = vsel %vm3360, %v3322, %v3376
        %v3393 = vsel %vm3361, %v3327, %v3377
        %v3394 = vsel %vm3362, %v3332, %v3378
        %v3395 = vsel %vm3363, %v3337, %v3379
        %v3396 = vsel %vm3364, %v3342, %v3380
        %v3397 = vsel %vm3365, %v3347, %v3381
        %3414 = vrot.lane.b32.xlu0 %v2914, 32
        %v3415 = vpop.permute.xlu0 %3414
        %3416 = vrot.lane.b32.xlu0 %v2915, 32
        %v3417 = vpop.permute.xlu0 %3416
        %3418 = vrot.lane.b32.xlu0 %v2916, 32
        %v3419 = vpop.permute.xlu0 %3418
        %3420 = vrot.lane.b32.xlu0 %v2917, 32
        %v3421 = vpop.permute.xlu0 %3420
        %3422 = vrot.lane.b32.xlu0 %v2918, 32
        %v3423 = vpop.permute.xlu0 %3422
        %3424 = vrot.lane.b32.xlu0 %v2919, 32
        %v3425 = vpop.permute.xlu0 %3424
        %3426 = vrot.lane.b32.xlu0 %v2920, 32
        %v3427 = vpop.permute.xlu0 %3426
        %3428 = vrot.lane.b32.xlu0 %v2921, 32
        %v3429 = vpop.permute.xlu0 %3428
        %3430 = vrot.lane.b32.xlu0 %v2922, 32
        %v3431 = vpop.permute.xlu0 %3430
        %3432 = vrot.lane.b32.xlu0 %v2923, 32
        %v3433 = vpop.permute.xlu0 %3432
        %3434 = vrot.lane.b32.xlu0 %v2924, 32
        %v3435 = vpop.permute.xlu0 %3434
        %3436 = vrot.lane.b32.xlu0 %v2925, 32
        %v3437 = vpop.permute.xlu0 %3436
        %3438 = vrot.lane.b32.xlu0 %v2926, 32
        %v3439 = vpop.permute.xlu0 %3438
        %3440 = vrot.lane.b32.xlu0 %v2927, 32
        %v3441 = vpop.permute.xlu0 %3440
        %3442 = vrot.lane.b32.xlu0 %v2928, 32
        %v3443 = vpop.permute.xlu0 %3442
        %3444 = vrot.lane.b32.xlu0 %v2929, 32
        %v3445 = vpop.permute.xlu0 %3444
        %v3462 = vsel %vm462, %v3382, %v3415
        %v3463 = vsel %vm462, %v3383, %v3417
        %v3464 = vsel %vm462, %v3384, %v3419
        %v3465 = vsel %vm462, %v3385, %v3421
        %v3466 = vsel %vm462, %v3386, %v3423
        %v3467 = vsel %vm462, %v3387, %v3425
        %v3468 = vsel %vm462, %v3388, %v3427
        %v3469 = vsel %vm462, %v3389, %v3429
        %v3470 = vsel %vm462, %v3390, %v3431
        %v3471 = vsel %vm462, %v3391, %v3433
        %v3472 = vsel %vm462, %v3392, %v3435
        %v3473 = vsel %vm462, %v3393, %v3437
        %v3474 = vsel %vm462, %v3394, %v3439
        %v3475 = vsel %vm462, %v3395, %v3441
        %v3476 = vsel %vm462, %v3396, %v3443
        %v3477 = vsel %vm462, %v3397, %v3445
        %v3478 = vld [vmem:[#allocation2 + $0x270] sm:$0xff]
        %v3479 = vld [vmem:[#allocation2 + $0x278] sm:$0xff]
        %v3480 = vld [vmem:[#allocation2 + $0x280] sm:$0xff]
        %v3481 = vld [vmem:[#allocation2 + $0x288] sm:$0xff]
        %v3482 = vld [vmem:[#allocation2 + $0x290] sm:$0xff]
        %v3483 = vld [vmem:[#allocation2 + $0x298] sm:$0xff]
        %v3484 = vld [vmem:[#allocation2 + $0x2a0] sm:$0xff]
        %v3485 = vld [vmem:[#allocation2 + $0x2a8] sm:$0xff]
        %v3486 = vld [vmem:[%s2 + $0xc] sm:$0x1]
        %v3487 = vlaneseq
        %v3488 = vshrl.u32 %v3487, 7
        %v3489 = vsub.s32 0, %v3488
        %v3490 = vrot.slane %v3486, %v3489
        %v3492 = vsel %vm765, %v3462, 0
        %v3495 = vsel %vm765, %v3463, 0
        %v3498 = vsel %vm765, %v3464, 0
        %v3501 = vsel %vm765, %v3465, 0
        %v3504 = vsel %vm765, %v3466, 0
        %v3507 = vsel %vm765, %v3467, 0
        %v3510 = vsel %vm765, %v3468, 0
        %v3513 = vsel %vm765, %v3469, 0
        %v3516 = vsel %vm765, %v3470, 0
        %v3519 = vsel %vm765, %v3471, 0
        %v3522 = vsel %vm765, %v3472, 0
        %v3525 = vsel %vm765, %v3473, 0
        %v3528 = vsel %vm765, %v3474, 0
        %v3531 = vsel %vm765, %v3475, 0
        %v3534 = vsel %vm765, %v3476, 0
        %v3537 = vsel %vm765, %v3477, 0
        %3539 = vmatprep.subr.mxu0 0.0
        %3540 = vmatpush1.msra.mxu0 0.0
        %3541 = vmatprep.subr.mxu0 0.0
        %3542 = vmatpush1.msra.mxu0 0.0
        %3543 = vmatprep.subr.mxu0 0.0
        %3544 = vmatpush1.msra.mxu0 0.0
        %3545 = vmatprep.subr.mxu0 0.0
        %3546 = vmatpush1.msra.mxu0 0.0
        %3547 = vmatprep.subr.mxu0 0.0
        %3548 = vmatpush1.msra.mxu0 0.0
        %3549 = vmatprep.subr.mxu0 0.0
        %3550 = vmatpush1.msra.mxu0 0.0
        %3551 = vmatprep.subr.mxu0 0.0
        %3552 = vmatpush1.msra.mxu0 0.0
        %3553 = vmatprep.subr.mxu0 0.0
        %3554 = vmatpush1.msra.mxu0 0.0
        %3555 = vmatprep.subr.mxu0 0.0
        %3556 = vmatpush1.msra.mxu0 %v3485
        %3557 = vmatprep.subr.mxu0 0.0
        %3558 = vmatpush1.msra.mxu0 %v3484
        %3559 = vmatprep.subr.mxu0 0.0
        %3560 = vmatpush1.msra.mxu0 %v3483
        %3561 = vmatprep.subr.mxu0 0.0
        %3562 = vmatpush1.msra.mxu0 %v3482
        %3563 = vmatprep.subr.mxu0 0.0
        %3564 = vmatpush1.msra.mxu0 %v3481
        %3565 = vmatprep.subr.mxu0 0.0
        %3566 = vmatpush1.msra.mxu0 %v3480
        %3567 = vmatprep.subr.mxu0 0.0
        %3568 = vmatpush1.msra.mxu0 %v3479
        %3569 = vmatprep.subr.mxu0 0.0
        %3570 = vmatpush1.msra.mxu0 %v3478
        %3571 = vmatprep.subr.mxu0 0.0
        %3572 = vmatpush2.msra.mxu0 0.0
        %3573 = vmatprep.subr.mxu0 0.0
        %3574 = vmatpush2.msra.mxu0 0.0
        %3575 = vmatprep.subr.mxu0 0.0
        %3576 = vmatpush2.msra.mxu0 0.0
        %3577 = vmatprep.subr.mxu0 0.0
        %3578 = vmatpush2.msra.mxu0 0.0
        %3579 = vmatprep.subr.mxu0 0.0
        %3580 = vmatpush2.msra.mxu0 0.0
        %3581 = vmatprep.subr.mxu0 0.0
        %3582 = vmatpush2.msra.mxu0 0.0
        %3583 = vmatprep.subr.mxu0 0.0
        %3584 = vmatpush2.msra.mxu0 0.0
        %3585 = vmatprep.subr.mxu0 0.0
        %3586 = vmatpush2.msra.mxu0 0.0
        %3587 = vmatprep.subr.mxu0 0.0
        %3588 = vmatpush2.msra.mxu0 0.0
        %3589 = vmatprep.subr.mxu0 0.0
        %3590 = vmatpush2.msra.mxu0 0.0
        %3591 = vmatprep.subr.mxu0 0.0
        %3592 = vmatpush2.msra.mxu0 0.0
        %3593 = vmatprep.subr.mxu0 0.0
        %3594 = vmatpush2.msra.mxu0 0.0
        %3595 = vmatprep.subr.mxu0 0.0
        %3596 = vmatpush2.msra.mxu0 0.0
        %3597 = vmatprep.subr.mxu0 0.0
        %3598 = vmatpush2.msra.mxu0 0.0
        %3599 = vmatprep.subr.mxu0 0.0
        %3600 = vmatpush2.msra.mxu0 0.0
        %3601 = vmatprep.subr.mxu0 0.0
        %3602 = vmatpush2.msra.mxu0 0.0
        %3603 = vmatprep.mubr.f32.mxu0 0.0
        %3604 = vmatmul.mubr.f32.gmra.mxu0 %v3492
        %v3605 = vpop.f32.mrf.mxu0
        %v3606 = vadd.f32 %v3490, %v3605
        %v3607 = vpop.f32.mrf.mxu0
        %3608 = vmatprep.mubr.f32.mxu0 0.0
        %3609 = vmatmul.mubr.f32.gmra.mxu0 %v3495
        %v3610 = vpop.f32.mrf.mxu0
        %v3611 = vadd.f32 %v3490, %v3610
        %v3612 = vpop.f32.mrf.mxu0
        %3613 = vmatprep.mubr.f32.mxu0 0.0
        %3614 = vmatmul.mubr.f32.gmra.mxu0 %v3498
        %v3615 = vpop.f32.mrf.mxu0
        %v3616 = vadd.f32 %v3490, %v3615
        %v3617 = vpop.f32.mrf.mxu0
        %3618 = vmatprep.mubr.f32.mxu0 0.0
        %3619 = vmatmul.mubr.f32.gmra.mxu0 %v3501
        %v3620 = vpop.f32.mrf.mxu0
        %v3621 = vadd.f32 %v3490, %v3620
        %v3622 = vpop.f32.mrf.mxu0
        %3623 = vmatprep.mubr.f32.mxu0 0.0
        %3624 = vmatmul.mubr.f32.gmra.mxu0 %v3504
        %v3625 = vpop.f32.mrf.mxu0
        %v3626 = vadd.f32 %v3490, %v3625
        %v3627 = vpop.f32.mrf.mxu0
        %3628 = vmatprep.mubr.f32.mxu0 0.0
        %3629 = vmatmul.mubr.f32.gmra.mxu0 %v3507
        %v3630 = vpop.f32.mrf.mxu0
        %v3631 = vadd.f32 %v3490, %v3630
        %v3632 = vpop.f32.mrf.mxu0
        %3633 = vmatprep.mubr.f32.mxu0 0.0
        %3634 = vmatmul.mubr.f32.gmra.mxu0 %v3510
        %v3635 = vpop.f32.mrf.mxu0
        %v3636 = vadd.f32 %v3490, %v3635
        %v3637 = vpop.f32.mrf.mxu0
        %3638 = vmatprep.mubr.f32.mxu0 0.0
        %3639 = vmatmul.mubr.f32.gmra.mxu0 %v3513
        %v3640 = vpop.f32.mrf.mxu0
        %v3641 = vadd.f32 %v3490, %v3640
        %v3642 = vpop.f32.mrf.mxu0
        %3643 = vmatprep.mubr.f32.mxu0 0.0
        %3644 = vmatmul.mubr.f32.gmra.mxu0 %v3516
        %v3645 = vpop.f32.mrf.mxu0
        %v3646 = vadd.f32 %v3490, %v3645
        %v3647 = vpop.f32.mrf.mxu0
        %3648 = vmatprep.mubr.f32.mxu0 0.0
        %3649 = vmatmul.mubr.f32.gmra.mxu0 %v3519
        %v3650 = vpop.f32.mrf.mxu0
        %v3651 = vadd.f32 %v3490, %v3650
        %v3652 = vpop.f32.mrf.mxu0
        %3653 = vmatprep.mubr.f32.mxu0 0.0
        %3654 = vmatmul.mubr.f32.gmra.mxu0 %v3522
        %v3655 = vpop.f32.mrf.mxu0
        %v3656 = vadd.f32 %v3490, %v3655
        %v3657 = vpop.f32.mrf.mxu0
        %3658 = vmatprep.mubr.f32.mxu0 0.0
        %3659 = vmatmul.mubr.f32.gmra.mxu0 %v3525
        %v3660 = vpop.f32.mrf.mxu0
        %v3661 = vadd.f32 %v3490, %v3660
        %v3662 = vpop.f32.mrf.mxu0
        %3663 = vmatprep.mubr.f32.mxu0 0.0
        %3664 = vmatmul.mubr.f32.gmra.mxu0 %v3528
        %v3665 = vpop.f32.mrf.mxu0
        %v3666 = vadd.f32 %v3490, %v3665
        %v3667 = vpop.f32.mrf.mxu0
        %3668 = vmatprep.mubr.f32.mxu0 0.0
        %3669 = vmatmul.mubr.f32.gmra.mxu0 %v3531
        %v3670 = vpop.f32.mrf.mxu0
        %v3671 = vadd.f32 %v3490, %v3670
        %v3672 = vpop.f32.mrf.mxu0
        %3673 = vmatprep.mubr.f32.mxu0 0.0
        %3674 = vmatmul.mubr.f32.gmra.mxu0 %v3534
        %v3675 = vpop.f32.mrf.mxu0
        %v3676 = vadd.f32 %v3490, %v3675
        %v3677 = vpop.f32.mrf.mxu0
        %3678 = vmatprep.mubr.f32.mxu0 0.0
        %3679 = vmatmul.mubr.f32.gmra.mxu0 %v3537
        %v3680 = vpop.f32.mrf.mxu0
        %v3681 = vadd.f32 %v3490, %v3680
        %v3682 = vpop.f32.mrf.mxu0
        %3683 = vdwg.mxu0
        %3700 = vrot.lane.b32.xlu0 %v3606, 4
        %v3701 = vpop.permute.xlu0 %3700
        %3702 = vrot.lane.b32.xlu0 %v3611, 4
        %v3703 = vpop.permute.xlu0 %3702
        %3704 = vrot.lane.b32.xlu0 %v3616, 4
        %v3705 = vpop.permute.xlu0 %3704
        %3706 = vrot.lane.b32.xlu0 %v3621, 4
        %v3707 = vpop.permute.xlu0 %3706
        %3708 = vrot.lane.b32.xlu0 %v3626, 4
        %v3709 = vpop.permute.xlu0 %3708
        %3710 = vrot.lane.b32.xlu0 %v3631, 4
        %v3711 = vpop.permute.xlu0 %3710
        %3712 = vrot.lane.b32.xlu0 %v3636, 4
        %v3713 = vpop.permute.xlu0 %3712
        %3714 = vrot.lane.b32.xlu0 %v3641, 4
        %v3715 = vpop.permute.xlu0 %3714
        %3716 = vrot.lane.b32.xlu0 %v3646, 4
        %v3717 = vpop.permute.xlu0 %3716
        %3718 = vrot.lane.b32.xlu0 %v3651, 4
        %v3719 = vpop.permute.xlu0 %3718
        %3720 = vrot.lane.b32.xlu0 %v3656, 4
        %v3721 = vpop.permute.xlu0 %3720
        %3722 = vrot.lane.b32.xlu0 %v3661, 4
        %v3723 = vpop.permute.xlu0 %3722
        %3724 = vrot.lane.b32.xlu0 %v3666, 4
        %v3725 = vpop.permute.xlu0 %3724
        %3726 = vrot.lane.b32.xlu0 %v3671, 4
        %v3727 = vpop.permute.xlu0 %3726
        %3728 = vrot.lane.b32.xlu0 %v3676, 4
        %v3729 = vpop.permute.xlu0 %3728
        %3730 = vrot.lane.b32.xlu0 %v3681, 4
        %v3731 = vpop.permute.xlu0 %3730
        %vm3748 = vcmask 31744
        %v3749 = vsel %vm3748, %v1683, %v3701
        %v3750 = vsel %vm3748, %v1688, %v3703
        %v3751 = vsel %vm3748, %v1693, %v3705
        %v3752 = vsel %vm3748, %v1698, %v3707
        %v3753 = vsel %vm3748, %v1703, %v3709
        %v3754 = vsel %vm3748, %v1708, %v3711
        %v3755 = vsel %vm3748, %v1713, %v3713
        %v3756 = vsel %vm3748, %v1718, %v3715
        %v3757 = vsel %vm3748, %v1723, %v3717
        %v3758 = vsel %vm3748, %v1728, %v3719
        %v3759 = vsel %vm3748, %v1733, %v3721
        %v3760 = vsel %vm3748, %v1738, %v3723
        %v3761 = vsel %vm3748, %v1743, %v3725
        %v3762 = vsel %vm3748, %v1748, %v3727
        %v3763 = vsel %vm3748, %v1753, %v3729
        %v3764 = vsel %vm3748, %v1758, %v3731
        %vm3765 = vcmask 48128
        %v3766 = vsel %vm3765, %v3749, 0.0
        %v3767 = vsel %vm3765, %v3750, 0.0
        %v3768 = vsel %vm3765, %v3751, 0.0
        %v3769 = vsel %vm3765, %v3752, 0.0
        %v3770 = vsel %vm3765, %v3753, 0.0
        %v3771 = vsel %vm3765, %v3754, 0.0
        %v3772 = vsel %vm3765, %v3755, 0.0
        %v3773 = vsel %vm3765, %v3756, 0.0
        %v3774 = vsel %vm3765, %v3757, 0.0
        %v3775 = vsel %vm3765, %v3758, 0.0
        %v3776 = vsel %vm3765, %v3759, 0.0
        %v3777 = vsel %vm3765, %v3760, 0.0
        %v3778 = vsel %vm3765, %v3761, 0.0
        %v3779 = vsel %vm3765, %v3762, 0.0
        %v3780 = vsel %vm3765, %v3763, 0.0
        %v3781 = vsel %vm3765, %v3764, 0.0
        %3782 = vst.msk [vmem:[%s187] sm:$0xff] %vm211, %v3766
        %3783 = vst.msk [vmem:[%s187 + $0x8] sm:$0xff] %vm211, %v3767
        %3784 = vst.msk [vmem:[%s187 + $0x10] sm:$0xff] %vm211, %v3768
        %3785 = vst.msk [vmem:[%s187 + $0x18] sm:$0xff] %vm211, %v3769
        %3786 = vst.msk [vmem:[%s187 + $0x20] sm:$0xff] %vm211, %v3770
        %3787 = vst.msk [vmem:[%s187 + $0x28] sm:$0xff] %vm211, %v3771
        %3788 = vst.msk [vmem:[%s187 + $0x30] sm:$0xff] %vm211, %v3772
        %3789 = vst.msk [vmem:[%s187 + $0x38] sm:$0xff] %vm211, %v3773
        %3790 = vst.msk [vmem:[%s187 + $0x40] sm:$0xff] %vm211, %v3774
        %3791 = vst.msk [vmem:[%s187 + $0x48] sm:$0xff] %vm211, %v3775
        %3792 = vst.msk [vmem:[%s187 + $0x50] sm:$0xff] %vm211, %v3776
        %3793 = vst.msk [vmem:[%s187 + $0x58] sm:$0xff] %vm211, %v3777
        %3794 = vst.msk [vmem:[%s187 + $0x60] sm:$0xff] %vm211, %v3778
        %3795 = vst.msk [vmem:[%s187 + $0x68] sm:$0xff] %vm211, %v3779
        %3796 = vst.msk [vmem:[%s187 + $0x70] sm:$0xff] %vm211, %v3780
        %3797 = vst.msk [vmem:[%s187 + $0x78] sm:$0xff] %vm211, %v3781
        %s3798 = smul.u32 16, %s15
        %p3799 = scmp.lt.s32.totalorder %s3798, 31
        %s3800 = scalar_select %p3799, %s3798, 31
        %s3801 = smul.addr %s3800, 8
        %s3802 = scalar_lea.vmem %s3, %s3801
        // Predicated region
        $region37: #{tpu_custom_call.1} parent=31 // pred_check
          %p3803 = pneg %p101
        $region38: #{tpu_custom_call.1} parent=31 // pred_check_branch
          %3805 = sbr.rel (%p3803) target = $region40
        $region39: #{tpu_custom_call.1} parent=31 // pred_region
          %s3806 = smul.u32 16, %s15
        $region40: #{tpu_custom_call.1} parent=31 // pred_fallthru
          _
      $region32: #{tpu_custom_call.1} parent=5 // pred_fallthru
        _
      %p3807 = scmp.le.s32.totalorder 2, %s10
      // Predicated region
      $region41: #{tpu_custom_call.1} parent=5 // pred_check
        %p3808 = pneg %p3807
      $region42: #{tpu_custom_call.1} parent=5 // pred_check_branch
        %3810 = sbr.rel (%p3808) target = $region44
      $region43: #{tpu_custom_call.1} parent=5 // pred_region
        %s3811 = ssub.s32 %s10, 2
        // Predicated region
        $region45: #{tpu_custom_call.1} parent=43 // pred_check
          %p3812 = pneg %p107
        $region46: #{tpu_custom_call.1} parent=43 // pred_check_branch
          %3814 = sbr.rel (%p3812) target = $region48
        $region47: #{tpu_custom_call.1} parent=43 // pred_region
          %s3815 = smul.u32 16, %s16
          %p3816 = scmp.lt.s32.totalorder %s3815, 31
          %s3817 = scalar_select %p3816, %s3815, 31
          %s3818 = smul.addr %s3817, 8
          %s3819 = scalar_lea.vmem %s3, %s3818
        $region48: #{tpu_custom_call.1} parent=43 // pred_fallthru
          _
      $region44: #{tpu_custom_call.1} parent=5 // pred_fallthru
        _
    $region6: #{tpu_custom_call.1} parent=1 // loop_footer
      %s14 = sadd.s32 1, %s10
    $region7: #{tpu_custom_call.1} parent=1 // loop_footer_branch
      %9 = sbr.rel target = $region3
    $region8: #{tpu_custom_call.1} parent=1 // loop_exit
      _
    %3820 = vsyncpa [#allocation3], 1
    %s3821 = scalar_lea.sflag [#allocation3], 1
    %3822 = vsyncpa %s3821, 1

</llo_original>
